<compile_context>
chip_gen: v7x
topology: tpu7x:2x2x1
jax: 0.10.0
libtpu: 0.0.40
codegen_flags: <defaults>
</compile_context>

<pallas_src>
import functools

import jax
import jax.numpy as jnp
from jax.experimental import pallas as pl
from jax.experimental.pallas import tpu as pltpu


def _round_up(x, m):
    return (x + m - 1) // m * m


def _pick_tile(total, cap, granularity, prefer_blocks):
    """Largest divisor of `total` that is <= cap and a multiple of `granularity`,
    preferring one that yields >= prefer_blocks grid blocks (v7x: both TensorCores busy).
    Falls back to `total` (a full-dim block is always legal)."""
    best = None
    t = (min(cap, total) // granularity) * granularity
    while t >= granularity:
        if total % t == 0:
            if best is None:
                best = t
            if total // t >= prefer_blocks:
                return t
        t -= granularity
    return best if best is not None else total


# ---------------------------------------------------------------------------
# Pallas kernels
# ---------------------------------------------------------------------------
def _mm_bias_kernel(a_ref, w_ref, b_ref, o_ref, *, relu):
    """o = (relu?)(a @ w + b); bias broadcasts via its block shape ((1,N) or (M,1))."""
    out = jnp.dot(a_ref[...], w_ref[...],
                  preferred_element_type=jnp.float32) + b_ref[...]
    if relu:
        out = jnp.maximum(out, 0.0)
    o_ref[...] = out.astype(o_ref.dtype)


def conv1_rows_matmul(patches, w_mat, bias, *, out_dtype, tm_cap=2048):
    """relu(patches @ w_mat + bias); patches:(M,K) bf16, w_mat:(K,64) bf16, bias:(1,64) f32.

    1-D grid over M (parallel).  K (=Cin*9) and N (=64) live in single full-dim blocks,
    so nothing activation-sized is padded or sliced in XLA."""
    M, K = patches.shape
    _, N = w_mat.shape
    Mp = _round_up(M, 8)
    if Mp != M:                              # rare (only when B*Ho*Wo isn't a multiple of 8)
        patches = jnp.pad(patches, ((0, Mp - M), (0, 0)))
    tm = _pick_tile(Mp, tm_cap, 8, prefer_blocks=2)
    out = pl.pallas_call(
        functools.partial(_mm_bias_kernel, relu=True),
        out_shape=jax.ShapeDtypeStruct((Mp, N), out_dtype),
        grid_spec=pltpu.PrefetchScalarGridSpec(
            num_scalar_prefetch=0,
            grid=(Mp // tm,),
            in_specs=[
                pl.BlockSpec((tm, K), lambda i: (i, 0)),
                pl.BlockSpec((K, N), lambda i: (0, 0)),
                pl.BlockSpec((1, N), lambda i: (0, 0)),
            ],
            out_specs=pl.BlockSpec((tm, N), lambda i: (i, 0)),
        ),
        compiler_params=pltpu.CompilerParams(dimension_semantics=("parallel",)),
    )(patches, w_mat, bias)
    return out[:M] if Mp != M else out


def conv2_cols_matmul(w_mat_t, patches_t, bias_col, *, tn_cap=2048):
    """(Cp, Ntot) f32 = w_mat_t(Cp,K) @ patches_t(K,Ntot) + bias_col(Cp,1)   (no relu).

    Transposed conv: tiny Cout sits on the sublane axis, the big B*H*W axis is lane-dense
    and is the 1-D parallel grid (splits across v7x's TensorCores)."""
    Cp, K = w_mat_t.shape
    K2, Ntot = patches_t.shape
    assert K == K2
    tn = _pick_tile(Ntot, tn_cap, 128, prefer_blocks=2)
    return pl.pallas_call(
        functools.partial(_mm_bias_kernel, relu=False),
        out_shape=jax.ShapeDtypeStruct((Cp, Ntot), jnp.float32),
        grid_spec=pltpu.PrefetchScalarGridSpec(
            num_scalar_prefetch=0,
            grid=(Ntot // tn,),
            in_specs=[
                pl.BlockSpec((Cp, K), lambda j: (0, 0)),
                pl.BlockSpec((K, tn), lambda j: (0, j)),
                pl.BlockSpec((Cp, 1), lambda j: (0, 0)),
            ],
            out_specs=pl.BlockSpec((Cp, tn), lambda j: (0, j)),
        ),
        compiler_params=pltpu.CompilerParams(dimension_semantics=("parallel",)),
    )(w_mat_t, patches_t, bias_col)


def _fc1_kernel(x_ref, w_ref, b_ref, g_ref, be_ref, o_ref, acc_ref, *, eps):
    """Linear(down_dim, 32) -> BatchNorm1d(32, eps) -> ReLU, K-reduction grid."""
    @pl.when(pl.program_id(0) == 0)
    def _():
        acc_ref[...] = jnp.zeros_like(acc_ref)

    acc_ref[...] += jnp.dot(x_ref[...], w_ref[...],
                            preferred_element_type=jnp.float32)

    @pl.when(pl.program_id(0) == pl.num_programs(0) - 1)
    def _():
        h = acc_ref[...] + b_ref[...]
        mu = jnp.mean(h, axis=0, keepdims=True)
        var = jnp.mean(jnp.square(h - mu), axis=0, keepdims=True)   # biased (training) var
        h = (h - mu) * jax.lax.rsqrt(var + eps) * g_ref[...] + be_ref[...]
        o_ref[...] = jnp.maximum(h, 0.0).astype(o_ref.dtype)


def fc1_bn_relu(x, w, b, g, be, *, eps, tk_cap=16384):
    """x:(B,D) bf16, w:(D,32) bf16 -> (B,32) bf16.  Streams w over a K grid; the whole
    weight never has to be VMEM-resident (v7x 64 MiB safe for any img_size)."""
    B, D = x.shape
    _, F = w.shape
    if D % 128:                               # rare (odd down_size); contraction zero-pad is exact
        Dp = _round_up(D, 128)
        x = jnp.pad(x, ((0, 0), (0, Dp - D)))
        w = jnp.pad(w, ((0, Dp - D), (0, 0)))
        D = Dp
    tk = _pick_tile(D, tk_cap, 128, prefer_blocks=1)   # reduction axis: fewest steps
    return pl.pallas_call(
        functools.partial(_fc1_kernel, eps=eps),
        out_shape=jax.ShapeDtypeStruct((B, F), jnp.bfloat16),
        grid_spec=pltpu.PrefetchScalarGridSpec(
            num_scalar_prefetch=0,
            grid=(D // tk,),
            in_specs=[
                pl.BlockSpec((B, tk), lambda k: (0, k)),
                pl.BlockSpec((tk, F), lambda k: (k, 0)),
                pl.BlockSpec((1, F), lambda k: (0, 0)),
                pl.BlockSpec((1, F), lambda k: (0, 0)),
                pl.BlockSpec((1, F), lambda k: (0, 0)),
            ],
            out_specs=pl.BlockSpec((B, F), lambda k: (0, 0)),
            scratch_shapes=[pltpu.VMEM((B, F), jnp.float32)],
        ),
        compiler_params=pltpu.CompilerParams(dimension_semantics=("arbitrary",)),
    )(x, w, b, g, be)


def _fc2_kernel(h_ref, w_ref, b_ref, g_ref, be_ref, o_ref, *, eps):
    """Linear(32, down_dim) -> BatchNorm1d(down_dim, eps) -> ReLU, one N tile per step.
    BN stats are per-feature over the (full, untiled) batch axis, so N tiling is exact."""
    y = jnp.dot(h_ref[...], w_ref[...],
                preferred_element_type=jnp.float32) + b_ref[...]
    mu = jnp.mean(y, axis=0, keepdims=True)
    var = jnp.mean(jnp.square(y - mu), axis=0, keepdims=True)       # biased (training) var
    y = (y - mu) * jax.lax.rsqrt(var + eps) * g_ref[...] + be_ref[...]
    o_ref[...] = jnp.maximum(y, 0.0).astype(o_ref.dtype)


def fc2_bn_relu(h, w, b, g, be, *, eps, tn_cap=16384):
    """h:(B,32) bf16, w:(32,D) bf16 -> (B,D) bf16.  Streams w over a parallel N grid."""
    # TODO(synk): optional int8 fc weights with an f32 dequant scale in the epilogue for
    # v5e/v6e, where this block is pure weight-bandwidth (v7x MXU has no int path).
    B, F = h.shape
    _, D = w.shape
    D0 = D
    if D % 128:                               # rare (odd down_size)
        Dp = _round_up(D, 128)
        pad = Dp - D
        w = jnp.pad(w, ((0, 0), (0, pad)))
        b = jnp.pad(b, ((0, 0), (0, pad)))
        g = jnp.pad(g, ((0, 0), (0, pad)))
        be = jnp.pad(be, ((0, 0), (0, pad)))
        D = Dp
    tn = _pick_tile(D, tn_cap, 128, prefer_blocks=2)
    out = pl.pallas_call(
        functools.partial(_fc2_kernel, eps=eps),
        out_shape=jax.ShapeDtypeStruct((B, D), jnp.bfloat16),
        grid_spec=pltpu.PrefetchScalarGridSpec(
            num_scalar_prefetch=0,
            grid=(D // tn,),
            in_specs=[
                pl.BlockSpec((B, F), lambda j: (0, 0)),
                pl.BlockSpec((F, tn), lambda j: (0, j)),
                pl.BlockSpec((1, tn), lambda j: (0, j)),
                pl.BlockSpec((1, tn), lambda j: (0, j)),
                pl.BlockSpec((1, tn), lambda j: (0, j)),
            ],
            out_specs=pl.BlockSpec((B, tn), lambda j: (0, j)),
        ),
        compiler_params=pltpu.CompilerParams(dimension_semantics=("parallel",)),
    )(h, w, b, g, be)
    return out[:, :D0] if D != D0 else out


# ---------------------------------------------------------------------------
# Plain-JAX glue (layout plumbing only)
# ---------------------------------------------------------------------------
# TODO(synk): restructure both convs as a tap-grid (9-step 'arbitrary' axis reading shifted
# feature-map windows) to eliminate the materialized im2col/upsample patch tensors entirely.
def im2col_nhwc(x, k, stride, pad):
    """x: (B, H, W, C) -> patches (B*Ho*Wo, k*k*C), feature order (kh, kw, C).  Keeps x.dtype."""
    B, H, W, C = x.shape
    Ho = (H + 2 * pad - k) // stride + 1
    Wo = (W + 2 * pad - k) // stride + 1
    xp = jnp.pad(x, ((0, 0), (pad, pad), (pad, pad), (0, 0)))
    taps = []
    for ki in range(k):
        for kj in range(k):
            taps.append(xp[:, ki:ki + stride * Ho:stride, kj:kj + stride * Wo:stride, :])
    p = jnp.stack(taps, axis=3)                              # (B, Ho, Wo, k*k, C)
    return p.reshape(B * Ho * Wo, k * k * C), Ho, Wo


def upsample2x_im2col_t_nchw(feat, k=3):
    """Nearest x2 upsample fused into 3x3/stride1/pad1 patch extraction, TRANSPOSED.

    feat (B, C, H, W) -> patches_T (C*k*k, B*2H*2W); row order (cin, ki, kj) matches
    conv_w.reshape(Cout, Cin*k*k); column order is (b, y, x).  No 4x upsampled intermediate
    is materialized and patches stay in feat.dtype (bf16)."""
    B, C, H, W = feat.shape
    Ho, Wo = 2 * H, 2 * W
    fp = jnp.pad(feat, ((0, 0), (0, 0), (1, 1), (1, 1)))     # low-res, +1 zero halo
    ys = jnp.arange(Ho)
    xs = jnp.arange(Wo)
    taps = []
    for ki in range(k):
        # Upsampled row y maps to padded low-res row floor((y+ki-1)/2)+1.  JAX floor-divides
        # -1//2 -> -1, so (y=0, ki=0) lands on padded row 0 (the zero halo): this is
        # load-bearing for Conv2d's zero-padding semantics — do not "simplify" the formula.
        ri = (ys + ki - 1) // 2 + 1
        for kj in range(k):
            ci = (xs + kj - 1) // 2 + 1
            taps.append(fp[:, :, ri[:, None], ci[None, :]])  # (B, C, Ho, Wo)
    p = jnp.stack(taps, axis=2)                              # (B, C, k*k, Ho, Wo)
    p = p.transpose(1, 2, 0, 3, 4)                           # (C, k*k, B, Ho, Wo)
    return p.reshape(C * k * k, B * Ho * Wo), Ho, Wo


# ---------------------------------------------------------------------------
# Discriminator
# ---------------------------------------------------------------------------
def init_params(key, n_channels, img_size):
    down_size = img_size // 2
    down_dim = 64 * down_size ** 2
    ks = jax.random.split(key, 8)

    def u(k, shape, fan_in):
        bound = 1.0 / jnp.sqrt(float(fan_in))
        return jax.random.uniform(k, shape, jnp.float32, -bound, bound)

    params = dict(
        # down: Conv2d(n_channels, 64, 3, 2, 1)
        conv1_w=u(ks[0], (64, n_channels, 3, 3), n_channels * 9),
        conv1_b=u(ks[1], (64,), n_channels * 9),
        # fc: Linear(down_dim, 32), BN(32, eps=0.8), Linear(32, down_dim), BN(down_dim)
        fc1_w=u(ks[2], (down_dim, 32), down_dim),     # = W1.T, rows in PyTorch (c,h,w) order
        fc1_b=u(ks[3], (1, 32), down_dim),
        bn1_g=jnp.ones((1, 32), jnp.float32),
        bn1_b=jnp.zeros((1, 32), jnp.float32),
        fc2_w=u(ks[4], (32, down_dim), 32),           # = W2.T, cols in (c,h,w) order
        fc2_b=u(ks[5], (1, down_dim), 32),
        bn2_g=jnp.ones((1, down_dim), jnp.float32),
        bn2_b=jnp.zeros((1, down_dim), jnp.float32),
        # up: Upsample(x2), Conv2d(64, n_channels, 3, 1, 1)
        conv2_w=u(ks[6], (n_channels, 64, 3, 3), 64 * 9),
        conv2_b=u(ks[7], (n_channels,), 64 * 9),
    )
    return params, down_size


def prepare_params(params, n_channels, img_size):
    """One-time layout permutation + bf16 cast of the weights (run OUTSIDE the jitted
    forward) so there is no per-call weight relayout/cast HBM traffic."""
    ds = img_size // 2
    down_dim = 64 * ds * ds

    # conv1 weight rows in im2col order (kh, kw, cin).
    conv1_wm = params["conv1_w"].transpose(2, 3, 1, 0).reshape(9 * n_channels, 64)
    # fc1: permute rows from PyTorch NCHW-flat (c,h,w) order to conv1's NHWC-flat (h,w,c)
    # order (exact reparameterization — identical math to out.view(B, -1) on NCHW).
    w1 = params["fc1_w"].reshape(64, ds, ds, 32).transpose(1, 2, 0, 3).reshape(down_dim, 32)
    # fc2 / BN2 stay in PyTorch NCHW-flat order: the conv2 path consumes NCHW directly.
    # conv2, transposed: (Cout, Cin*9), Cout zero-padded 4 -> 8 sublanes (weight-side only).
    cp = max(8, _round_up(n_channels, 8))
    w2m = params["conv2_w"].reshape(n_channels, 64 * 9)
    conv2_wm = jnp.zeros((cp, 64 * 9), jnp.float32).at[:n_channels].set(w2m)
    conv2_b = jnp.zeros((cp, 1), jnp.float32).at[:n_channels, 0].set(params["conv2_b"])

    return dict(
        conv1_wm=conv1_wm.astype(jnp.bfloat16),
        conv1_b=params["conv1_b"].reshape(1, 64).astype(jnp.float32),
        fc1_w=w1.astype(jnp.bfloat16),
        fc1_b=params["fc1_b"], bn1_g=params["bn1_g"], bn1_b=params["bn1_b"],
        fc2_w=params["fc2_w"].astype(jnp.bfloat16),
        fc2_b=params["fc2_b"], bn2_g=params["bn2_g"], bn2_b=params["bn2_b"],
        conv2_wm=conv2_wm.astype(jnp.bfloat16),
        conv2_b=conv2_b,
    )


def discriminator_forward(prep, img, *, n_channels, down_size):
    B = img.shape[0]
    ds = down_size

    # --- self.down: Conv2d(n_ch, 64, 3, 2, 1) + ReLU ---
    x = img.transpose(0, 2, 3, 1).astype(jnp.bfloat16)            # NCHW -> NHWC once, bf16
    p1, Ho, Wo = im2col_nhwc(x, 3, 2, 1)                          # (B*Ho*Wo, 9*n_ch) bf16
    act1 = conv1_rows_matmul(p1, prep["conv1_wm"], prep["conv1_b"],
                             out_dtype=jnp.bfloat16)              # (B*Ho*Wo, 64) bf16
    flat = act1.reshape(B, Ho * Wo * 64)                          # NHWC-flat (h, w, c) order

    # --- self.fc: Linear -> BN(eps=0.8) -> ReLU -> Linear -> BN -> ReLU ---
    h = fc1_bn_relu(flat, prep["fc1_w"], prep["fc1_b"],
                    prep["bn1_g"], prep["bn1_b"], eps=0.8)        # (B, 32) bf16
    flat2 = fc2_bn_relu(h, prep["fc2_w"], prep["fc2_b"],
                        prep["bn2_g"], prep["bn2_b"], eps=1e-5)   # (B, down_dim) bf16, (c,h,w)

    # --- self.up: Upsample(x2, nearest) fused into conv2's patch gather + Conv2d(64, n_ch, 3, 1, 1)
    feat = flat2.reshape(B, 64, ds, ds)                           # NCHW (PyTorch-native order)
    p2t, Uo, Vo = upsample2x_im2col_t_nchw(feat, 3)               # (576, B*Uo*Vo) bf16
    out_t = conv2_cols_matmul(prep["conv2_wm"], p2t, prep["conv2_b"])   # (8, B*Uo*Vo) f32
    pred = out_t[:n_channels].reshape(n_channels, B, Uo, Vo).transpose(1, 0, 2, 3)
    return pred                                                   # (B, n_ch, 2*ds, 2*ds) f32


if __name__ == "__main__":
    B, n_channels, img_size = 2, 4, 16
    key = jax.random.PRNGKey(0)
    k_img, k_par = jax.random.split(key)

    img = jax.random.normal(k_img, (B, n_channels, img_size, img_size), jnp.float32)
    params, down_size = init_params(k_par, n_channels, img_size)
    prep = prepare_params(params, n_channels, img_size)           # one-time layout / bf16 prep

    fwd = jax.jit(functools.partial(discriminator_forward,
                                    n_channels=n_channels, down_size=down_size))
    out = jax.block_until_ready(fwd(prep, img))

    assert out.shape == (B, n_channels, img_size, img_size), out.shape
    assert out.dtype == jnp.float32
    print("KERNEL_OK")
</pallas_src>

<mosaic_0001>
module attributes {stable_mosaic.version = 11 : i64} {
  func.func @_mm_bias_kernel(%arg0: i32, %arg1: memref<64x36xbf16, #tpu.memory_space<vmem>>, %arg2: memref<36x64xbf16, #tpu.memory_space<vmem>>, %arg3: memref<1x64xf32, #tpu.memory_space<vmem>>, %arg4: memref<64x64xbf16, #tpu.memory_space<vmem>>) attributes {dimension_semantics = [#tpu.dimension_semantics<parallel>], iteration_bounds = array<i64: 2>, scalar_prefetch = 0 : i64, scratch_operands = 0 : i64, tpu.core_type = #tpu.core_type<tc>, window_params = [{transform_indices = @transform_0, window_bounds = array<i64: 64, 36>}, {pipeline_mode = #tpu.pipeline_mode<synchronous>, transform_indices = @transform_1, window_bounds = array<i64: 36, 64>}, {pipeline_mode = #tpu.pipeline_mode<synchronous>, transform_indices = @transform_2, window_bounds = array<i64: 1, 64>}, {transform_indices = @transform_3, window_bounds = array<i64: 64, 64>}]} {
    %c0 = arith.constant 0 : index
    %c0_0 = arith.constant 0 : index
    %0 = vector.load %arg1[%c0, %c0_0] : memref<64x36xbf16, #tpu.memory_space<vmem>>, vector<64x36xbf16>
    %c0_1 = arith.constant 0 : index
    %c0_2 = arith.constant 0 : index
    %1 = vector.load %arg2[%c0_1, %c0_2] : memref<36x64xbf16, #tpu.memory_space<vmem>>, vector<36x64xbf16>
    %cst = arith.constant dense<0.000000e+00> : vector<64x64xf32>
    %2 = tpu.matmul %0, %1, %cst {dimension_numbers = #tpu.dot_dimension_numbers<[1], [0], [0], [1], [0, 0, 1, 1], [], []>} : vector<64x36xbf16>, vector<36x64xbf16>, vector<64x64xf32> -> vector<64x64xf32>
    %c0_3 = arith.constant 0 : index
    %c0_4 = arith.constant 0 : index
    %3 = vector.load %arg3[%c0_3, %c0_4] : memref<1x64xf32, #tpu.memory_space<vmem>>, vector<1x64xf32>
    %4 = vector.broadcast %3 : vector<1x64xf32> to vector<64x64xf32>
    %5 = arith.addf %2, %4 : vector<64x64xf32>
    %cst_5 = arith.constant 0.000000e+00 : f32
    %6 = vector.broadcast %cst_5 : f32 to vector<64x64xf32>
    %7 = arith.maximumf %5, %6 : vector<64x64xf32>
    %8 = arith.truncf %7 : vector<64x64xf32> to vector<64x64xbf16>
    %c0_6 = arith.constant 0 : index
    %c0_7 = arith.constant 0 : index
    %9 = vector.load %arg4[%c0_6, %c0_7] : memref<64x64xbf16, #tpu.memory_space<vmem>>, vector<64x64xbf16>
    tpu.vector_store %arg4[%c0_6, %c0_7], %8 {strides = array<i32>} : memref<64x64xbf16, #tpu.memory_space<vmem>>, vector<64x64xbf16>,
    return
  }
  func.func @transform_0(%arg0: i32) -> (i32, i32) {
    %c0_i32 = arith.constant 0 : i32
    %c0_i32_0 = arith.constant 0 : i32
    return %arg0, %c0_i32 : i32, i32
  }
  func.func @transform_1(%arg0: i32) -> (i32, i32) {
    %c0_i32 = arith.constant 0 : i32
    %c0_i32_0 = arith.constant 0 : i32
    %c0_i32_1 = arith.constant 0 : i32
    return %c0_i32, %c0_i32_0 : i32, i32
  }
  func.func @transform_2(%arg0: i32) -> (i32, i32) {
    %c0_i32 = arith.constant 0 : i32
    %c0_i32_0 = arith.constant 0 : i32
    %c0_i32_1 = arith.constant 0 : i32
    return %c0_i32, %c0_i32_0 : i32, i32
  }
  func.func @transform_3(%arg0: i32) -> (i32, i32) {
    %c0_i32 = arith.constant 0 : i32
    %c0_i32_0 = arith.constant 0 : i32
    return %arg0, %c0_i32 : i32, i32
  }
}

module attributes {stable_mosaic.version = 11 : i64} {
  func.func @_fc1_kernel(%arg0: i32, %arg1: memref<2x4096xbf16, #tpu.memory_space<vmem>>, %arg2: memref<4096x32xbf16, #tpu.memory_space<vmem>>, %arg3: memref<1x32xf32, #tpu.memory_space<vmem>>, %arg4: memref<1x32xf32, #tpu.memory_space<vmem>>, %arg5: memref<1x32xf32, #tpu.memory_space<vmem>>, %arg6: memref<2x32xbf16, #tpu.memory_space<vmem>>, %arg7: memref<2x32xf32, #tpu.memory_space<vmem>>) attributes {dimension_semantics = [#tpu.dimension_semantics<arbitrary>], iteration_bounds = array<i64: 1>, scalar_prefetch = 0 : i64, scratch_operands = 1 : i64, tpu.core_type = #tpu.core_type<tc>, window_params = [{transform_indices = @transform_0, window_bounds = array<i64: 2, 4096>}, {transform_indices = @transform_1, window_bounds = array<i64: 4096, 32>}, {pipeline_mode = #tpu.pipeline_mode<synchronous>, transform_indices = @transform_2, window_bounds = array<i64: 1, 32>}, {pipeline_mode = #tpu.pipeline_mode<synchronous>, transform_indices = @transform_3, window_bounds = array<i64: 1, 32>}, {pipeline_mode = #tpu.pipeline_mode<synchronous>, transform_indices = @transform_4, window_bounds = array<i64: 1, 32>}, {pipeline_mode = #tpu.pipeline_mode<synchronous>, transform_indices = @transform_5, window_bounds = array<i64: 2, 32>}]} {
    %c0_i32 = arith.constant 0 : i32
    %0 = arith.cmpi eq, %arg0, %c0_i32 : i32
    %1 = arith.extui %0 : i1 to i32
    %c0_i32_0 = arith.constant 0 : i32
    %2 = arith.cmpi ne, %1, %c0_i32_0 : i32
    scf.if %2 {
      %cst_10 = arith.constant 0.000000e+00 : f32
      %12 = vector.broadcast %cst_10 : f32 to vector<2x32xf32>
      %c0_11 = arith.constant 0 : index
      %c0_12 = arith.constant 0 : index
      %13 = vector.load %arg7[%c0_11, %c0_12] : memref<2x32xf32, #tpu.memory_space<vmem>>, vector<2x32xf32>
      tpu.vector_store %arg7[%c0_11, %c0_12], %12 {strides = array<i32>} : memref<2x32xf32, #tpu.memory_space<vmem>>, vector<2x32xf32>,
    } else {
    }
    %c0 = arith.constant 0 : index
    %c0_1 = arith.constant 0 : index
    %3 = vector.load %arg7[%c0, %c0_1] : memref<2x32xf32, #tpu.memory_space<vmem>>, vector<2x32xf32>
    %c0_2 = arith.constant 0 : index
    %c0_3 = arith.constant 0 : index
    %4 = vector.load %arg1[%c0_2, %c0_3] : memref<2x4096xbf16, #tpu.memory_space<vmem>>, vector<2x4096xbf16>
    %c0_4 = arith.constant 0 : index
    %c0_5 = arith.constant 0 : index
    %5 = vector.load %arg2[%c0_4, %c0_5] : memref<4096x32xbf16, #tpu.memory_space<vmem>>, vector<4096x32xbf16>
    %cst = arith.constant dense<0.000000e+00> : vector<2x32xf32>
    %6 = tpu.matmul %4, %5, %cst {dimension_numbers = #tpu.dot_dimension_numbers<[1], [0], [0], [1], [0, 0, 1, 1], [], []>} : vector<2x4096xbf16>, vector<4096x32xbf16>, vector<2x32xf32> -> vector<2x32xf32>
    %7 = arith.addf %3, %6 : vector<2x32xf32>
    %c0_6 = arith.constant 0 : index
    %c0_7 = arith.constant 0 : index
    %8 = vector.load %arg7[%c0_6, %c0_7] : memref<2x32xf32, #tpu.memory_space<vmem>>, vector<2x32xf32>
    tpu.vector_store %arg7[%c0_6, %c0_7], %7 {strides = array<i32>} : memref<2x32xf32, #tpu.memory_space<vmem>>, vector<2x32xf32>,
    %c0_i32_8 = arith.constant 0 : i32
    %9 = arith.cmpi eq, %arg0, %c0_i32_8 : i32
    %10 = arith.extui %9 : i1 to i32
    %c0_i32_9 = arith.constant 0 : i32
    %11 = arith.cmpi ne, %10, %c0_i32_9 : i32
    scf.if %11 {
      %c0_10 = arith.constant 0 : index
      %c0_11 = arith.constant 0 : index
      %12 = vector.load %arg7[%c0_10, %c0_11] : memref<2x32xf32, #tpu.memory_space<vmem>>, vector<2x32xf32>
      %c0_12 = arith.constant 0 : index
      %c0_13 = arith.constant 0 : index
      %13 = vector.load %arg3[%c0_12, %c0_13] : memref<1x32xf32, #tpu.memory_space<vmem>>, vector<1x32xf32>
      %14 = vector.broadcast %13 : vector<1x32xf32> to vector<2x32xf32>
      %15 = arith.addf %12, %14 : vector<2x32xf32>
      %cst_14 = arith.constant dense<0.000000e+00> : vector<32xf32>
      %16 = vector.multi_reduction <add>, %15, %cst_14 [0] : vector<2x32xf32> to vector<32xf32>
      %17 = vector.shape_cast %16 : vector<32xf32> to vector<1x32xf32>
      %cst_15 = arith.constant 2.000000e+00 : f32
      %18 = vector.broadcast %cst_15 : f32 to vector<1x32xf32>
      %19 = arith.divf %17, %18 : vector<1x32xf32>
      %20 = vector.broadcast %19 : vector<1x32xf32> to vector<2x32xf32>
      %21 = arith.subf %15, %20 : vector<2x32xf32>
      %22 = arith.mulf %21, %21 : vector<2x32xf32>
      %cst_16 = arith.constant dense<0.000000e+00> : vector<32xf32>
      %23 = vector.multi_reduction <add>, %22, %cst_16 [0] : vector<2x32xf32> to vector<32xf32>
      %24 = vector.shape_cast %23 : vector<32xf32> to vector<1x32xf32>
      %cst_17 = arith.constant 2.000000e+00 : f32
      %25 = vector.broadcast %cst_17 : f32 to vector<1x32xf32>
      %26 = arith.divf %24, %25 : vector<1x32xf32>
      %27 = vector.broadcast %19 : vector<1x32xf32> to vector<2x32xf32>
      %28 = arith.subf %15, %27 : vector<2x32xf32>
      %cst_18 = arith.constant 8.000000e-01 : f32
      %29 = vector.broadcast %cst_18 : f32 to vector<1x32xf32>
      %30 = arith.addf %26, %29 : vector<1x32xf32>
      %31 = math.rsqrt %30 : vector<1x32xf32>
      %32 = vector.broadcast %31 : vector<1x32xf32> to vector<2x32xf32>
      %33 = arith.mulf %28, %32 : vector<2x32xf32>
      %c0_19 = arith.constant 0 : index
      %c0_20 = arith.constant 0 : index
      %34 = vector.load %arg4[%c0_19, %c0_20] : memref<1x32xf32, #tpu.memory_space<vmem>>, vector<1x32xf32>
      %35 = vector.broadcast %34 : vector<1x32xf32> to vector<2x32xf32>
      %36 = arith.mulf %33, %35 : vector<2x32xf32>
      %c0_21 = arith.constant 0 : index
      %c0_22 = arith.constant 0 : index
      %37 = vector.load %arg5[%c0_21, %c0_22] : memref<1x32xf32, #tpu.memory_space<vmem>>, vector<1x32xf32>
      %38 = vector.broadcast %37 : vector<1x32xf32> to vector<2x32xf32>
      %39 = arith.addf %36, %38 : vector<2x32xf32>
      %cst_23 = arith.constant 0.000000e+00 : f32
      %40 = vector.broadcast %cst_23 : f32 to vector<2x32xf32>
      %41 = arith.maximumf %39, %40 : vector<2x32xf32>
      %42 = arith.truncf %41 : vector<2x32xf32> to vector<2x32xbf16>
      %c0_24 = arith.constant 0 : index
      %c0_25 = arith.constant 0 : index
      %43 = vector.load %arg6[%c0_24, %c0_25] : memref<2x32xbf16, #tpu.memory_space<vmem>>, vector<2x32xbf16>
      tpu.vector_store %arg6[%c0_24, %c0_25], %42 {strides = array<i32>} : memref<2x32xbf16, #tpu.memory_space<vmem>>, vector<2x32xbf16>,
    } else {
    }
    return
  }
  func.func @transform_0(%arg0: i32) -> (i32, i32) {
    %c0_i32 = arith.constant 0 : i32
    %c0_i32_0 = arith.constant 0 : i32
    return %c0_i32, %arg0 : i32, i32
  }
  func.func @transform_1(%arg0: i32) -> (i32, i32) {
    %c0_i32 = arith.constant 0 : i32
    %c0_i32_0 = arith.constant 0 : i32
    return %arg0, %c0_i32 : i32, i32
  }
  func.func @transform_2(%arg0: i32) -> (i32, i32) {
    %c0_i32 = arith.constant 0 : i32
    %c0_i32_0 = arith.constant 0 : i32
    %c0_i32_1 = arith.constant 0 : i32
    return %c0_i32, %c0_i32_0 : i32, i32
  }
  func.func @transform_3(%arg0: i32) -> (i32, i32) {
    %c0_i32 = arith.constant 0 : i32
    %c0_i32_0 = arith.constant 0 : i32
    %c0_i32_1 = arith.constant 0 : i32
    return %c0_i32, %c0_i32_0 : i32, i32
  }
  func.func @transform_4(%arg0: i32) -> (i32, i32) {
    %c0_i32 = arith.constant 0 : i32
    %c0_i32_0 = arith.constant 0 : i32
    %c0_i32_1 = arith.constant 0 : i32
    return %c0_i32, %c0_i32_0 : i32, i32
  }
  func.func @transform_5(%arg0: i32) -> (i32, i32) {
    %c0_i32 = arith.constant 0 : i32
    %c0_i32_0 = arith.constant 0 : i32
    %c0_i32_1 = arith.constant 0 : i32
    return %c0_i32, %c0_i32_0 : i32, i32
  }
}

module attributes {stable_mosaic.version = 11 : i64} {
  func.func @_fc2_kernel(%arg0: i32, %arg1: memref<2x32xbf16, #tpu.memory_space<vmem>>, %arg2: memref<32x2048xbf16, #tpu.memory_space<vmem>>, %arg3: memref<1x2048xf32, #tpu.memory_space<vmem>>, %arg4: memref<1x2048xf32, #tpu.memory_space<vmem>>, %arg5: memref<1x2048xf32, #tpu.memory_space<vmem>>, %arg6: memref<2x2048xbf16, #tpu.memory_space<vmem>>) attributes {dimension_semantics = [#tpu.dimension_semantics<parallel>], iteration_bounds = array<i64: 2>, scalar_prefetch = 0 : i64, scratch_operands = 0 : i64, tpu.core_type = #tpu.core_type<tc>, window_params = [{pipeline_mode = #tpu.pipeline_mode<synchronous>, transform_indices = @transform_0, window_bounds = array<i64: 2, 32>}, {transform_indices = @transform_1, window_bounds = array<i64: 32, 2048>}, {transform_indices = @transform_2, window_bounds = array<i64: 1, 2048>}, {transform_indices = @transform_3, window_bounds = array<i64: 1, 2048>}, {transform_indices = @transform_4, window_bounds = array<i64: 1, 2048>}, {transform_indices = @transform_5, window_bounds = array<i64: 2, 2048>}]} {
    %c0 = arith.constant 0 : index
    %c0_0 = arith.constant 0 : index
    %0 = vector.load %arg1[%c0, %c0_0] : memref<2x32xbf16, #tpu.memory_space<vmem>>, vector<2x32xbf16>
    %c0_1 = arith.constant 0 : index
    %c0_2 = arith.constant 0 : index
    %1 = vector.load %arg2[%c0_1, %c0_2] : memref<32x2048xbf16, #tpu.memory_space<vmem>>, vector<32x2048xbf16>
    %cst = arith.constant dense<0.000000e+00> : vector<2x2048xf32>
    %2 = tpu.matmul %0, %1, %cst {dimension_numbers = #tpu.dot_dimension_numbers<[1], [0], [0], [1], [0, 0, 1, 1], [], []>} : vector<2x32xbf16>, vector<32x2048xbf16>, vector<2x2048xf32> -> vector<2x2048xf32>
    %c0_3 = arith.constant 0 : index
    %c0_4 = arith.constant 0 : index
    %3 = vector.load %arg3[%c0_3, %c0_4] : memref<1x2048xf32, #tpu.memory_space<vmem>>, vector<1x2048xf32>
    %4 = vector.broadcast %3 : vector<1x2048xf32> to vector<2x2048xf32>
    %5 = arith.addf %2, %4 : vector<2x2048xf32>
    %cst_5 = arith.constant dense<0.000000e+00> : vector<2048xf32>
    %6 = vector.multi_reduction <add>, %5, %cst_5 [0] : vector<2x2048xf32> to vector<2048xf32>
    %7 = vector.shape_cast %6 : vector<2048xf32> to vector<1x2048xf32>
    %cst_6 = arith.constant 2.000000e+00 : f32
    %8 = vector.broadcast %cst_6 : f32 to vector<1x2048xf32>
    %9 = arith.divf %7, %8 : vector<1x2048xf32>
    %10 = vector.broadcast %9 : vector<1x2048xf32> to vector<2x2048xf32>
    %11 = arith.subf %5, %10 : vector<2x2048xf32>
    %12 = arith.mulf %11, %11 : vector<2x2048xf32>
    %cst_7 = arith.constant dense<0.000000e+00> : vector<2048xf32>
    %13 = vector.multi_reduction <add>, %12, %cst_7 [0] : vector<2x2048xf32> to vector<2048xf32>
    %14 = vector.shape_cast %13 : vector<2048xf32> to vector<1x2048xf32>
    %cst_8 = arith.constant 2.000000e+00 : f32
    %15 = vector.broadcast %cst_8 : f32 to vector<1x2048xf32>
    %16 = arith.divf %14, %15 : vector<1x2048xf32>
    %17 = vector.broadcast %9 : vector<1x2048xf32> to vector<2x2048xf32>
    %18 = arith.subf %5, %17 : vector<2x2048xf32>
    %cst_9 = arith.constant 9.99999974E-6 : f32
    %19 = vector.broadcast %cst_9 : f32 to vector<1x2048xf32>
    %20 = arith.addf %16, %19 : vector<1x2048xf32>
    %21 = math.rsqrt %20 : vector<1x2048xf32>
    %22 = vector.broadcast %21 : vector<1x2048xf32> to vector<2x2048xf32>
    %23 = arith.mulf %18, %22 : vector<2x2048xf32>
    %c0_10 = arith.constant 0 : index
    %c0_11 = arith.constant 0 : index
    %24 = vector.load %arg4[%c0_10, %c0_11] : memref<1x2048xf32, #tpu.memory_space<vmem>>, vector<1x2048xf32>
    %25 = vector.broadcast %24 : vector<1x2048xf32> to vector<2x2048xf32>
    %26 = arith.mulf %23, %25 : vector<2x2048xf32>
    %c0_12 = arith.constant 0 : index
    %c0_13 = arith.constant 0 : index
    %27 = vector.load %arg5[%c0_12, %c0_13] : memref<1x2048xf32, #tpu.memory_space<vmem>>, vector<1x2048xf32>
    %28 = vector.broadcast %27 : vector<1x2048xf32> to vector<2x2048xf32>
    %29 = arith.addf %26, %28 : vector<2x2048xf32>
    %cst_14 = arith.constant 0.000000e+00 : f32
    %30 = vector.broadcast %cst_14 : f32 to vector<2x2048xf32>
    %31 = arith.maximumf %29, %30 : vector<2x2048xf32>
    %32 = arith.truncf %31 : vector<2x2048xf32> to vector<2x2048xbf16>
    %c0_15 = arith.constant 0 : index
    %c0_16 = arith.constant 0 : index
    %33 = vector.load %arg6[%c0_15, %c0_16] : memref<2x2048xbf16, #tpu.memory_space<vmem>>, vector<2x2048xbf16>
    tpu.vector_store %arg6[%c0_15, %c0_16], %32 {strides = array<i32>} : memref<2x2048xbf16, #tpu.memory_space<vmem>>, vector<2x2048xbf16>,
    return
  }
  func.func @transform_0(%arg0: i32) -> (i32, i32) {
    %c0_i32 = arith.constant 0 : i32
    %c0_i32_0 = arith.constant 0 : i32
    %c0_i32_1 = arith.constant 0 : i32
    return %c0_i32, %c0_i32_0 : i32, i32
  }
  func.func @transform_1(%arg0: i32) -> (i32, i32) {
    %c0_i32 = arith.constant 0 : i32
    %c0_i32_0 = arith.constant 0 : i32
    return %c0_i32, %arg0 : i32, i32
  }
  func.func @transform_2(%arg0: i32) -> (i32, i32) {
    %c0_i32 = arith.constant 0 : i32
    %c0_i32_0 = arith.constant 0 : i32
    return %c0_i32, %arg0 : i32, i32
  }
  func.func @transform_3(%arg0: i32) -> (i32, i32) {
    %c0_i32 = arith.constant 0 : i32
    %c0_i32_0 = arith.constant 0 : i32
    return %c0_i32, %arg0 : i32, i32
  }
  func.func @transform_4(%arg0: i32) -> (i32, i32) {
    %c0_i32 = arith.constant 0 : i32
    %c0_i32_0 = arith.constant 0 : i32
    return %c0_i32, %arg0 : i32, i32
  }
  func.func @transform_5(%arg0: i32) -> (i32, i32) {
    %c0_i32 = arith.constant 0 : i32
    %c0_i32_0 = arith.constant 0 : i32
    return %c0_i32, %arg0 : i32, i32
  }
}

module attributes {stable_mosaic.version = 11 : i64} {
  func.func @_mm_bias_kernel(%arg0: i32, %arg1: memref<8x576xbf16, #tpu.memory_space<vmem>>, %arg2: memref<576x256xbf16, #tpu.memory_space<vmem>>, %arg3: memref<8x1xf32, #tpu.memory_space<vmem>>, %arg4: memref<8x256xf32, #tpu.memory_space<vmem>>) attributes {dimension_semantics = [#tpu.dimension_semantics<parallel>], iteration_bounds = array<i64: 2>, scalar_prefetch = 0 : i64, scratch_operands = 0 : i64, tpu.core_type = #tpu.core_type<tc>, window_params = [{pipeline_mode = #tpu.pipeline_mode<synchronous>, transform_indices = @transform_0, window_bounds = array<i64: 8, 576>}, {transform_indices = @transform_1, window_bounds = array<i64: 576, 256>}, {pipeline_mode = #tpu.pipeline_mode<synchronous>, transform_indices = @transform_2, window_bounds = array<i64: 8, 1>}, {transform_indices = @transform_3, window_bounds = array<i64: 8, 256>}]} {
    %c0 = arith.constant 0 : index
    %c0_0 = arith.constant 0 : index
    %0 = vector.load %arg1[%c0, %c0_0] : memref<8x576xbf16, #tpu.memory_space<vmem>>, vector<8x576xbf16>
    %c0_1 = arith.constant 0 : index
    %c0_2 = arith.constant 0 : index
    %1 = vector.load %arg2[%c0_1, %c0_2] : memref<576x256xbf16, #tpu.memory_space<vmem>>, vector<576x256xbf16>
    %cst = arith.constant dense<0.000000e+00> : vector<8x256xf32>
    %2 = tpu.matmul %0, %1, %cst {dimension_numbers = #tpu.dot_dimension_numbers<[1], [0], [0], [1], [0, 0, 1, 1], [], []>} : vector<8x576xbf16>, vector<576x256xbf16>, vector<8x256xf32> -> vector<8x256xf32>
    %c0_3 = arith.constant 0 : index
    %c0_4 = arith.constant 0 : index
    %3 = vector.load %arg3[%c0_3, %c0_4] : memref<8x1xf32, #tpu.memory_space<vmem>>, vector<8x1xf32>
    %4 = vector.broadcast %3 : vector<8x1xf32> to vector<8x256xf32>
    %5 = arith.addf %2, %4 : vector<8x256xf32>
    %c0_5 = arith.constant 0 : index
    %c0_6 = arith.constant 0 : index
    %6 = vector.load %arg4[%c0_5, %c0_6] : memref<8x256xf32, #tpu.memory_space<vmem>>, vector<8x256xf32>
    tpu.vector_store %arg4[%c0_5, %c0_6], %5 {strides = array<i32>} : memref<8x256xf32, #tpu.memory_space<vmem>>, vector<8x256xf32>,
    return
  }
  func.func @transform_0(%arg0: i32) -> (i32, i32) {
    %c0_i32 = arith.constant 0 : i32
    %c0_i32_0 = arith.constant 0 : i32
    %c0_i32_1 = arith.constant 0 : i32
    return %c0_i32, %c0_i32_0 : i32, i32
  }
  func.func @transform_1(%arg0: i32) -> (i32, i32) {
    %c0_i32 = arith.constant 0 : i32
    %c0_i32_0 = arith.constant 0 : i32
    return %c0_i32, %arg0 : i32, i32
  }
  func.func @transform_2(%arg0: i32) -> (i32, i32) {
    %c0_i32 = arith.constant 0 : i32
    %c0_i32_0 = arith.constant 0 : i32
    %c0_i32_1 = arith.constant 0 : i32
    return %c0_i32, %c0_i32_0 : i32, i32
  }
  func.func @transform_3(%arg0: i32) -> (i32, i32) {
    %c0_i32 = arith.constant 0 : i32
    %c0_i32_0 = arith.constant 0 : i32
    return %c0_i32, %arg0 : i32, i32
  }
}

</mosaic_0001>

<llo_original>
// kernel: discriminator_forward.4
$region0: #{discriminator_forward.4}
  #allocation0 [shape = 'u32[]', space=smem, size = 0x4, offset = 0x4, fixed_abs, tag = 'smem constant byte address 0x4 - core index']
  #allocation1 [shape = 'u32[144,128]{1,0:T(1,128)}', space=vmem, size = 0x12000, scoped, tag = 'internal scratch']
  %s0 = inlined_call_operand.vmem [shape: bf16[128,36], index: 0, kind: input, shape index: {}]
  %s1 = inlined_call_operand.vmem [shape: bf16[36,64], index: 1, kind: input, shape index: {}]
  %s2 = inlined_call_operand.vmem [shape: f32[1,64], index: 2, kind: input, shape index: {}]
  %s3 = inlined_call_operand.vmem [shape: bf16[128,64], index: 3, kind: output, shape index: {}]
  %s4 = sld [smem:[#allocation0]]
  $region45: #{discriminator_forward.4} parent=0
    _
  %s6 = ssub.s32 1, %s4
  %s7 = scalar_select 0, %s6, %s4
  loop: start=0, step=1, limit=4
  $region2: #{discriminator_forward.4} parent=0 // loop_pre_header
    _
  $region3: #{discriminator_forward.4} parent=0 // loop_header
    %s9 = sphi 0, %s13
    %p10 = scmp.ge.s32.totalorder %s9, 4
    %s19 = sphi 0, %s21
    %s22 = sphi 0, %s19
    %s23 = sphi 0, %s22
    %s39 = sphi 0, %s23
    %s43 = sphi 0, %s43
    %s45 = sphi 0, %s43
    %s46 = sphi 0, %s45
    %s60 = sphi 0, %s46
    %s64 = sphi 0, %s64
    %s66 = sphi 0, %s64
    %s67 = sphi 0, %s66
    %s81 = sphi 0, %s67
    %s87 = sphi 0, %s89
    %s90 = sphi 0, %s87
    %s91 = sphi 0, %s90
    %s107 = sphi 0, %s91
  $region4: #{discriminator_forward.4} parent=0 // loop_header_branch
    %12 = sbr.rel (%p10) target = $region8
  $region5: #{discriminator_forward.4} parent=0 // loop_body
    %s14 = ssub.s32 %s9, 1
    %s15 = ssub.s32 %s9, 2
    %s16 = sadd.s32 %s9, 1
    %s17 = ssub.s32 %s9, %s16
    %p18 = scmp.eq.s32.totalorder %s17, 0
    %s20 = sadd.s32 %s19, 1
    %s21 = scalar_select %p18, %s19, %s20
    %p24 = pneg %p18
    %p25 = scmp.eq.s32.totalorder %s9, 1
    %p26 = por %p24, %p25
    %p27 = scmp.ne.s32.totalorder %s19, %s22
    %p28 = scmp.eq.s32.totalorder %s9, 0
    %p29 = por %p27, %p28
    %p30 = scmp.ne.s32.totalorder %s19, %s22
    %p31 = scmp.eq.s32.totalorder %s14, 1
    %p32 = por %p30, %p31
    %p33 = scmp.ne.s32.totalorder %s22, %s23
    %p34 = scmp.eq.s32.totalorder %s14, 0
    %p35 = por %p33, %p34
    %p36 = scmp.ne.s32.totalorder %s22, %s23
    %p37 = scmp.eq.s32.totalorder %s15, 1
    %p38 = por %p36, %p37
    %p40 = scmp.ne.s32.totalorder %s23, %s39
    %p41 = scmp.eq.s32.totalorder %s15, 0
    %p42 = por %p40, %p41
    %s44 = sadd.s32 %s43, 1
    %p47 = scmp.eq.s32.totalorder %s9, 1
    %p48 = scmp.ne.s32.totalorder %s43, %s45
    %p49 = scmp.eq.s32.totalorder %s9, 0
    %p50 = por %p48, %p49
    %p51 = scmp.ne.s32.totalorder %s43, %s45
    %p52 = scmp.eq.s32.totalorder %s14, 1
    %p53 = por %p51, %p52
    %p54 = scmp.ne.s32.totalorder %s45, %s46
    %p55 = scmp.eq.s32.totalorder %s14, 0
    %p56 = por %p54, %p55
    %p57 = scmp.ne.s32.totalorder %s45, %s46
    %p58 = scmp.eq.s32.totalorder %s15, 1
    %p59 = por %p57, %p58
    %p61 = scmp.ne.s32.totalorder %s46, %s60
    %p62 = scmp.eq.s32.totalorder %s15, 0
    %p63 = por %p61, %p62
    %s65 = sadd.s32 %s64, 1
    %p68 = scmp.eq.s32.totalorder %s9, 1
    %p69 = scmp.ne.s32.totalorder %s64, %s66
    %p70 = scmp.eq.s32.totalorder %s9, 0
    %p71 = por %p69, %p70
    %p72 = scmp.ne.s32.totalorder %s64, %s66
    %p73 = scmp.eq.s32.totalorder %s14, 1
    %p74 = por %p72, %p73
    %p75 = scmp.ne.s32.totalorder %s66, %s67
    %p76 = scmp.eq.s32.totalorder %s14, 0
    %p77 = por %p75, %p76
    %p78 = scmp.ne.s32.totalorder %s66, %s67
    %p79 = scmp.eq.s32.totalorder %s15, 1
    %p80 = por %p78, %p79
    %p82 = scmp.ne.s32.totalorder %s67, %s81
    %p83 = scmp.eq.s32.totalorder %s15, 0
    %p84 = por %p82, %p83
    %s85 = ssub.s32 %s9, %s16
    %p86 = scmp.eq.s32.totalorder %s85, 0
    %s88 = sadd.s32 %s87, 1
    %s89 = scalar_select %p86, %s87, %s88
    %p92 = pneg %p86
    %p93 = scmp.eq.s32.totalorder %s9, 1
    %p94 = por %p92, %p93
    %p95 = scmp.ne.s32.totalorder %s87, %s90
    %p96 = scmp.eq.s32.totalorder %s9, 0
    %p97 = por %p95, %p96
    %p98 = scmp.ne.s32.totalorder %s87, %s90
    %p99 = scmp.eq.s32.totalorder %s14, 1
    %p100 = por %p98, %p99
    %p101 = scmp.ne.s32.totalorder %s90, %s91
    %p102 = scmp.eq.s32.totalorder %s14, 0
    %p103 = por %p101, %p102
    %p104 = scmp.ne.s32.totalorder %s90, %s91
    %p105 = scmp.eq.s32.totalorder %s15, 1
    %p106 = por %p104, %p105
    %p108 = scmp.ne.s32.totalorder %s91, %s107
    %p109 = scmp.eq.s32.totalorder %s15, 0
    %p110 = por %p108, %p109
    %p111 = scmp.le.s32.totalorder 1, %s9
    %p112 = scmp.lt.s32.totalorder %s9, 3
    %p113 = pnand %p111, %p112
    %p114 = pneg %p113
    // Predicated region
    $region9: #{discriminator_forward.4} parent=5 // pred_check
      _
    $region10: #{discriminator_forward.4} parent=5 // pred_check_branch
      %116 = sbr.rel (%p113) target = $region12
    $region11: #{discriminator_forward.4} parent=5 // pred_region
      %s117 = ssub.s32 %s9, 1
      // Predicated region
      $region13: #{discriminator_forward.4} parent=11 // pred_check
        %p118 = pneg %p56
      $region14: #{discriminator_forward.4} parent=11 // pred_check_branch
        %120 = sbr.rel (%p118) target = $region16
      $region15: #{discriminator_forward.4} parent=11 // pred_region
        _
      $region16: #{discriminator_forward.4} parent=11 // pred_fallthru
        _
      // Predicated region
      $region17: #{discriminator_forward.4} parent=11 // pred_check
        %p121 = pneg %p77
      $region18: #{discriminator_forward.4} parent=11 // pred_check_branch
        %123 = sbr.rel (%p121) target = $region20
      $region19: #{discriminator_forward.4} parent=11 // pred_region
        _
      $region20: #{discriminator_forward.4} parent=11 // pred_fallthru
        _
    $region12: #{discriminator_forward.4} parent=5 // pred_fallthru
      _
    %p124 = scmp.lt.s32.totalorder %s9, 2
    // Predicated region
    $region21: #{discriminator_forward.4} parent=5 // pred_check
      %p125 = pneg %p124
    $region22: #{discriminator_forward.4} parent=5 // pred_check_branch
      %127 = sbr.rel (%p125) target = $region24
    $region23: #{discriminator_forward.4} parent=5 // pred_region
      // Predicated region
      $region25: #{discriminator_forward.4} parent=23 // pred_check
        %p128 = pneg %p29
      $region26: #{discriminator_forward.4} parent=23 // pred_check_branch
        %130 = sbr.rel (%p128) target = $region28
      $region27: #{discriminator_forward.4} parent=23 // pred_region
        %s131 = smul.u32 8, %s9
        %p132 = scmp.lt.s32.totalorder %s131, 15
        %s133 = scalar_select %p132, %s131, 15
        %s134 = smul.addr %s133, 4
        %s135 = scalar_lea.vmem %s0, %s134
        %s136 = smul.u32 8, %s9
      $region28: #{discriminator_forward.4} parent=23 // pred_fallthru
        _
    $region24: #{discriminator_forward.4} parent=5 // pred_fallthru
      _
    %p137 = scmp.le.s32.totalorder 1, %s9
    %p138 = scmp.lt.s32.totalorder %s9, 3
    %p139 = pnand %p137, %p138
    %p140 = pneg %p139
    // Predicated region
    $region29: #{discriminator_forward.4} parent=5 // pred_check
      _
    $region30: #{discriminator_forward.4} parent=5 // pred_check_branch
      %142 = sbr.rel (%p139) target = $region32
    $region31: #{discriminator_forward.4} parent=5 // pred_region
      %s143 = ssub.s32 %s9, 1
      %s144 = smul.u32 8, %s14
      %p145 = scmp.lt.s32.totalorder %s144, 15
      %s146 = scalar_select %p145, %s144, 15
      %s147 = smul.addr %s146, 4
      %s148 = scalar_lea.vmem %s0, %s147
      %p149 = pneg %p35
      %p150 = pneg %p32
      %p151 = pneg %p56
      %p152 = pneg %p53
      %p153 = pneg %p77
      %p154 = pneg %p74
      %p155 = pneg %p103
      %p156 = pneg %p100
      %s157 = smul.u32 8, %s14
      %p158 = scmp.lt.s32.totalorder %s157, 15
      %s159 = scalar_select %p158, %s157, 15
      %s160 = smul.addr %s159, 4
      %s161 = scalar_lea.vmem %s3, %s160
      %s162 = smul.u32 8, %s14
      %p163 = scmp.lt.s32.totalorder %s162, 15
      %s164 = scalar_select %p163, %s162, 15
      %s165 = smul.addr %s164, 4
      %s166 = scalar_lea.vmem %s0, %s165
      %s167 = smul.u32 8, %s14
      %s168 = smul.u32 8, %s14
      %p169 = scmp.lt.s32.totalorder %s168, 15
      %s170 = scalar_select %p169, %s168, 15
      %s171 = smul.addr %s170, 4
      %s172 = scalar_lea.vmem %s3, %s171
      %s173 = smul.u32 8, %s14
      %v175 = vld [vmem:[%s166] sm:$0xf]
      %v176 = vld [vmem:[%s166 + $0x4] sm:$0xf]
      %v177 = vld [vmem:[%s166 + $0x8] sm:$0xf]
      %v178 = vld [vmem:[%s166 + $0xc] sm:$0xf]
      %v179 = vld [vmem:[%s166 + $0x10] sm:$0xf]
      %v180 = vld [vmem:[%s166 + $0x14] sm:$0xf]
      %v181 = vld [vmem:[%s166 + $0x18] sm:$0xf]
      %v182 = vld [vmem:[%s166 + $0x1c] sm:$0xf]
      %v183 = vld [vmem:[%s1] sm:$0xf]
      %v184 = vld [vmem:[%s1 + $0x4] sm:$0xf]
      %v185 = vld [vmem:[%s1 + $0x8] sm:$0xf]
      %v186 = vld [vmem:[%s1 + $0xc] sm:$0xf]
      %v187 = vld [vmem:[%s1 + $0x10] sm:$0x3]
      %v188 = vld [vmem:[%s2] sm:$0x1]
      %v190 = vlaneseq
      %v191 = vshrl.u32 %v190, 7
      %v192 = vsub.s32 0, %v191
      %v193 = vrot.slane %v188, %v192
      %v203 = vunpack.c.l.b16 %v175
      %v204 = vunpack.c.l.b16 %v176
      %v205 = vunpack.c.l.b16 %v177
      %v206 = vunpack.c.l.b16 %v178
      %v207 = vunpack.c.l.b16 %v179
      %v208 = vunpack.c.l.b16 %v180
      %v209 = vunpack.c.l.b16 %v181
      %v210 = vunpack.c.l.b16 %v182
      %v211 = vpack.c.b16 %v204, %v203
      %v212 = vpack.c.b16 %v206, %v205
      %v213 = vpack.c.b16 %v208, %v207
      %v214 = vpack.c.b16 %v210, %v209
      %v220 = vunpack.c.l.b16 %v183
      %v221 = vunpack.c.l.b16 %v184
      %v222 = vunpack.c.l.b16 %v185
      %v223 = vunpack.c.l.b16 %v186
      %v224 = vunpack.c.l.b16 %v187
      %v225 = vpack.c.b16 %v221, %v220
      %v226 = vpack.c.b16 %v223, %v222
      %v227 = vpack.c.b16 %v224, %v224
      %vm230 = vcmask 293888
      %v232 = vsel %vm230, %v211, 0
      %v235 = vsel %vm230, %v212, 0
      %v238 = vsel %vm230, %v213, 0
      %v241 = vsel %vm230, %v214, 0
      %vm243 = vcmask 1041408
      %v245 = vsel %vm243, %v227, 0
      %247 = vmatprep.subr.bf16.mxu0 0
      %248 = vmatpush1.bf16.msra.mxu0 %v225
      %249 = vmatprep.subr.bf16.mxu0 0
      %250 = vmatpush1.bf16.msra.mxu0 %v226
      %251 = vmatprep.subr.bf16.mxu0 0
      %252 = vmatpush1.bf16.msra.mxu0 %v245
      %253 = vmatprep.subr.bf16.mxu0 0
      %254 = vmatpush1.bf16.msra.mxu0 0
      %255 = vmatprep.subr.bf16.mxu0 0
      %256 = vmatpush1.bf16.msra.mxu0 0
      %257 = vmatprep.subr.bf16.mxu0 0
      %258 = vmatpush1.bf16.msra.mxu0 0
      %259 = vmatprep.subr.bf16.mxu0 0
      %260 = vmatpush1.bf16.msra.mxu0 0
      %261 = vmatprep.subr.bf16.mxu0 0
      %262 = vmatpush1.bf16.msra.mxu0 0
      %263 = vmatprep.subr.bf16.mxu0 0
      %264 = vmatpush1.bf16.msra.mxu0 0
      %265 = vmatprep.subr.bf16.mxu0 0
      %266 = vmatpush1.bf16.msra.mxu0 0
      %267 = vmatprep.subr.bf16.mxu0 0
      %268 = vmatpush1.bf16.msra.mxu0 0
      %269 = vmatprep.subr.bf16.mxu0 0
      %270 = vmatpush1.bf16.msra.mxu0 0
      %271 = vmatprep.subr.bf16.mxu0 0
      %272 = vmatpush1.bf16.msra.mxu0 0
      %273 = vmatprep.subr.bf16.mxu0 0
      %274 = vmatpush1.bf16.msra.mxu0 0
      %275 = vmatprep.subr.bf16.mxu0 0
      %276 = vmatpush1.bf16.msra.mxu0 0
      %277 = vmatprep.subr.bf16.mxu0 0
      %278 = vmatpush1.bf16.msra.mxu0 0
      %279 = vmatprep.mubr.bf16.mxu0 0
      %280 = vmatmul.mubr.bf16.gmra.mrb[0].mxu0 %v232
      %v281 = vpop.f32.mrb[0].mxu0
      %v282 = vadd.f32 %v193, %v281
      %v283 = vpop.f32.mrb[0].mxu0
      %v284 = vpop.f32.mrb[0].mxu0
      %v285 = vadd.f32 %v193, %v284
      %v286 = vpop.f32.mrb[0].mxu0
      %287 = vmatprep.mubr.bf16.mxu0 0
      %288 = vmatmul.mubr.bf16.gmra.mrb[0].mxu0 %v235
      %v289 = vpop.f32.mrb[0].mxu0
      %v290 = vadd.f32 %v193, %v289
      %v291 = vpop.f32.mrb[0].mxu0
      %v292 = vpop.f32.mrb[0].mxu0
      %v293 = vadd.f32 %v193, %v292
      %v294 = vpop.f32.mrb[0].mxu0
      %295 = vmatprep.mubr.bf16.mxu0 0
      %296 = vmatmul.mubr.bf16.gmra.mrb[0].mxu0 %v238
      %v297 = vpop.f32.mrb[0].mxu0
      %v298 = vadd.f32 %v193, %v297
      %v299 = vpop.f32.mrb[0].mxu0
      %v300 = vpop.f32.mrb[0].mxu0
      %v301 = vadd.f32 %v193, %v300
      %v302 = vpop.f32.mrb[0].mxu0
      %303 = vmatprep.mubr.bf16.mxu0 0
      %304 = vmatmul.mubr.bf16.gmra.mrb[0].mxu0 %v241
      %v305 = vpop.f32.mrb[0].mxu0
      %v306 = vadd.f32 %v193, %v305
      %v307 = vpop.f32.mrb[0].mxu0
      %v308 = vpop.f32.mrb[0].mxu0
      %v309 = vadd.f32 %v193, %v308
      %v310 = vpop.f32.mrb[0].mxu0
      %311 = vdwg.mxu0
      %v312 = vmax.f32 %v282, 0.0
      %v313 = vmax.f32 %v285, 0.0
      %v314 = vmax.f32 %v290, 0.0
      %v315 = vmax.f32 %v293, 0.0
      %v316 = vmax.f32 %v298, 0.0
      %v317 = vmax.f32 %v301, 0.0
      %v318 = vmax.f32 %v306, 0.0
      %v319 = vmax.f32 %v309, 0.0
      %v320 = vpack.c.bf16 %v313, %v312
      %v321 = vpack.c.bf16 %v315, %v314
      %v322 = vpack.c.bf16 %v317, %v316
      %v323 = vpack.c.bf16 %v319, %v318
      %v328 = vunpack.c.l.b16 %v320
      %v329 = vunpack.c.h.b16 %v320
      %v330 = vunpack.c.l.b16 %v321
      %v331 = vunpack.c.h.b16 %v321
      %v332 = vunpack.c.l.b16 %v322
      %v333 = vunpack.c.h.b16 %v322
      %v334 = vunpack.c.l.b16 %v323
      %v335 = vunpack.c.h.b16 %v323
      %v336 = vpack.c.b16 %v328, %v328
      %v337 = vpack.c.b16 %v329, %v329
      %v338 = vpack.c.b16 %v330, %v330
      %v339 = vpack.c.b16 %v331, %v331
      %v340 = vpack.c.b16 %v332, %v332
      %v341 = vpack.c.b16 %v333, %v333
      %v342 = vpack.c.b16 %v334, %v334
      %v343 = vpack.c.b16 %v335, %v335
      %vm352 = vcmask 519168
      %353 = vst.msk [vmem:[%s172] sm:$0xf] %vm352, %v336
      %354 = vst.msk [vmem:[%s172 + $0x4] sm:$0xf] %vm352, %v337
      %355 = vst.msk [vmem:[%s172 + $0x8] sm:$0xf] %vm352, %v338
      %356 = vst.msk [vmem:[%s172 + $0xc] sm:$0xf] %vm352, %v339
      %357 = vst.msk [vmem:[%s172 + $0x10] sm:$0xf] %vm352, %v340
      %358 = vst.msk [vmem:[%s172 + $0x14] sm:$0xf] %vm352, %v341
      %359 = vst.msk [vmem:[%s172 + $0x18] sm:$0xf] %vm352, %v342
      %360 = vst.msk [vmem:[%s172 + $0x1c] sm:$0xf] %vm352, %v343
      %s361 = smul.u32 8, %s14
      %p362 = scmp.lt.s32.totalorder %s361, 15
      %s363 = scalar_select %p362, %s361, 15
      %s364 = smul.addr %s363, 4
      %s365 = scalar_lea.vmem %s3, %s364
      // Predicated region
      $region33: #{discriminator_forward.4} parent=31 // pred_check
        %p366 = pneg %p100
      $region34: #{discriminator_forward.4} parent=31 // pred_check_branch
        %368 = sbr.rel (%p366) target = $region36
      $region35: #{discriminator_forward.4} parent=31 // pred_region
        %s369 = smul.u32 8, %s14
      $region36: #{discriminator_forward.4} parent=31 // pred_fallthru
        _
    $region32: #{discriminator_forward.4} parent=5 // pred_fallthru
      _
    %p370 = scmp.le.s32.totalorder 2, %s9
    // Predicated region
    $region37: #{discriminator_forward.4} parent=5 // pred_check
      %p371 = pneg %p370
    $region38: #{discriminator_forward.4} parent=5 // pred_check_branch
      %373 = sbr.rel (%p371) target = $region40
    $region39: #{discriminator_forward.4} parent=5 // pred_region
      %s374 = ssub.s32 %s9, 2
      // Predicated region
      $region41: #{discriminator_forward.4} parent=39 // pred_check
        %p375 = pneg %p106
      $region42: #{discriminator_forward.4} parent=39 // pred_check_branch
        %377 = sbr.rel (%p375) target = $region44
      $region43: #{discriminator_forward.4} parent=39 // pred_region
        %s378 = smul.u32 8, %s15
        %p379 = scmp.lt.s32.totalorder %s378, 15
        %s380 = scalar_select %p379, %s378, 15
        %s381 = smul.addr %s380, 4
        %s382 = scalar_lea.vmem %s3, %s381
      $region44: #{discriminator_forward.4} parent=39 // pred_fallthru
        _
    $region40: #{discriminator_forward.4} parent=5 // pred_fallthru
      _
  $region6: #{discriminator_forward.4} parent=0 // loop_footer
    %s13 = sadd.s32 1, %s9
  $region7: #{discriminator_forward.4} parent=0 // loop_footer_branch
    %8 = sbr.rel target = $region3
  $region8: #{discriminator_forward.4} parent=0 // loop_exit
    _

// kernel: discriminator_forward.6
$region0: #{discriminator_forward.6}
  #allocation0 [shape = 'u32[]', space=smem, size = 0x4, offset = 0x4, fixed_abs, tag = 'smem constant byte address 0x4 - core index']
  #allocation1 [shape = 'u32[144,128]{1,0:T(1,128)}', space=vmem, size = 0x12000, scoped, tag = 'internal scratch']
  %s0 = inlined_call_operand.vmem [shape: bf16[2,32], index: 0, kind: input, shape index: {}]
  %s1 = inlined_call_operand.vmem [shape: bf16[32,4096], index: 1, kind: input, shape index: {}]
  %s2 = inlined_call_operand.vmem [shape: f32[1,4096], index: 2, kind: input, shape index: {}]
  %s3 = inlined_call_operand.vmem [shape: f32[1,4096], index: 3, kind: input, shape index: {}]
  %s4 = inlined_call_operand.vmem [shape: f32[1,4096], index: 4, kind: input, shape index: {}]
  %s5 = inlined_call_operand.vmem [shape: bf16[2,4096], index: 5, kind: output, shape index: {}]
  %s6 = sld [smem:[#allocation0]]
  $region76: #{discriminator_forward.6} parent=0
    _
  %s8 = ssub.s32 1, %s6
  %s9 = scalar_select 0, %s8, %s6
  $region1: #{discriminator_forward.6} parent=0
    #allocation2 [shape = 'u8[262144]{0}', space=vmem, size = 0x40000, scoped, tag = 'input window, operand 1']
    loop: start=0, step=1, limit=4
    $region2: #{discriminator_forward.6} parent=1 // loop_pre_header
      _
    $region3: #{discriminator_forward.6} parent=1 // loop_header
      %s11 = sphi 0, %s15
      %p12 = scmp.ge.s32.totalorder %s11, 4
      %s19 = sphi 0, %s19
      %s21 = sphi 0, %s19
      %s22 = sphi 0, %s21
      %s36 = sphi 0, %s22
      %s42 = sphi 0, %s44
      %s45 = sphi 0, %s42
      %s46 = sphi 0, %s45
      %s62 = sphi 0, %s46
      %s68 = sphi 0, %s70
      %s71 = sphi 0, %s68
      %s72 = sphi 0, %s71
      %s88 = sphi 0, %s72
      %s94 = sphi 0, %s96
      %s97 = sphi 0, %s94
      %s98 = sphi 0, %s97
      %s114 = sphi 0, %s98
      %s120 = sphi 0, %s122
      %s123 = sphi 0, %s120
      %s124 = sphi 0, %s123
      %s140 = sphi 0, %s124
      %s146 = sphi 0, %s148
      %s149 = sphi 0, %s146
      %s150 = sphi 0, %s149
      %s166 = sphi 0, %s150
    $region4: #{discriminator_forward.6} parent=1 // loop_header_branch
      %14 = sbr.rel (%p12) target = $region8
    $region5: #{discriminator_forward.6} parent=1 // loop_body
      %s16 = ssub.s32 %s11, 1
      %s17 = ssub.s32 %s11, 2
      %s18 = sadd.s32 %s11, 1
      %s20 = sadd.s32 %s19, 1
      %p23 = scmp.eq.s32.totalorder %s11, 1
      %p24 = scmp.ne.s32.totalorder %s19, %s21
      %p25 = scmp.eq.s32.totalorder %s11, 0
      %p26 = por %p24, %p25
      %p27 = scmp.ne.s32.totalorder %s19, %s21
      %p28 = scmp.eq.s32.totalorder %s16, 1
      %p29 = por %p27, %p28
      %p30 = scmp.ne.s32.totalorder %s21, %s22
      %p31 = scmp.eq.s32.totalorder %s16, 0
      %p32 = por %p30, %p31
      %p33 = scmp.ne.s32.totalorder %s21, %s22
      %p34 = scmp.eq.s32.totalorder %s17, 1
      %p35 = por %p33, %p34
      %p37 = scmp.ne.s32.totalorder %s22, %s36
      %p38 = scmp.eq.s32.totalorder %s17, 0
      %p39 = por %p37, %p38
      %s40 = ssub.s32 %s11, %s18
      %p41 = scmp.eq.s32.totalorder %s40, 0
      %s43 = sadd.s32 %s42, 1
      %s44 = scalar_select %p41, %s42, %s43
      %p47 = pneg %p41
      %p48 = scmp.eq.s32.totalorder %s11, 1
      %p49 = por %p47, %p48
      %p50 = scmp.ne.s32.totalorder %s42, %s45
      %p51 = scmp.eq.s32.totalorder %s11, 0
      %p52 = por %p50, %p51
      %p53 = scmp.ne.s32.totalorder %s42, %s45
      %p54 = scmp.eq.s32.totalorder %s16, 1
      %p55 = por %p53, %p54
      %p56 = scmp.ne.s32.totalorder %s45, %s46
      %p57 = scmp.eq.s32.totalorder %s16, 0
      %p58 = por %p56, %p57
      %p59 = scmp.ne.s32.totalorder %s45, %s46
      %p60 = scmp.eq.s32.totalorder %s17, 1
      %p61 = por %p59, %p60
      %p63 = scmp.ne.s32.totalorder %s46, %s62
      %p64 = scmp.eq.s32.totalorder %s17, 0
      %p65 = por %p63, %p64
      %s66 = ssub.s32 %s11, %s18
      %p67 = scmp.eq.s32.totalorder %s66, 0
      %s69 = sadd.s32 %s68, 1
      %s70 = scalar_select %p67, %s68, %s69
      %p73 = pneg %p67
      %p74 = scmp.eq.s32.totalorder %s11, 1
      %p75 = por %p73, %p74
      %p76 = scmp.ne.s32.totalorder %s68, %s71
      %p77 = scmp.eq.s32.totalorder %s11, 0
      %p78 = por %p76, %p77
      %p79 = scmp.ne.s32.totalorder %s68, %s71
      %p80 = scmp.eq.s32.totalorder %s16, 1
      %p81 = por %p79, %p80
      %p82 = scmp.ne.s32.totalorder %s71, %s72
      %p83 = scmp.eq.s32.totalorder %s16, 0
      %p84 = por %p82, %p83
      %p85 = scmp.ne.s32.totalorder %s71, %s72
      %p86 = scmp.eq.s32.totalorder %s17, 1
      %p87 = por %p85, %p86
      %p89 = scmp.ne.s32.totalorder %s72, %s88
      %p90 = scmp.eq.s32.totalorder %s17, 0
      %p91 = por %p89, %p90
      %s92 = ssub.s32 %s11, %s18
      %p93 = scmp.eq.s32.totalorder %s92, 0
      %s95 = sadd.s32 %s94, 1
      %s96 = scalar_select %p93, %s94, %s95
      %p99 = pneg %p93
      %p100 = scmp.eq.s32.totalorder %s11, 1
      %p101 = por %p99, %p100
      %p102 = scmp.ne.s32.totalorder %s94, %s97
      %p103 = scmp.eq.s32.totalorder %s11, 0
      %p104 = por %p102, %p103
      %p105 = scmp.ne.s32.totalorder %s94, %s97
      %p106 = scmp.eq.s32.totalorder %s16, 1
      %p107 = por %p105, %p106
      %p108 = scmp.ne.s32.totalorder %s97, %s98
      %p109 = scmp.eq.s32.totalorder %s16, 0
      %p110 = por %p108, %p109
      %p111 = scmp.ne.s32.totalorder %s97, %s98
      %p112 = scmp.eq.s32.totalorder %s17, 1
      %p113 = por %p111, %p112
      %p115 = scmp.ne.s32.totalorder %s98, %s114
      %p116 = scmp.eq.s32.totalorder %s17, 0
      %p117 = por %p115, %p116
      %s118 = ssub.s32 %s11, %s18
      %p119 = scmp.eq.s32.totalorder %s118, 0
      %s121 = sadd.s32 %s120, 1
      %s122 = scalar_select %p119, %s120, %s121
      %p125 = pneg %p119
      %p126 = scmp.eq.s32.totalorder %s11, 1
      %p127 = por %p125, %p126
      %p128 = scmp.ne.s32.totalorder %s120, %s123
      %p129 = scmp.eq.s32.totalorder %s11, 0
      %p130 = por %p128, %p129
      %p131 = scmp.ne.s32.totalorder %s120, %s123
      %p132 = scmp.eq.s32.totalorder %s16, 1
      %p133 = por %p131, %p132
      %p134 = scmp.ne.s32.totalorder %s123, %s124
      %p135 = scmp.eq.s32.totalorder %s16, 0
      %p136 = por %p134, %p135
      %p137 = scmp.ne.s32.totalorder %s123, %s124
      %p138 = scmp.eq.s32.totalorder %s17, 1
      %p139 = por %p137, %p138
      %p141 = scmp.ne.s32.totalorder %s124, %s140
      %p142 = scmp.eq.s32.totalorder %s17, 0
      %p143 = por %p141, %p142
      %s144 = ssub.s32 %s11, %s18
      %p145 = scmp.eq.s32.totalorder %s144, 0
      %s147 = sadd.s32 %s146, 1
      %s148 = scalar_select %p145, %s146, %s147
      %p151 = pneg %p145
      %p152 = scmp.eq.s32.totalorder %s11, 1
      %p153 = por %p151, %p152
      %p154 = scmp.ne.s32.totalorder %s146, %s149
      %p155 = scmp.eq.s32.totalorder %s11, 0
      %p156 = por %p154, %p155
      %p157 = scmp.ne.s32.totalorder %s146, %s149
      %p158 = scmp.eq.s32.totalorder %s16, 1
      %p159 = por %p157, %p158
      %p160 = scmp.ne.s32.totalorder %s149, %s150
      %p161 = scmp.eq.s32.totalorder %s16, 0
      %p162 = por %p160, %p161
      %p163 = scmp.ne.s32.totalorder %s149, %s150
      %p164 = scmp.eq.s32.totalorder %s17, 1
      %p165 = por %p163, %p164
      %p167 = scmp.ne.s32.totalorder %s150, %s166
      %p168 = scmp.eq.s32.totalorder %s17, 0
      %p169 = por %p167, %p168
      %p170 = scmp.le.s32.totalorder 1, %s11
      %p171 = scmp.lt.s32.totalorder %s11, 3
      %p172 = pnand %p170, %p171
      %p173 = pneg %p172
      // Predicated region
      $region9: #{discriminator_forward.6} parent=5 // pred_check
        _
      $region10: #{discriminator_forward.6} parent=5 // pred_check_branch
        %175 = sbr.rel (%p172) target = $region12
      $region11: #{discriminator_forward.6} parent=5 // pred_region
        %s176 = ssub.s32 %s11, 1
        // Predicated region
        $region13: #{discriminator_forward.6} parent=11 // pred_check
          %p177 = pneg %p32
        $region14: #{discriminator_forward.6} parent=11 // pred_check_branch
          %179 = sbr.rel (%p177) target = $region16
        $region15: #{discriminator_forward.6} parent=11 // pred_region
          _
        $region16: #{discriminator_forward.6} parent=11 // pred_fallthru
          _
      $region12: #{discriminator_forward.6} parent=5 // pred_fallthru
        _
      %p180 = scmp.lt.s32.totalorder %s11, 2
      // Predicated region
      $region17: #{discriminator_forward.6} parent=5 // pred_check
        %p181 = pneg %p180
      $region18: #{discriminator_forward.6} parent=5 // pred_check_branch
        %183 = sbr.rel (%p181) target = $region20
      $region19: #{discriminator_forward.6} parent=5 // pred_region
        // Predicated region
        $region21: #{discriminator_forward.6} parent=19 // pred_check
          %p184 = pneg %p52
        $region22: #{discriminator_forward.6} parent=19 // pred_check_branch
          %186 = sbr.rel (%p184) target = $region24
        $region23: #{discriminator_forward.6} parent=19 // pred_region
          %s187 = sand.u32 %s42, 1
          %s188 = sand.u32 %s42, 1
          %s189 = smul.addr %s188, 256
          %s190 = scalar_lea.vmem [#allocation2], %s189
          %s191 = smul.u32 16, %s11
          %s192 = smul.addr %s191, 4
          %s193 = scalar_lea.vmem %s1, %s192
          // Predicated region
          $region25: #{discriminator_forward.6} parent=23 // pred_check
            _
          $region26: #{discriminator_forward.6} parent=23 // pred_check_branch
            %195 = sbr.rel (0) target = $region28
          $region27: #{discriminator_forward.6} parent=23 // pred_region
            // Predicated region
            $region29: #{discriminator_forward.6} parent=27 // pred_check
              _
            $region30: #{discriminator_forward.6} parent=27 // pred_check_branch
              %197 = sbr.rel (0) target = $region32
            $region31: #{discriminator_forward.6} parent=27 // pred_region
              loop: start=0, step=1, limit=1
              $region33: #{discriminator_forward.6} parent=31 // loop_pre_header
                _
              $region34: #{discriminator_forward.6} parent=31 // loop_header
                %s199 = sphi 0, %s203
                %p200 = scmp.ge.s32.totalorder %s199, 1
                %s204 = sphi %s193, %s193
                %s205 = sphi %s190, %s190
              $region35: #{discriminator_forward.6} parent=31 // loop_header_branch
                %202 = sbr.rel (%p200) target = $region39
              $region36: #{discriminator_forward.6} parent=31 // loop_body
                %v206 = vld [vmem:[%s204] sm:$0xff]
                %207 = vst [vmem:[%s205] sm:$0xff] %v206
                %v208 = vld [vmem:[%s204 + $0x8] sm:$0xff]
                %209 = vst [vmem:[%s205 + $0x8] sm:$0xff] %v208
                %v210 = vld [vmem:[%s204 + $0x10] sm:$0xff]
                %211 = vst [vmem:[%s205 + $0x10] sm:$0xff] %v210
                %v212 = vld [vmem:[%s204 + $0x18] sm:$0xff]
                %213 = vst [vmem:[%s205 + $0x18] sm:$0xff] %v212
                %v214 = vld [vmem:[%s204 + $0x20] sm:$0xff]
                %215 = vst [vmem:[%s205 + $0x20] sm:$0xff] %v214
                %v216 = vld [vmem:[%s204 + $0x28] sm:$0xff]
                %217 = vst [vmem:[%s205 + $0x28] sm:$0xff] %v216
                %v218 = vld [vmem:[%s204 + $0x30] sm:$0xff]
                %219 = vst [vmem:[%s205 + $0x30] sm:$0xff] %v218
                %v220 = vld [vmem:[%s204 + $0x38] sm:$0xff]
                %221 = vst [vmem:[%s205 + $0x38] sm:$0xff] %v220
                %v222 = vld [vmem:[%s204 + $0x80] sm:$0xff]
                %223 = vst [vmem:[%s205 + $0x40] sm:$0xff] %v222
                %v224 = vld [vmem:[%s204 + $0x88] sm:$0xff]
                %225 = vst [vmem:[%s205 + $0x48] sm:$0xff] %v224
                %v226 = vld [vmem:[%s204 + $0x90] sm:$0xff]
                %227 = vst [vmem:[%s205 + $0x50] sm:$0xff] %v226
                %v228 = vld [vmem:[%s204 + $0x98] sm:$0xff]
                %229 = vst [vmem:[%s205 + $0x58] sm:$0xff] %v228
                %v230 = vld [vmem:[%s204 + $0xa0] sm:$0xff]
                %231 = vst [vmem:[%s205 + $0x60] sm:$0xff] %v230
                %v232 = vld [vmem:[%s204 + $0xa8] sm:$0xff]
                %233 = vst [vmem:[%s205 + $0x68] sm:$0xff] %v232
                %v234 = vld [vmem:[%s204 + $0xb0] sm:$0xff]
                %235 = vst [vmem:[%s205 + $0x70] sm:$0xff] %v234
                %v236 = vld [vmem:[%s204 + $0xb8] sm:$0xff]
                %237 = vst [vmem:[%s205 + $0x78] sm:$0xff] %v236
                %v238 = vld [vmem:[%s204 + $0x100] sm:$0xff]
                %239 = vst [vmem:[%s205 + $0x80] sm:$0xff] %v238
                %v240 = vld [vmem:[%s204 + $0x108] sm:$0xff]
                %241 = vst [vmem:[%s205 + $0x88] sm:$0xff] %v240
                %v242 = vld [vmem:[%s204 + $0x110] sm:$0xff]
                %243 = vst [vmem:[%s205 + $0x90] sm:$0xff] %v242
                %v244 = vld [vmem:[%s204 + $0x118] sm:$0xff]
                %245 = vst [vmem:[%s205 + $0x98] sm:$0xff] %v244
                %v246 = vld [vmem:[%s204 + $0x120] sm:$0xff]
                %247 = vst [vmem:[%s205 + $0xa0] sm:$0xff] %v246
                %v248 = vld [vmem:[%s204 + $0x128] sm:$0xff]
                %249 = vst [vmem:[%s205 + $0xa8] sm:$0xff] %v248
                %v250 = vld [vmem:[%s204 + $0x130] sm:$0xff]
                %251 = vst [vmem:[%s205 + $0xb0] sm:$0xff] %v250
                %v252 = vld [vmem:[%s204 + $0x138] sm:$0xff]
                %253 = vst [vmem:[%s205 + $0xb8] sm:$0xff] %v252
                %v254 = vld [vmem:[%s204 + $0x180] sm:$0xff]
                %255 = vst [vmem:[%s205 + $0xc0] sm:$0xff] %v254
                %v256 = vld [vmem:[%s204 + $0x188] sm:$0xff]
                %257 = vst [vmem:[%s205 + $0xc8] sm:$0xff] %v256
                %v258 = vld [vmem:[%s204 + $0x190] sm:$0xff]
                %259 = vst [vmem:[%s205 + $0xd0] sm:$0xff] %v258
                %v260 = vld [vmem:[%s204 + $0x198] sm:$0xff]
                %261 = vst [vmem:[%s205 + $0xd8] sm:$0xff] %v260
                %v262 = vld [vmem:[%s204 + $0x1a0] sm:$0xff]
                %263 = vst [vmem:[%s205 + $0xe0] sm:$0xff] %v262
                %v264 = vld [vmem:[%s204 + $0x1a8] sm:$0xff]
                %265 = vst [vmem:[%s205 + $0xe8] sm:$0xff] %v264
                %v266 = vld [vmem:[%s204 + $0x1b0] sm:$0xff]
                %267 = vst [vmem:[%s205 + $0xf0] sm:$0xff] %v266
                %v268 = vld [vmem:[%s204 + $0x1b8] sm:$0xff]
                %269 = vst [vmem:[%s205 + $0xf8] sm:$0xff] %v268
              $region37: #{discriminator_forward.6} parent=31 // loop_footer
                %s203 = sadd.s32 1, %s199
              $region38: #{discriminator_forward.6} parent=31 // loop_footer_branch
                %198 = sbr.rel target = $region34
              $region39: #{discriminator_forward.6} parent=31 // loop_exit
                _
            $region32: #{discriminator_forward.6} parent=27 // pred_fallthru
              _
            // Predicated region
            $region40: #{discriminator_forward.6} parent=27 // pred_check
              _
            $region41: #{discriminator_forward.6} parent=27 // pred_check_branch
              %271 = sbr.rel target = $region43
            $region42: #{discriminator_forward.6} parent=27 // pred_region
              _
            $region43: #{discriminator_forward.6} parent=27 // pred_fallthru
              _
          $region28: #{discriminator_forward.6} parent=23 // pred_fallthru
            _
          %272 = vnop
        $region24: #{discriminator_forward.6} parent=19 // pred_fallthru
          _
        // Predicated region
        $region44: #{discriminator_forward.6} parent=19 // pred_check
          %p273 = pneg %p78
        $region45: #{discriminator_forward.6} parent=19 // pred_check_branch
          %275 = sbr.rel (%p273) target = $region47
        $region46: #{discriminator_forward.6} parent=19 // pred_region
          %s276 = smul.u32 16, %s11
          %p277 = scmp.lt.s32.totalorder %s276, 31
          %s278 = scalar_select %p277, %s276, 31
          %s279 = scalar_lea.vmem %s2, %s278
          %s280 = smul.u32 16, %s11
        $region47: #{discriminator_forward.6} parent=19 // pred_fallthru
          _
        // Predicated region
        $region48: #{discriminator_forward.6} parent=19 // pred_check
          %p281 = pneg %p104
        $region49: #{discriminator_forward.6} parent=19 // pred_check_branch
          %283 = sbr.rel (%p281) target = $region51
        $region50: #{discriminator_forward.6} parent=19 // pred_region
          %s284 = smul.u32 16, %s11
          %p285 = scmp.lt.s32.totalorder %s284, 31
          %s286 = scalar_select %p285, %s284, 31
          %s287 = scalar_lea.vmem %s3, %s286
          %s288 = smul.u32 16, %s11
        $region51: #{discriminator_forward.6} parent=19 // pred_fallthru
          _
        // Predicated region
        $region52: #{discriminator_forward.6} parent=19 // pred_check
          %p289 = pneg %p130
        $region53: #{discriminator_forward.6} parent=19 // pred_check_branch
          %291 = sbr.rel (%p289) target = $region55
        $region54: #{discriminator_forward.6} parent=19 // pred_region
          %s292 = smul.u32 16, %s11
          %p293 = scmp.lt.s32.totalorder %s292, 31
          %s294 = scalar_select %p293, %s292, 31
          %s295 = scalar_lea.vmem %s4, %s294
          %s296 = smul.u32 16, %s11
        $region55: #{discriminator_forward.6} parent=19 // pred_fallthru
          _
      $region20: #{discriminator_forward.6} parent=5 // pred_fallthru
        _
      %p297 = scmp.le.s32.totalorder 1, %s11
      %p298 = scmp.lt.s32.totalorder %s11, 3
      %p299 = pnand %p297, %p298
      %p300 = pneg %p299
      // Predicated region
      $region56: #{discriminator_forward.6} parent=5 // pred_check
        _
      $region57: #{discriminator_forward.6} parent=5 // pred_check_branch
        %302 = sbr.rel (%p299) target = $region59
      $region58: #{discriminator_forward.6} parent=5 // pred_region
        %s303 = ssub.s32 %s11, 1
        %s304 = sand.u32 %s45, 1
        %s305 = sand.u32 %s45, 1
        %s306 = smul.addr %s305, 256
        %s307 = scalar_lea.vmem [#allocation2], %s306
        // Predicated region
        $region60: #{discriminator_forward.6} parent=58 // pred_check
          %p308 = pneg %p58
        $region61: #{discriminator_forward.6} parent=58 // pred_check_branch
          %310 = sbr.rel (%p308) target = $region63
        $region62: #{discriminator_forward.6} parent=58 // pred_region
          _
        $region63: #{discriminator_forward.6} parent=58 // pred_fallthru
          _
        %p311 = pneg %p32
        %p312 = pneg %p29
        %s313 = sand.u32 %s45, 1
        %s314 = sand.u32 %s45, 1
        %s315 = smul.addr %s314, 256
        %s316 = scalar_lea.vmem [#allocation2], %s315
        %p317 = pneg %p58
        %p318 = pneg %p55
        %s319 = smul.u32 16, %s16
        %p320 = scmp.lt.s32.totalorder %s319, 31
        %s321 = scalar_select %p320, %s319, 31
        %s322 = scalar_lea.vmem %s2, %s321
        %p323 = pneg %p84
        %p324 = pneg %p81
        %s325 = smul.u32 16, %s16
        %p326 = scmp.lt.s32.totalorder %s325, 31
        %s327 = scalar_select %p326, %s325, 31
        %s328 = scalar_lea.vmem %s3, %s327
        %p329 = pneg %p110
        %p330 = pneg %p107
        %s331 = smul.u32 16, %s16
        %p332 = scmp.lt.s32.totalorder %s331, 31
        %s333 = scalar_select %p332, %s331, 31
        %s334 = scalar_lea.vmem %s4, %s333
        %p335 = pneg %p136
        %p336 = pneg %p133
        %p337 = pneg %p162
        %p338 = pneg %p159
        %s339 = smul.u32 16, %s16
        %p340 = scmp.lt.s32.totalorder %s339, 31
        %s341 = scalar_select %p340, %s339, 31
        %s342 = scalar_lea.vmem %s5, %s341
        %s343 = smul.u32 16, %s16
        %s344 = smul.u32 16, %s16
        %p345 = scmp.lt.s32.totalorder %s344, 31
        %s346 = scalar_select %p345, %s344, 31
        %s347 = scalar_lea.vmem %s2, %s346
        %s348 = smul.u32 16, %s16
        %s349 = smul.u32 16, %s16
        %p350 = scmp.lt.s32.totalorder %s349, 31
        %s351 = scalar_select %p350, %s349, 31
        %s352 = scalar_lea.vmem %s3, %s351
        %s353 = smul.u32 16, %s16
        %s354 = smul.u32 16, %s16
        %p355 = scmp.lt.s32.totalorder %s354, 31
        %s356 = scalar_select %p355, %s354, 31
        %s357 = scalar_lea.vmem %s4, %s356
        %s358 = smul.u32 16, %s16
        %s359 = smul.u32 16, %s16
        %p360 = scmp.lt.s32.totalorder %s359, 31
        %s361 = scalar_select %p360, %s359, 31
        %s362 = scalar_lea.vmem %s5, %s361
        %s363 = smul.u32 16, %s16
        %v365 = vld [vmem:[%s0] sm:$0x1]
        %v366 = vld [vmem:[%s307] sm:$0xff]
        %v367 = vld [vmem:[%s307 + $0x8] sm:$0xff]
        %v368 = vld [vmem:[%s307 + $0x10] sm:$0xff]
        %v369 = vld [vmem:[%s307 + $0x18] sm:$0xff]
        %v370 = vld [vmem:[%s307 + $0x20] sm:$0xff]
        %v371 = vld [vmem:[%s307 + $0x28] sm:$0xff]
        %v372 = vld [vmem:[%s307 + $0x30] sm:$0xff]
        %v373 = vld [vmem:[%s307 + $0x38] sm:$0xff]
        %v374 = vld [vmem:[%s307 + $0x40] sm:$0xff]
        %v375 = vld [vmem:[%s307 + $0x48] sm:$0xff]
        %v376 = vld [vmem:[%s307 + $0x50] sm:$0xff]
        %v377 = vld [vmem:[%s307 + $0x58] sm:$0xff]
        %v378 = vld [vmem:[%s307 + $0x60] sm:$0xff]
        %v379 = vld [vmem:[%s307 + $0x68] sm:$0xff]
        %v380 = vld [vmem:[%s307 + $0x70] sm:$0xff]
        %v381 = vld [vmem:[%s307 + $0x78] sm:$0xff]
        %v382 = vld [vmem:[%s307 + $0x80] sm:$0xff]
        %v383 = vld [vmem:[%s307 + $0x88] sm:$0xff]
        %v384 = vld [vmem:[%s307 + $0x90] sm:$0xff]
        %v385 = vld [vmem:[%s307 + $0x98] sm:$0xff]
        %v386 = vld [vmem:[%s307 + $0xa0] sm:$0xff]
        %v387 = vld [vmem:[%s307 + $0xa8] sm:$0xff]
        %v388 = vld [vmem:[%s307 + $0xb0] sm:$0xff]
        %v389 = vld [vmem:[%s307 + $0xb8] sm:$0xff]
        %v390 = vld [vmem:[%s307 + $0xc0] sm:$0xff]
        %v391 = vld [vmem:[%s307 + $0xc8] sm:$0xff]
        %v392 = vld [vmem:[%s307 + $0xd0] sm:$0xff]
        %v393 = vld [vmem:[%s307 + $0xd8] sm:$0xff]
        %v394 = vld [vmem:[%s307 + $0xe0] sm:$0xff]
        %v395 = vld [vmem:[%s307 + $0xe8] sm:$0xff]
        %v396 = vld [vmem:[%s307 + $0xf0] sm:$0xff]
        %v397 = vld [vmem:[%s307 + $0xf8] sm:$0xff]
        %v398 = vld [vmem:[%s347] sm:$0xff]
        %v399 = vld [vmem:[%s347 + $0x8] sm:$0xff]
        %v402 = vlaneseq
        %v403 = vshrl.u32 %v402, 7
        %v404 = vsub.s32 0, %v403
        %v405 = vrot.slane %v398, %v404
        %v406 = vlaneseq
        %v407 = vshrl.u32 %v406, 7
        %v408 = vsub.s32 1, %v407
        %v409 = vrot.slane %v398, %v408
        %v410 = vlaneseq
        %v411 = vshrl.u32 %v410, 7
        %v412 = vsub.s32 2, %v411
        %v413 = vrot.slane %v398, %v412
        %v414 = vlaneseq
        %v415 = vshrl.u32 %v414, 7
        %v416 = vsub.s32 3, %v415
        %v417 = vrot.slane %v398, %v416
        %v418 = vlaneseq
        %v419 = vshrl.u32 %v418, 7
        %v420 = vsub.s32 4, %v419
        %v421 = vrot.slane %v398, %v420
        %v422 = vlaneseq
        %v423 = vshrl.u32 %v422, 7
        %v424 = vsub.s32 5, %v423
        %v425 = vrot.slane %v398, %v424
        %v426 = vlaneseq
        %v427 = vshrl.u32 %v426, 7
        %v428 = vsub.s32 6, %v427
        %v429 = vrot.slane %v398, %v428
        %v430 = vlaneseq
        %v431 = vshrl.u32 %v430, 7
        %v432 = vsub.s32 7, %v431
        %v433 = vrot.slane %v398, %v432
        %v434 = vlaneseq
        %v435 = vshrl.u32 %v434, 7
        %v436 = vsub.s32 0, %v435
        %v437 = vrot.slane %v399, %v436
        %v438 = vlaneseq
        %v439 = vshrl.u32 %v438, 7
        %v440 = vsub.s32 1, %v439
        %v441 = vrot.slane %v399, %v440
        %v442 = vlaneseq
        %v443 = vshrl.u32 %v442, 7
        %v444 = vsub.s32 2, %v443
        %v445 = vrot.slane %v399, %v444
        %v446 = vlaneseq
        %v447 = vshrl.u32 %v446, 7
        %v448 = vsub.s32 3, %v447
        %v449 = vrot.slane %v399, %v448
        %v450 = vlaneseq
        %v451 = vshrl.u32 %v450, 7
        %v452 = vsub.s32 4, %v451
        %v453 = vrot.slane %v399, %v452
        %v454 = vlaneseq
        %v455 = vshrl.u32 %v454, 7
        %v456 = vsub.s32 5, %v455
        %v457 = vrot.slane %v399, %v456
        %v458 = vlaneseq
        %v459 = vshrl.u32 %v458, 7
        %v460 = vsub.s32 6, %v459
        %v461 = vrot.slane %v399, %v460
        %v462 = vlaneseq
        %v463 = vshrl.u32 %v462, 7
        %v464 = vsub.s32 7, %v463
        %v465 = vrot.slane %v399, %v464
        %v514 = vunpack.c.l.b16 %v366
        %v515 = vunpack.c.h.b16 %v366
        %v516 = vunpack.c.l.b16 %v367
        %v517 = vunpack.c.h.b16 %v367
        %v518 = vunpack.c.l.b16 %v368
        %v519 = vunpack.c.h.b16 %v368
        %v520 = vunpack.c.l.b16 %v369
        %v521 = vunpack.c.h.b16 %v369
        %v522 = vunpack.c.l.b16 %v370
        %v523 = vunpack.c.h.b16 %v370
        %v524 = vunpack.c.l.b16 %v371
        %v525 = vunpack.c.h.b16 %v371
        %v526 = vunpack.c.l.b16 %v372
        %v527 = vunpack.c.h.b16 %v372
        %v528 = vunpack.c.l.b16 %v373
        %v529 = vunpack.c.h.b16 %v373
        %v530 = vunpack.c.l.b16 %v374
        %v531 = vunpack.c.h.b16 %v374
        %v532 = vunpack.c.l.b16 %v375
        %v533 = vunpack.c.h.b16 %v375
        %v534 = vunpack.c.l.b16 %v376
        %v535 = vunpack.c.h.b16 %v376
        %v536 = vunpack.c.l.b16 %v377
        %v537 = vunpack.c.h.b16 %v377
        %v538 = vunpack.c.l.b16 %v378
        %v539 = vunpack.c.h.b16 %v378
        %v540 = vunpack.c.l.b16 %v379
        %v541 = vunpack.c.h.b16 %v379
        %v542 = vunpack.c.l.b16 %v380
        %v543 = vunpack.c.h.b16 %v380
        %v544 = vunpack.c.l.b16 %v381
        %v545 = vunpack.c.h.b16 %v381
        %v546 = vunpack.c.l.b16 %v382
        %v547 = vunpack.c.h.b16 %v382
        %v548 = vunpack.c.l.b16 %v383
        %v549 = vunpack.c.h.b16 %v383
        %v550 = vunpack.c.l.b16 %v384
        %v551 = vunpack.c.h.b16 %v384
        %v552 = vunpack.c.l.b16 %v385
        %v553 = vunpack.c.h.b16 %v385
        %v554 = vunpack.c.l.b16 %v386
        %v555 = vunpack.c.h.b16 %v386
        %v556 = vunpack.c.l.b16 %v387
        %v557 = vunpack.c.h.b16 %v387
        %v558 = vunpack.c.l.b16 %v388
        %v559 = vunpack.c.h.b16 %v388
        %v560 = vunpack.c.l.b16 %v389
        %v561 = vunpack.c.h.b16 %v389
        %v562 = vunpack.c.l.b16 %v390
        %v563 = vunpack.c.h.b16 %v390
        %v564 = vunpack.c.l.b16 %v391
        %v565 = vunpack.c.h.b16 %v391
        %v566 = vunpack.c.l.b16 %v392
        %v567 = vunpack.c.h.b16 %v392
        %v568 = vunpack.c.l.b16 %v393
        %v569 = vunpack.c.h.b16 %v393
        %v570 = vunpack.c.l.b16 %v394
        %v571 = vunpack.c.h.b16 %v394
        %v572 = vunpack.c.l.b16 %v395
        %v573 = vunpack.c.h.b16 %v395
        %v574 = vunpack.c.l.b16 %v396
        %v575 = vunpack.c.h.b16 %v396
        %v576 = vunpack.c.l.b16 %v397
        %v577 = vunpack.c.h.b16 %v397
        %v578 = vpack.c.b16 %v530, %v514
        %v579 = vpack.c.b16 %v531, %v515
        %v580 = vpack.c.b16 %v532, %v516
        %v581 = vpack.c.b16 %v533, %v517
        %v582 = vpack.c.b16 %v534, %v518
        %v583 = vpack.c.b16 %v535, %v519
        %v584 = vpack.c.b16 %v536, %v520
        %v585 = vpack.c.b16 %v537, %v521
        %v586 = vpack.c.b16 %v538, %v522
        %v587 = vpack.c.b16 %v539, %v523
        %v588 = vpack.c.b16 %v540, %v524
        %v589 = vpack.c.b16 %v541, %v525
        %v590 = vpack.c.b16 %v542, %v526
        %v591 = vpack.c.b16 %v543, %v527
        %v592 = vpack.c.b16 %v544, %v528
        %v593 = vpack.c.b16 %v545, %v529
        %v594 = vpack.c.b16 %v562, %v546
        %v595 = vpack.c.b16 %v563, %v547
        %v596 = vpack.c.b16 %v564, %v548
        %v597 = vpack.c.b16 %v565, %v549
        %v598 = vpack.c.b16 %v566, %v550
        %v599 = vpack.c.b16 %v567, %v551
        %v600 = vpack.c.b16 %v568, %v552
        %v601 = vpack.c.b16 %v569, %v553
        %v602 = vpack.c.b16 %v570, %v554
        %v603 = vpack.c.b16 %v571, %v555
        %v604 = vpack.c.b16 %v572, %v556
        %v605 = vpack.c.b16 %v573, %v557
        %v606 = vpack.c.b16 %v574, %v558
        %v607 = vpack.c.b16 %v575, %v559
        %v608 = vpack.c.b16 %v576, %v560
        %v609 = vpack.c.b16 %v577, %v561
        %vm642 = vcmask 261120
        %v644 = vsel %vm642, %v365, 0
        %646 = vmatprep.subr.bf16.mxu0 %v579
        %647 = vmatpush1.bf16.msra.mxu0 %v578
        %648 = vmatprep.subr.bf16.mxu0 %v595
        %649 = vmatpush1.bf16.msra.mxu0 %v594
        %650 = vmatprep.subr.bf16.mxu0 0
        %651 = vmatpush1.bf16.msra.mxu0 0
        %652 = vmatprep.subr.bf16.mxu0 0
        %653 = vmatpush1.bf16.msra.mxu0 0
        %654 = vmatprep.subr.bf16.mxu0 0
        %655 = vmatpush1.bf16.msra.mxu0 0
        %656 = vmatprep.subr.bf16.mxu0 0
        %657 = vmatpush1.bf16.msra.mxu0 0
        %658 = vmatprep.subr.bf16.mxu0 0
        %659 = vmatpush1.bf16.msra.mxu0 0
        %660 = vmatprep.subr.bf16.mxu0 0
        %661 = vmatpush1.bf16.msra.mxu0 0
        %662 = vmatprep.subr.bf16.mxu0 0
        %663 = vmatpush1.bf16.msra.mxu0 0
        %664 = vmatprep.subr.bf16.mxu0 0
        %665 = vmatpush1.bf16.msra.mxu0 0
        %666 = vmatprep.subr.bf16.mxu0 0
        %667 = vmatpush1.bf16.msra.mxu0 0
        %668 = vmatprep.subr.bf16.mxu0 0
        %669 = vmatpush1.bf16.msra.mxu0 0
        %670 = vmatprep.subr.bf16.mxu0 0
        %671 = vmatpush1.bf16.msra.mxu0 0
        %672 = vmatprep.subr.bf16.mxu0 0
        %673 = vmatpush1.bf16.msra.mxu0 0
        %674 = vmatprep.subr.bf16.mxu0 0
        %675 = vmatpush1.bf16.msra.mxu0 0
        %676 = vmatprep.subr.bf16.mxu0 0
        %677 = vmatpush1.bf16.msra.mxu0 0
        %678 = vmatprep.mubr.bf16.mxu0 0
        %679 = vmatmul.mubr.bf16.gmra.mrb[0].mxu0 %v644
        %v680 = vpop.f32.mrb[0].mxu0
        %v681 = vadd.f32 %v405, %v680
        %v682 = vpop.f32.mrb[0].mxu0
        %v683 = vadd.f32 %v409, %v682
        %v684 = vpop.f32.mrb[0].mxu0
        %v685 = vpop.f32.mrb[0].mxu0
        %686 = vdwg.mxu0
        %687 = vmatprep.subr.bf16.mxu0 %v581
        %688 = vmatpush1.bf16.msra.mxu0 %v580
        %689 = vmatprep.subr.bf16.mxu0 %v597
        %690 = vmatpush1.bf16.msra.mxu0 %v596
        %691 = vmatprep.subr.bf16.mxu0 0
        %692 = vmatpush1.bf16.msra.mxu0 0
        %693 = vmatprep.subr.bf16.mxu0 0
        %694 = vmatpush1.bf16.msra.mxu0 0
        %695 = vmatprep.subr.bf16.mxu0 0
        %696 = vmatpush1.bf16.msra.mxu0 0
        %697 = vmatprep.subr.bf16.mxu0 0
        %698 = vmatpush1.bf16.msra.mxu0 0
        %699 = vmatprep.subr.bf16.mxu0 0
        %700 = vmatpush1.bf16.msra.mxu0 0
        %701 = vmatprep.subr.bf16.mxu0 0
        %702 = vmatpush1.bf16.msra.mxu0 0
        %703 = vmatprep.subr.bf16.mxu0 0
        %704 = vmatpush1.bf16.msra.mxu0 0
        %705 = vmatprep.subr.bf16.mxu0 0
        %706 = vmatpush1.bf16.msra.mxu0 0
        %707 = vmatprep.subr.bf16.mxu0 0
        %708 = vmatpush1.bf16.msra.mxu0 0
        %709 = vmatprep.subr.bf16.mxu0 0
        %710 = vmatpush1.bf16.msra.mxu0 0
        %711 = vmatprep.subr.bf16.mxu0 0
        %712 = vmatpush1.bf16.msra.mxu0 0
        %713 = vmatprep.subr.bf16.mxu0 0
        %714 = vmatpush1.bf16.msra.mxu0 0
        %715 = vmatprep.subr.bf16.mxu0 0
        %716 = vmatpush1.bf16.msra.mxu0 0
        %717 = vmatprep.subr.bf16.mxu0 0
        %718 = vmatpush1.bf16.msra.mxu0 0
        %719 = vmatprep.mubr.bf16.mxu0 0
        %720 = vmatmul.mubr.bf16.gmra.mrb[0].mxu0 %v644
        %v721 = vpop.f32.mrb[0].mxu0
        %v722 = vadd.f32 %v413, %v721
        %v723 = vpop.f32.mrb[0].mxu0
        %v724 = vadd.f32 %v417, %v723
        %v725 = vpop.f32.mrb[0].mxu0
        %v726 = vpop.f32.mrb[0].mxu0
        %727 = vdwg.mxu0
        %728 = vmatprep.subr.bf16.mxu0 %v583
        %729 = vmatpush1.bf16.msra.mxu0 %v582
        %730 = vmatprep.subr.bf16.mxu0 %v599
        %731 = vmatpush1.bf16.msra.mxu0 %v598
        %732 = vmatprep.subr.bf16.mxu0 0
        %733 = vmatpush1.bf16.msra.mxu0 0
        %734 = vmatprep.subr.bf16.mxu0 0
        %735 = vmatpush1.bf16.msra.mxu0 0
        %736 = vmatprep.subr.bf16.mxu0 0
        %737 = vmatpush1.bf16.msra.mxu0 0
        %738 = vmatprep.subr.bf16.mxu0 0
        %739 = vmatpush1.bf16.msra.mxu0 0
        %740 = vmatprep.subr.bf16.mxu0 0
        %741 = vmatpush1.bf16.msra.mxu0 0
        %742 = vmatprep.subr.bf16.mxu0 0
        %743 = vmatpush1.bf16.msra.mxu0 0
        %744 = vmatprep.subr.bf16.mxu0 0
        %745 = vmatpush1.bf16.msra.mxu0 0
        %746 = vmatprep.subr.bf16.mxu0 0
        %747 = vmatpush1.bf16.msra.mxu0 0
        %748 = vmatprep.subr.bf16.mxu0 0
        %749 = vmatpush1.bf16.msra.mxu0 0
        %750 = vmatprep.subr.bf16.mxu0 0
        %751 = vmatpush1.bf16.msra.mxu0 0
        %752 = vmatprep.subr.bf16.mxu0 0
        %753 = vmatpush1.bf16.msra.mxu0 0
        %754 = vmatprep.subr.bf16.mxu0 0
        %755 = vmatpush1.bf16.msra.mxu0 0
        %756 = vmatprep.subr.bf16.mxu0 0
        %757 = vmatpush1.bf16.msra.mxu0 0
        %758 = vmatprep.subr.bf16.mxu0 0
        %759 = vmatpush1.bf16.msra.mxu0 0
        %760 = vmatprep.mubr.bf16.mxu0 0
        %761 = vmatmul.mubr.bf16.gmra.mrb[0].mxu0 %v644
        %v762 = vpop.f32.mrb[0].mxu0
        %v763 = vadd.f32 %v421, %v762
        %v764 = vpop.f32.mrb[0].mxu0
        %v765 = vadd.f32 %v425, %v764
        %v766 = vpop.f32.mrb[0].mxu0
        %v767 = vpop.f32.mrb[0].mxu0
        %768 = vdwg.mxu0
        %769 = vmatprep.subr.bf16.mxu0 %v585
        %770 = vmatpush1.bf16.msra.mxu0 %v584
        %771 = vmatprep.subr.bf16.mxu0 %v601
        %772 = vmatpush1.bf16.msra.mxu0 %v600
        %773 = vmatprep.subr.bf16.mxu0 0
        %774 = vmatpush1.bf16.msra.mxu0 0
        %775 = vmatprep.subr.bf16.mxu0 0
        %776 = vmatpush1.bf16.msra.mxu0 0
        %777 = vmatprep.subr.bf16.mxu0 0
        %778 = vmatpush1.bf16.msra.mxu0 0
        %779 = vmatprep.subr.bf16.mxu0 0
        %780 = vmatpush1.bf16.msra.mxu0 0
        %781 = vmatprep.subr.bf16.mxu0 0
        %782 = vmatpush1.bf16.msra.mxu0 0
        %783 = vmatprep.subr.bf16.mxu0 0
        %784 = vmatpush1.bf16.msra.mxu0 0
        %785 = vmatprep.subr.bf16.mxu0 0
        %786 = vmatpush1.bf16.msra.mxu0 0
        %787 = vmatprep.subr.bf16.mxu0 0
        %788 = vmatpush1.bf16.msra.mxu0 0
        %789 = vmatprep.subr.bf16.mxu0 0
        %790 = vmatpush1.bf16.msra.mxu0 0
        %791 = vmatprep.subr.bf16.mxu0 0
        %792 = vmatpush1.bf16.msra.mxu0 0
        %793 = vmatprep.subr.bf16.mxu0 0
        %794 = vmatpush1.bf16.msra.mxu0 0
        %795 = vmatprep.subr.bf16.mxu0 0
        %796 = vmatpush1.bf16.msra.mxu0 0
        %797 = vmatprep.subr.bf16.mxu0 0
        %798 = vmatpush1.bf16.msra.mxu0 0
        %799 = vmatprep.subr.bf16.mxu0 0
        %800 = vmatpush1.bf16.msra.mxu0 0
        %801 = vmatprep.mubr.bf16.mxu0 0
        %802 = vmatmul.mubr.bf16.gmra.mrb[0].mxu0 %v644
        %v803 = vpop.f32.mrb[0].mxu0
        %v804 = vadd.f32 %v429, %v803
        %v805 = vpop.f32.mrb[0].mxu0
        %v806 = vadd.f32 %v433, %v805
        %v807 = vpop.f32.mrb[0].mxu0
        %v808 = vpop.f32.mrb[0].mxu0
        %809 = vdwg.mxu0
        %810 = vmatprep.subr.bf16.mxu0 %v587
        %811 = vmatpush1.bf16.msra.mxu0 %v586
        %812 = vmatprep.subr.bf16.mxu0 %v603
        %813 = vmatpush1.bf16.msra.mxu0 %v602
        %814 = vmatprep.subr.bf16.mxu0 0
        %815 = vmatpush1.bf16.msra.mxu0 0
        %816 = vmatprep.subr.bf16.mxu0 0
        %817 = vmatpush1.bf16.msra.mxu0 0
        %818 = vmatprep.subr.bf16.mxu0 0
        %819 = vmatpush1.bf16.msra.mxu0 0
        %820 = vmatprep.subr.bf16.mxu0 0
        %821 = vmatpush1.bf16.msra.mxu0 0
        %822 = vmatprep.subr.bf16.mxu0 0
        %823 = vmatpush1.bf16.msra.mxu0 0
        %824 = vmatprep.subr.bf16.mxu0 0
        %825 = vmatpush1.bf16.msra.mxu0 0
        %826 = vmatprep.subr.bf16.mxu0 0
        %827 = vmatpush1.bf16.msra.mxu0 0
        %828 = vmatprep.subr.bf16.mxu0 0
        %829 = vmatpush1.bf16.msra.mxu0 0
        %830 = vmatprep.subr.bf16.mxu0 0
        %831 = vmatpush1.bf16.msra.mxu0 0
        %832 = vmatprep.subr.bf16.mxu0 0
        %833 = vmatpush1.bf16.msra.mxu0 0
        %834 = vmatprep.subr.bf16.mxu0 0
        %835 = vmatpush1.bf16.msra.mxu0 0
        %836 = vmatprep.subr.bf16.mxu0 0
        %837 = vmatpush1.bf16.msra.mxu0 0
        %838 = vmatprep.subr.bf16.mxu0 0
        %839 = vmatpush1.bf16.msra.mxu0 0
        %840 = vmatprep.subr.bf16.mxu0 0
        %841 = vmatpush1.bf16.msra.mxu0 0
        %842 = vmatprep.mubr.bf16.mxu0 0
        %843 = vmatmul.mubr.bf16.gmra.mrb[0].mxu0 %v644
        %v844 = vpop.f32.mrb[0].mxu0
        %v845 = vadd.f32 %v437, %v844
        %v846 = vpop.f32.mrb[0].mxu0
        %v847 = vadd.f32 %v441, %v846
        %v848 = vpop.f32.mrb[0].mxu0
        %v849 = vpop.f32.mrb[0].mxu0
        %850 = vdwg.mxu0
        %851 = vmatprep.subr.bf16.mxu0 %v589
        %852 = vmatpush1.bf16.msra.mxu0 %v588
        %853 = vmatprep.subr.bf16.mxu0 %v605
        %854 = vmatpush1.bf16.msra.mxu0 %v604
        %855 = vmatprep.subr.bf16.mxu0 0
        %856 = vmatpush1.bf16.msra.mxu0 0
        %857 = vmatprep.subr.bf16.mxu0 0
        %858 = vmatpush1.bf16.msra.mxu0 0
        %859 = vmatprep.subr.bf16.mxu0 0
        %860 = vmatpush1.bf16.msra.mxu0 0
        %861 = vmatprep.subr.bf16.mxu0 0
        %862 = vmatpush1.bf16.msra.mxu0 0
        %863 = vmatprep.subr.bf16.mxu0 0
        %864 = vmatpush1.bf16.msra.mxu0 0
        %865 = vmatprep.subr.bf16.mxu0 0
        %866 = vmatpush1.bf16.msra.mxu0 0
        %867 = vmatprep.subr.bf16.mxu0 0
        %868 = vmatpush1.bf16.msra.mxu0 0
        %869 = vmatprep.subr.bf16.mxu0 0
        %870 = vmatpush1.bf16.msra.mxu0 0
        %871 = vmatprep.subr.bf16.mxu0 0
        %872 = vmatpush1.bf16.msra.mxu0 0
        %873 = vmatprep.subr.bf16.mxu0 0
        %874 = vmatpush1.bf16.msra.mxu0 0
        %875 = vmatprep.subr.bf16.mxu0 0
        %876 = vmatpush1.bf16.msra.mxu0 0
        %877 = vmatprep.subr.bf16.mxu0 0
        %878 = vmatpush1.bf16.msra.mxu0 0
        %879 = vmatprep.subr.bf16.mxu0 0
        %880 = vmatpush1.bf16.msra.mxu0 0
        %881 = vmatprep.subr.bf16.mxu0 0
        %882 = vmatpush1.bf16.msra.mxu0 0
        %883 = vmatprep.mubr.bf16.mxu0 0
        %884 = vmatmul.mubr.bf16.gmra.mrb[0].mxu0 %v644
        %v885 = vpop.f32.mrb[0].mxu0
        %v886 = vadd.f32 %v445, %v885
        %v887 = vpop.f32.mrb[0].mxu0
        %v888 = vadd.f32 %v449, %v887
        %v889 = vpop.f32.mrb[0].mxu0
        %v890 = vpop.f32.mrb[0].mxu0
        %891 = vdwg.mxu0
        %892 = vmatprep.subr.bf16.mxu0 %v591
        %893 = vmatpush1.bf16.msra.mxu0 %v590
        %894 = vmatprep.subr.bf16.mxu0 %v607
        %895 = vmatpush1.bf16.msra.mxu0 %v606
        %896 = vmatprep.subr.bf16.mxu0 0
        %897 = vmatpush1.bf16.msra.mxu0 0
        %898 = vmatprep.subr.bf16.mxu0 0
        %899 = vmatpush1.bf16.msra.mxu0 0
        %900 = vmatprep.subr.bf16.mxu0 0
        %901 = vmatpush1.bf16.msra.mxu0 0
        %902 = vmatprep.subr.bf16.mxu0 0
        %903 = vmatpush1.bf16.msra.mxu0 0
        %904 = vmatprep.subr.bf16.mxu0 0
        %905 = vmatpush1.bf16.msra.mxu0 0
        %906 = vmatprep.subr.bf16.mxu0 0
        %907 = vmatpush1.bf16.msra.mxu0 0
        %908 = vmatprep.subr.bf16.mxu0 0
        %909 = vmatpush1.bf16.msra.mxu0 0
        %910 = vmatprep.subr.bf16.mxu0 0
        %911 = vmatpush1.bf16.msra.mxu0 0
        %912 = vmatprep.subr.bf16.mxu0 0
        %913 = vmatpush1.bf16.msra.mxu0 0
        %914 = vmatprep.subr.bf16.mxu0 0
        %915 = vmatpush1.bf16.msra.mxu0 0
        %916 = vmatprep.subr.bf16.mxu0 0
        %917 = vmatpush1.bf16.msra.mxu0 0
        %918 = vmatprep.subr.bf16.mxu0 0
        %919 = vmatpush1.bf16.msra.mxu0 0
        %920 = vmatprep.subr.bf16.mxu0 0
        %921 = vmatpush1.bf16.msra.mxu0 0
        %922 = vmatprep.subr.bf16.mxu0 0
        %923 = vmatpush1.bf16.msra.mxu0 0
        %924 = vmatprep.mubr.bf16.mxu0 0
        %925 = vmatmul.mubr.bf16.gmra.mrb[0].mxu0 %v644
        %v926 = vpop.f32.mrb[0].mxu0
        %v927 = vadd.f32 %v453, %v926
        %v928 = vpop.f32.mrb[0].mxu0
        %v929 = vadd.f32 %v457, %v928
        %v930 = vpop.f32.mrb[0].mxu0
        %v931 = vpop.f32.mrb[0].mxu0
        %932 = vdwg.mxu0
        %933 = vmatprep.subr.bf16.mxu0 %v593
        %934 = vmatpush1.bf16.msra.mxu0 %v592
        %935 = vmatprep.subr.bf16.mxu0 %v609
        %936 = vmatpush1.bf16.msra.mxu0 %v608
        %937 = vmatprep.subr.bf16.mxu0 0
        %938 = vmatpush1.bf16.msra.mxu0 0
        %939 = vmatprep.subr.bf16.mxu0 0
        %940 = vmatpush1.bf16.msra.mxu0 0
        %941 = vmatprep.subr.bf16.mxu0 0
        %942 = vmatpush1.bf16.msra.mxu0 0
        %943 = vmatprep.subr.bf16.mxu0 0
        %944 = vmatpush1.bf16.msra.mxu0 0
        %945 = vmatprep.subr.bf16.mxu0 0
        %946 = vmatpush1.bf16.msra.mxu0 0
        %947 = vmatprep.subr.bf16.mxu0 0
        %948 = vmatpush1.bf16.msra.mxu0 0
        %949 = vmatprep.subr.bf16.mxu0 0
        %950 = vmatpush1.bf16.msra.mxu0 0
        %951 = vmatprep.subr.bf16.mxu0 0
        %952 = vmatpush1.bf16.msra.mxu0 0
        %953 = vmatprep.subr.bf16.mxu0 0
        %954 = vmatpush1.bf16.msra.mxu0 0
        %955 = vmatprep.subr.bf16.mxu0 0
        %956 = vmatpush1.bf16.msra.mxu0 0
        %957 = vmatprep.subr.bf16.mxu0 0
        %958 = vmatpush1.bf16.msra.mxu0 0
        %959 = vmatprep.subr.bf16.mxu0 0
        %960 = vmatpush1.bf16.msra.mxu0 0
        %961 = vmatprep.subr.bf16.mxu0 0
        %962 = vmatpush1.bf16.msra.mxu0 0
        %963 = vmatprep.subr.bf16.mxu0 0
        %964 = vmatpush1.bf16.msra.mxu0 0
        %965 = vmatprep.mubr.bf16.mxu0 0
        %966 = vmatmul.mubr.bf16.gmra.mrb[0].mxu0 %v644
        %v967 = vpop.f32.mrb[0].mxu0
        %v968 = vadd.f32 %v461, %v967
        %v969 = vpop.f32.mrb[0].mxu0
        %v970 = vadd.f32 %v465, %v969
        %v971 = vpop.f32.mrb[0].mxu0
        %v972 = vpop.f32.mrb[0].mxu0
        %973 = vdwg.mxu0
        %vm974 = vcmask 1041408
        %v975 = vsel %vm974, %v681, 0.0
        %v976 = vrot.slane %v975, 4
        %v977 = vadd.f32 %v975, %v976
        %v978 = vrot.slane %v977, 2
        %v979 = vadd.f32 %v977, %v978
        %v980 = vrot.slane %v979, 1
        %v981 = vadd.f32 %v979, %v980
        %v982 = vsel %vm974, %v683, 0.0
        %v983 = vrot.slane %v982, 4
        %v984 = vadd.f32 %v982, %v983
        %v985 = vrot.slane %v984, 2
        %v986 = vadd.f32 %v984, %v985
        %v987 = vrot.slane %v986, 1
        %v988 = vadd.f32 %v986, %v987
        %v989 = vsel %vm974, %v722, 0.0
        %v990 = vrot.slane %v989, 4
        %v991 = vadd.f32 %v989, %v990
        %v992 = vrot.slane %v991, 2
        %v993 = vadd.f32 %v991, %v992
        %v994 = vrot.slane %v993, 1
        %v995 = vadd.f32 %v993, %v994
        %v996 = vsel %vm974, %v724, 0.0
        %v997 = vrot.slane %v996, 4
        %v998 = vadd.f32 %v996, %v997
        %v999 = vrot.slane %v998, 2
        %v1000 = vadd.f32 %v998, %v999
        %v1001 = vrot.slane %v1000, 1
        %v1002 = vadd.f32 %v1000, %v1001
        %v1003 = vsel %vm974, %v763, 0.0
        %v1004 = vrot.slane %v1003, 4
        %v1005 = vadd.f32 %v1003, %v1004
        %v1006 = vrot.slane %v1005, 2
        %v1007 = vadd.f32 %v1005, %v1006
        %v1008 = vrot.slane %v1007, 1
        %v1009 = vadd.f32 %v1007, %v1008
        %v1010 = vsel %vm974, %v765, 0.0
        %v1011 = vrot.slane %v1010, 4
        %v1012 = vadd.f32 %v1010, %v1011
        %v1013 = vrot.slane %v1012, 2
        %v1014 = vadd.f32 %v1012, %v1013
        %v1015 = vrot.slane %v1014, 1
        %v1016 = vadd.f32 %v1014, %v1015
        %v1017 = vsel %vm974, %v804, 0.0
        %v1018 = vrot.slane %v1017, 4
        %v1019 = vadd.f32 %v1017, %v1018
        %v1020 = vrot.slane %v1019, 2
        %v1021 = vadd.f32 %v1019, %v1020
        %v1022 = vrot.slane %v1021, 1
        %v1023 = vadd.f32 %v1021, %v1022
        %v1024 = vsel %vm974, %v806, 0.0
        %v1025 = vrot.slane %v1024, 4
        %v1026 = vadd.f32 %v1024, %v1025
        %v1027 = vrot.slane %v1026, 2
        %v1028 = vadd.f32 %v1026, %v1027
        %v1029 = vrot.slane %v1028, 1
        %v1030 = vadd.f32 %v1028, %v1029
        %v1031 = vsel %vm974, %v845, 0.0
        %v1032 = vrot.slane %v1031, 4
        %v1033 = vadd.f32 %v1031, %v1032
        %v1034 = vrot.slane %v1033, 2
        %v1035 = vadd.f32 %v1033, %v1034
        %v1036 = vrot.slane %v1035, 1
        %v1037 = vadd.f32 %v1035, %v1036
        %v1038 = vsel %vm974, %v847, 0.0
        %v1039 = vrot.slane %v1038, 4
        %v1040 = vadd.f32 %v1038, %v1039
        %v1041 = vrot.slane %v1040, 2
        %v1042 = vadd.f32 %v1040, %v1041
        %v1043 = vrot.slane %v1042, 1
        %v1044 = vadd.f32 %v1042, %v1043
        %v1045 = vsel %vm974, %v886, 0.0
        %v1046 = vrot.slane %v1045, 4
        %v1047 = vadd.f32 %v1045, %v1046
        %v1048 = vrot.slane %v1047, 2
        %v1049 = vadd.f32 %v1047, %v1048
        %v1050 = vrot.slane %v1049, 1
        %v1051 = vadd.f32 %v1049, %v1050
        %v1052 = vsel %vm974, %v888, 0.0
        %v1053 = vrot.slane %v1052, 4
        %v1054 = vadd.f32 %v1052, %v1053
        %v1055 = vrot.slane %v1054, 2
        %v1056 = vadd.f32 %v1054, %v1055
        %v1057 = vrot.slane %v1056, 1
        %v1058 = vadd.f32 %v1056, %v1057
        %v1059 = vsel %vm974, %v927, 0.0
        %v1060 = vrot.slane %v1059, 4
        %v1061 = vadd.f32 %v1059, %v1060
        %v1062 = vrot.slane %v1061, 2
        %v1063 = vadd.f32 %v1061, %v1062
        %v1064 = vrot.slane %v1063, 1
        %v1065 = vadd.f32 %v1063, %v1064
        %v1066 = vsel %vm974, %v929, 0.0
        %v1067 = vrot.slane %v1066, 4
        %v1068 = vadd.f32 %v1066, %v1067
        %v1069 = vrot.slane %v1068, 2
        %v1070 = vadd.f32 %v1068, %v1069
        %v1071 = vrot.slane %v1070, 1
        %v1072 = vadd.f32 %v1070, %v1071
        %v1073 = vsel %vm974, %v968, 0.0
        %v1074 = vrot.slane %v1073, 4
        %v1075 = vadd.f32 %v1073, %v1074
        %v1076 = vrot.slane %v1075, 2
        %v1077 = vadd.f32 %v1075, %v1076
        %v1078 = vrot.slane %v1077, 1
        %v1079 = vadd.f32 %v1077, %v1078
        %v1080 = vsel %vm974, %v970, 0.0
        %v1081 = vrot.slane %v1080, 4
        %v1082 = vadd.f32 %v1080, %v1081
        %v1083 = vrot.slane %v1082, 2
        %v1084 = vadd.f32 %v1082, %v1083
        %v1085 = vrot.slane %v1084, 1
        %v1086 = vadd.f32 %v1084, %v1085
        %v1087 = vrcp.pop 2.0
        %v1088 = vmul.f32 %v981, %v1087
        %v1089 = vmul.f32 %v988, %v1087
        %v1090 = vmul.f32 %v995, %v1087
        %v1091 = vmul.f32 %v1002, %v1087
        %v1092 = vmul.f32 %v1009, %v1087
        %v1093 = vmul.f32 %v1016, %v1087
        %v1094 = vmul.f32 %v1023, %v1087
        %v1095 = vmul.f32 %v1030, %v1087
        %v1096 = vmul.f32 %v1037, %v1087
        %v1097 = vmul.f32 %v1044, %v1087
        %v1098 = vmul.f32 %v1051, %v1087
        %v1099 = vmul.f32 %v1058, %v1087
        %v1100 = vmul.f32 %v1065, %v1087
        %v1101 = vmul.f32 %v1072, %v1087
        %v1102 = vmul.f32 %v1079, %v1087
        %v1103 = vmul.f32 %v1086, %v1087
        %v1104 = vsub.f32 %v681, %v1088
        %v1105 = vsub.f32 %v683, %v1089
        %v1106 = vsub.f32 %v722, %v1090
        %v1107 = vsub.f32 %v724, %v1091
        %v1108 = vsub.f32 %v763, %v1092
        %v1109 = vsub.f32 %v765, %v1093
        %v1110 = vsub.f32 %v804, %v1094
        %v1111 = vsub.f32 %v806, %v1095
        %v1112 = vsub.f32 %v845, %v1096
        %v1113 = vsub.f32 %v847, %v1097
        %v1114 = vsub.f32 %v886, %v1098
        %v1115 = vsub.f32 %v888, %v1099
        %v1116 = vsub.f32 %v927, %v1100
        %v1117 = vsub.f32 %v929, %v1101
        %v1118 = vsub.f32 %v968, %v1102
        %v1119 = vsub.f32 %v970, %v1103
        %v1120 = vmul.f32 %v1104, %v1104
        %v1121 = vmul.f32 %v1105, %v1105
        %v1122 = vmul.f32 %v1106, %v1106
        %v1123 = vmul.f32 %v1107, %v1107
        %v1124 = vmul.f32 %v1108, %v1108
        %v1125 = vmul.f32 %v1109, %v1109
        %v1126 = vmul.f32 %v1110, %v1110
        %v1127 = vmul.f32 %v1111, %v1111
        %v1128 = vmul.f32 %v1112, %v1112
        %v1129 = vmul.f32 %v1113, %v1113
        %v1130 = vmul.f32 %v1114, %v1114
        %v1131 = vmul.f32 %v1115, %v1115
        %v1132 = vmul.f32 %v1116, %v1116
        %v1133 = vmul.f32 %v1117, %v1117
        %v1134 = vmul.f32 %v1118, %v1118
        %v1135 = vmul.f32 %v1119, %v1119
        %v1136 = vsel %vm974, %v1120, 0.0
        %v1137 = vrot.slane %v1136, 4
        %v1138 = vadd.f32 %v1136, %v1137
        %v1139 = vrot.slane %v1138, 2
        %v1140 = vadd.f32 %v1138, %v1139
        %v1141 = vrot.slane %v1140, 1
        %v1142 = vadd.f32 %v1140, %v1141
        %v1143 = vsel %vm974, %v1121, 0.0
        %v1144 = vrot.slane %v1143, 4
        %v1145 = vadd.f32 %v1143, %v1144
        %v1146 = vrot.slane %v1145, 2
        %v1147 = vadd.f32 %v1145, %v1146
        %v1148 = vrot.slane %v1147, 1
        %v1149 = vadd.f32 %v1147, %v1148
        %v1150 = vsel %vm974, %v1122, 0.0
        %v1151 = vrot.slane %v1150, 4
        %v1152 = vadd.f32 %v1150, %v1151
        %v1153 = vrot.slane %v1152, 2
        %v1154 = vadd.f32 %v1152, %v1153
        %v1155 = vrot.slane %v1154, 1
        %v1156 = vadd.f32 %v1154, %v1155
        %v1157 = vsel %vm974, %v1123, 0.0
        %v1158 = vrot.slane %v1157, 4
        %v1159 = vadd.f32 %v1157, %v1158
        %v1160 = vrot.slane %v1159, 2
        %v1161 = vadd.f32 %v1159, %v1160
        %v1162 = vrot.slane %v1161, 1
        %v1163 = vadd.f32 %v1161, %v1162
        %v1164 = vsel %vm974, %v1124, 0.0
        %v1165 = vrot.slane %v1164, 4
        %v1166 = vadd.f32 %v1164, %v1165
        %v1167 = vrot.slane %v1166, 2
        %v1168 = vadd.f32 %v1166, %v1167
        %v1169 = vrot.slane %v1168, 1
        %v1170 = vadd.f32 %v1168, %v1169
        %v1171 = vsel %vm974, %v1125, 0.0
        %v1172 = vrot.slane %v1171, 4
        %v1173 = vadd.f32 %v1171, %v1172
        %v1174 = vrot.slane %v1173, 2
        %v1175 = vadd.f32 %v1173, %v1174
        %v1176 = vrot.slane %v1175, 1
        %v1177 = vadd.f32 %v1175, %v1176
        %v1178 = vsel %vm974, %v1126, 0.0
        %v1179 = vrot.slane %v1178, 4
        %v1180 = vadd.f32 %v1178, %v1179
        %v1181 = vrot.slane %v1180, 2
        %v1182 = vadd.f32 %v1180, %v1181
        %v1183 = vrot.slane %v1182, 1
        %v1184 = vadd.f32 %v1182, %v1183
        %v1185 = vsel %vm974, %v1127, 0.0
        %v1186 = vrot.slane %v1185, 4
        %v1187 = vadd.f32 %v1185, %v1186
        %v1188 = vrot.slane %v1187, 2
        %v1189 = vadd.f32 %v1187, %v1188
        %v1190 = vrot.slane %v1189, 1
        %v1191 = vadd.f32 %v1189, %v1190
        %v1192 = vsel %vm974, %v1128, 0.0
        %v1193 = vrot.slane %v1192, 4
        %v1194 = vadd.f32 %v1192, %v1193
        %v1195 = vrot.slane %v1194, 2
        %v1196 = vadd.f32 %v1194, %v1195
        %v1197 = vrot.slane %v1196, 1
        %v1198 = vadd.f32 %v1196, %v1197
        %v1199 = vsel %vm974, %v1129, 0.0
        %v1200 = vrot.slane %v1199, 4
        %v1201 = vadd.f32 %v1199, %v1200
        %v1202 = vrot.slane %v1201, 2
        %v1203 = vadd.f32 %v1201, %v1202
        %v1204 = vrot.slane %v1203, 1
        %v1205 = vadd.f32 %v1203, %v1204
        %v1206 = vsel %vm974, %v1130, 0.0
        %v1207 = vrot.slane %v1206, 4
        %v1208 = vadd.f32 %v1206, %v1207
        %v1209 = vrot.slane %v1208, 2
        %v1210 = vadd.f32 %v1208, %v1209
        %v1211 = vrot.slane %v1210, 1
        %v1212 = vadd.f32 %v1210, %v1211
        %v1213 = vsel %vm974, %v1131, 0.0
        %v1214 = vrot.slane %v1213, 4
        %v1215 = vadd.f32 %v1213, %v1214
        %v1216 = vrot.slane %v1215, 2
        %v1217 = vadd.f32 %v1215, %v1216
        %v1218 = vrot.slane %v1217, 1
        %v1219 = vadd.f32 %v1217, %v1218
        %v1220 = vsel %vm974, %v1132, 0.0
        %v1221 = vrot.slane %v1220, 4
        %v1222 = vadd.f32 %v1220, %v1221
        %v1223 = vrot.slane %v1222, 2
        %v1224 = vadd.f32 %v1222, %v1223
        %v1225 = vrot.slane %v1224, 1
        %v1226 = vadd.f32 %v1224, %v1225
        %v1227 = vsel %vm974, %v1133, 0.0
        %v1228 = vrot.slane %v1227, 4
        %v1229 = vadd.f32 %v1227, %v1228
        %v1230 = vrot.slane %v1229, 2
        %v1231 = vadd.f32 %v1229, %v1230
        %v1232 = vrot.slane %v1231, 1
        %v1233 = vadd.f32 %v1231, %v1232
        %v1234 = vsel %vm974, %v1134, 0.0
        %v1235 = vrot.slane %v1234, 4
        %v1236 = vadd.f32 %v1234, %v1235
        %v1237 = vrot.slane %v1236, 2
        %v1238 = vadd.f32 %v1236, %v1237
        %v1239 = vrot.slane %v1238, 1
        %v1240 = vadd.f32 %v1238, %v1239
        %v1241 = vsel %vm974, %v1135, 0.0
        %v1242 = vrot.slane %v1241, 4
        %v1243 = vadd.f32 %v1241, %v1242
        %v1244 = vrot.slane %v1243, 2
        %v1245 = vadd.f32 %v1243, %v1244
        %v1246 = vrot.slane %v1245, 1
        %v1247 = vadd.f32 %v1245, %v1246
        %v1248 = vmul.f32 %v1142, %v1087
        %v1249 = vmul.f32 %v1149, %v1087
        %v1250 = vmul.f32 %v1156, %v1087
        %v1251 = vmul.f32 %v1163, %v1087
        %v1252 = vmul.f32 %v1170, %v1087
        %v1253 = vmul.f32 %v1177, %v1087
        %v1254 = vmul.f32 %v1184, %v1087
        %v1255 = vmul.f32 %v1191, %v1087
        %v1256 = vmul.f32 %v1198, %v1087
        %v1257 = vmul.f32 %v1205, %v1087
        %v1258 = vmul.f32 %v1212, %v1087
        %v1259 = vmul.f32 %v1219, %v1087
        %v1260 = vmul.f32 %v1226, %v1087
        %v1261 = vmul.f32 %v1233, %v1087
        %v1262 = vmul.f32 %v1240, %v1087
        %v1263 = vmul.f32 %v1247, %v1087
        %v1264 = vadd.f32 %v1248, 1e-05
        %v1265 = vadd.f32 %v1249, 1e-05
        %v1266 = vadd.f32 %v1250, 1e-05
        %v1267 = vadd.f32 %v1251, 1e-05
        %v1268 = vadd.f32 %v1252, 1e-05
        %v1269 = vadd.f32 %v1253, 1e-05
        %v1270 = vadd.f32 %v1254, 1e-05
        %v1271 = vadd.f32 %v1255, 1e-05
        %v1272 = vadd.f32 %v1256, 1e-05
        %v1273 = vadd.f32 %v1257, 1e-05
        %v1274 = vadd.f32 %v1258, 1e-05
        %v1275 = vadd.f32 %v1259, 1e-05
        %v1276 = vadd.f32 %v1260, 1e-05
        %v1277 = vadd.f32 %v1261, 1e-05
        %v1278 = vadd.f32 %v1262, 1e-05
        %v1279 = vadd.f32 %v1263, 1e-05
        %v1280 = vrsqrt.pop %v1264
        %v1281 = vrsqrt.pop %v1265
        %v1282 = vrsqrt.pop %v1266
        %v1283 = vrsqrt.pop %v1267
        %v1284 = vrsqrt.pop %v1268
        %v1285 = vrsqrt.pop %v1269
        %v1286 = vrsqrt.pop %v1270
        %v1287 = vrsqrt.pop %v1271
        %v1288 = vrsqrt.pop %v1272
        %v1289 = vrsqrt.pop %v1273
        %v1290 = vrsqrt.pop %v1274
        %v1291 = vrsqrt.pop %v1275
        %v1292 = vrsqrt.pop %v1276
        %v1293 = vrsqrt.pop %v1277
        %v1294 = vrsqrt.pop %v1278
        %v1295 = vrsqrt.pop %v1279
        %v1296 = vmul.f32 %v1104, %v1280
        %v1297 = vmul.f32 %v1105, %v1281
        %v1298 = vmul.f32 %v1106, %v1282
        %v1299 = vmul.f32 %v1107, %v1283
        %v1300 = vmul.f32 %v1108, %v1284
        %v1301 = vmul.f32 %v1109, %v1285
        %v1302 = vmul.f32 %v1110, %v1286
        %v1303 = vmul.f32 %v1111, %v1287
        %v1304 = vmul.f32 %v1112, %v1288
        %v1305 = vmul.f32 %v1113, %v1289
        %v1306 = vmul.f32 %v1114, %v1290
        %v1307 = vmul.f32 %v1115, %v1291
        %v1308 = vmul.f32 %v1116, %v1292
        %v1309 = vmul.f32 %v1117, %v1293
        %v1310 = vmul.f32 %v1118, %v1294
        %v1311 = vmul.f32 %v1119, %v1295
        %v1312 = vld [vmem:[%s352] sm:$0xff]
        %v1313 = vld [vmem:[%s352 + $0x8] sm:$0xff]
        %v1316 = vlaneseq
        %v1317 = vshrl.u32 %v1316, 7
        %v1318 = vsub.s32 0, %v1317
        %v1319 = vrot.slane %v1312, %v1318
        %v1320 = vlaneseq
        %v1321 = vshrl.u32 %v1320, 7
        %v1322 = vsub.s32 1, %v1321
        %v1323 = vrot.slane %v1312, %v1322
        %v1324 = vlaneseq
        %v1325 = vshrl.u32 %v1324, 7
        %v1326 = vsub.s32 2, %v1325
        %v1327 = vrot.slane %v1312, %v1326
        %v1328 = vlaneseq
        %v1329 = vshrl.u32 %v1328, 7
        %v1330 = vsub.s32 3, %v1329
        %v1331 = vrot.slane %v1312, %v1330
        %v1332 = vlaneseq
        %v1333 = vshrl.u32 %v1332, 7
        %v1334 = vsub.s32 4, %v1333
        %v1335 = vrot.slane %v1312, %v1334
        %v1336 = vlaneseq
        %v1337 = vshrl.u32 %v1336, 7
        %v1338 = vsub.s32 5, %v1337
        %v1339 = vrot.slane %v1312, %v1338
        %v1340 = vlaneseq
        %v1341 = vshrl.u32 %v1340, 7
        %v1342 = vsub.s32 6, %v1341
        %v1343 = vrot.slane %v1312, %v1342
        %v1344 = vlaneseq
        %v1345 = vshrl.u32 %v1344, 7
        %v1346 = vsub.s32 7, %v1345
        %v1347 = vrot.slane %v1312, %v1346
        %v1348 = vlaneseq
        %v1349 = vshrl.u32 %v1348, 7
        %v1350 = vsub.s32 0, %v1349
        %v1351 = vrot.slane %v1313, %v1350
        %v1352 = vlaneseq
        %v1353 = vshrl.u32 %v1352, 7
        %v1354 = vsub.s32 1, %v1353
        %v1355 = vrot.slane %v1313, %v1354
        %v1356 = vlaneseq
        %v1357 = vshrl.u32 %v1356, 7
        %v1358 = vsub.s32 2, %v1357
        %v1359 = vrot.slane %v1313, %v1358
        %v1360 = vlaneseq
        %v1361 = vshrl.u32 %v1360, 7
        %v1362 = vsub.s32 3, %v1361
        %v1363 = vrot.slane %v1313, %v1362
        %v1364 = vlaneseq
        %v1365 = vshrl.u32 %v1364, 7
        %v1366 = vsub.s32 4, %v1365
        %v1367 = vrot.slane %v1313, %v1366
        %v1368 = vlaneseq
        %v1369 = vshrl.u32 %v1368, 7
        %v1370 = vsub.s32 5, %v1369
        %v1371 = vrot.slane %v1313, %v1370
        %v1372 = vlaneseq
        %v1373 = vshrl.u32 %v1372, 7
        %v1374 = vsub.s32 6, %v1373
        %v1375 = vrot.slane %v1313, %v1374
        %v1376 = vlaneseq
        %v1377 = vshrl.u32 %v1376, 7
        %v1378 = vsub.s32 7, %v1377
        %v1379 = vrot.slane %v1313, %v1378
        %v1396 = vmul.f32 %v1296, %v1319
        %v1397 = vmul.f32 %v1297, %v1323
        %v1398 = vmul.f32 %v1298, %v1327
        %v1399 = vmul.f32 %v1299, %v1331
        %v1400 = vmul.f32 %v1300, %v1335
        %v1401 = vmul.f32 %v1301, %v1339
        %v1402 = vmul.f32 %v1302, %v1343
        %v1403 = vmul.f32 %v1303, %v1347
        %v1404 = vmul.f32 %v1304, %v1351
        %v1405 = vmul.f32 %v1305, %v1355
        %v1406 = vmul.f32 %v1306, %v1359
        %v1407 = vmul.f32 %v1307, %v1363
        %v1408 = vmul.f32 %v1308, %v1367
        %v1409 = vmul.f32 %v1309, %v1371
        %v1410 = vmul.f32 %v1310, %v1375
        %v1411 = vmul.f32 %v1311, %v1379
        %v1412 = vld [vmem:[%s357] sm:$0xff]
        %v1413 = vld [vmem:[%s357 + $0x8] sm:$0xff]
        %v1416 = vlaneseq
        %v1417 = vshrl.u32 %v1416, 7
        %v1418 = vsub.s32 0, %v1417
        %v1419 = vrot.slane %v1412, %v1418
        %v1420 = vlaneseq
        %v1421 = vshrl.u32 %v1420, 7
        %v1422 = vsub.s32 1, %v1421
        %v1423 = vrot.slane %v1412, %v1422
        %v1424 = vlaneseq
        %v1425 = vshrl.u32 %v1424, 7
        %v1426 = vsub.s32 2, %v1425
        %v1427 = vrot.slane %v1412, %v1426
        %v1428 = vlaneseq
        %v1429 = vshrl.u32 %v1428, 7
        %v1430 = vsub.s32 3, %v1429
        %v1431 = vrot.slane %v1412, %v1430
        %v1432 = vlaneseq
        %v1433 = vshrl.u32 %v1432, 7
        %v1434 = vsub.s32 4, %v1433
        %v1435 = vrot.slane %v1412, %v1434
        %v1436 = vlaneseq
        %v1437 = vshrl.u32 %v1436, 7
        %v1438 = vsub.s32 5, %v1437
        %v1439 = vrot.slane %v1412, %v1438
        %v1440 = vlaneseq
        %v1441 = vshrl.u32 %v1440, 7
        %v1442 = vsub.s32 6, %v1441
        %v1443 = vrot.slane %v1412, %v1442
        %v1444 = vlaneseq
        %v1445 = vshrl.u32 %v1444, 7
        %v1446 = vsub.s32 7, %v1445
        %v1447 = vrot.slane %v1412, %v1446
        %v1448 = vlaneseq
        %v1449 = vshrl.u32 %v1448, 7
        %v1450 = vsub.s32 0, %v1449
        %v1451 = vrot.slane %v1413, %v1450
        %v1452 = vlaneseq
        %v1453 = vshrl.u32 %v1452, 7
        %v1454 = vsub.s32 1, %v1453
        %v1455 = vrot.slane %v1413, %v1454
        %v1456 = vlaneseq
        %v1457 = vshrl.u32 %v1456, 7
        %v1458 = vsub.s32 2, %v1457
        %v1459 = vrot.slane %v1413, %v1458
        %v1460 = vlaneseq
        %v1461 = vshrl.u32 %v1460, 7
        %v1462 = vsub.s32 3, %v1461
        %v1463 = vrot.slane %v1413, %v1462
        %v1464 = vlaneseq
        %v1465 = vshrl.u32 %v1464, 7
        %v1466 = vsub.s32 4, %v1465
        %v1467 = vrot.slane %v1413, %v1466
        %v1468 = vlaneseq
        %v1469 = vshrl.u32 %v1468, 7
        %v1470 = vsub.s32 5, %v1469
        %v1471 = vrot.slane %v1413, %v1470
        %v1472 = vlaneseq
        %v1473 = vshrl.u32 %v1472, 7
        %v1474 = vsub.s32 6, %v1473
        %v1475 = vrot.slane %v1413, %v1474
        %v1476 = vlaneseq
        %v1477 = vshrl.u32 %v1476, 7
        %v1478 = vsub.s32 7, %v1477
        %v1479 = vrot.slane %v1413, %v1478
        %v1496 = vadd.f32 %v1396, %v1419
        %v1497 = vadd.f32 %v1397, %v1423
        %v1498 = vadd.f32 %v1398, %v1427
        %v1499 = vadd.f32 %v1399, %v1431
        %v1500 = vadd.f32 %v1400, %v1435
        %v1501 = vadd.f32 %v1401, %v1439
        %v1502 = vadd.f32 %v1402, %v1443
        %v1503 = vadd.f32 %v1403, %v1447
        %v1504 = vadd.f32 %v1404, %v1451
        %v1505 = vadd.f32 %v1405, %v1455
        %v1506 = vadd.f32 %v1406, %v1459
        %v1507 = vadd.f32 %v1407, %v1463
        %v1508 = vadd.f32 %v1408, %v1467
        %v1509 = vadd.f32 %v1409, %v1471
        %v1510 = vadd.f32 %v1410, %v1475
        %v1511 = vadd.f32 %v1411, %v1479
        %v1512 = vmax.f32 %v1496, 0.0
        %v1513 = vmax.f32 %v1497, 0.0
        %v1514 = vmax.f32 %v1498, 0.0
        %v1515 = vmax.f32 %v1499, 0.0
        %v1516 = vmax.f32 %v1500, 0.0
        %v1517 = vmax.f32 %v1501, 0.0
        %v1518 = vmax.f32 %v1502, 0.0
        %v1519 = vmax.f32 %v1503, 0.0
        %v1520 = vmax.f32 %v1504, 0.0
        %v1521 = vmax.f32 %v1505, 0.0
        %v1522 = vmax.f32 %v1506, 0.0
        %v1523 = vmax.f32 %v1507, 0.0
        %v1524 = vmax.f32 %v1508, 0.0
        %v1525 = vmax.f32 %v1509, 0.0
        %v1526 = vmax.f32 %v1510, 0.0
        %v1527 = vmax.f32 %v1511, 0.0
        %v1528 = vpack.c.bf16 %v1512, %v1512
        %v1529 = vpack.c.bf16 %v1513, %v1513
        %v1530 = vpack.c.bf16 %v1514, %v1514
        %v1531 = vpack.c.bf16 %v1515, %v1515
        %v1532 = vpack.c.bf16 %v1516, %v1516
        %v1533 = vpack.c.bf16 %v1517, %v1517
        %v1534 = vpack.c.bf16 %v1518, %v1518
        %v1535 = vpack.c.bf16 %v1519, %v1519
        %v1536 = vpack.c.bf16 %v1520, %v1520
        %v1537 = vpack.c.bf16 %v1521, %v1521
        %v1538 = vpack.c.bf16 %v1522, %v1522
        %v1539 = vpack.c.bf16 %v1523, %v1523
        %v1540 = vpack.c.bf16 %v1524, %v1524
        %v1541 = vpack.c.bf16 %v1525, %v1525
        %v1542 = vpack.c.bf16 %v1526, %v1526
        %v1543 = vpack.c.bf16 %v1527, %v1527
        %v1560 = vcombine.low %v1528, %v1529
        %v1561 = vcombine.low %v1530, %v1531
        %v1562 = vcombine.low %v1532, %v1533
        %v1563 = vcombine.low %v1534, %v1535
        %v1565 = vunpack.c.l.s4 1966171168
        %v1566 = vunpack.c.0.s8 %v1565
        %v1567 = vlaneseq
        %v1568 = vshrl.u32 %v1567, 7
        %v1569 = vsub.s32 %v1566, %v1568
        %v1570 = vrot.slane %v1560, %v1569
        %v1572 = vunpack.c.l.s4 1966171168
        %v1573 = vunpack.c.0.s8 %v1572
        %v1574 = vlaneseq
        %v1575 = vshrl.u32 %v1574, 7
        %v1576 = vsub.s32 %v1573, %v1575
        %v1577 = vrot.slane %v1561, %v1576
        %v1579 = vunpack.c.l.s4 1966171168
        %v1580 = vunpack.c.0.s8 %v1579
        %v1581 = vlaneseq
        %v1582 = vshrl.u32 %v1581, 7
        %v1583 = vsub.s32 %v1580, %v1582
        %v1584 = vrot.slane %v1562, %v1583
        %v1586 = vunpack.c.l.s4 1966171168
        %v1587 = vunpack.c.0.s8 %v1586
        %v1588 = vlaneseq
        %v1589 = vshrl.u32 %v1588, 7
        %v1590 = vsub.s32 %v1587, %v1589
        %v1591 = vrot.slane %v1563, %v1590
        %v1592 = vcombine.low %v1570, %v1577
        %v1593 = vcombine.low %v1584, %v1591
        %v1595 = vunpack.c.l.s4 1966171168
        %v1596 = vunpack.c.0.s8 %v1595
        %v1597 = vlaneseq
        %v1598 = vshrl.u32 %v1597, 7
        %v1599 = vsub.s32 %v1596, %v1598
        %v1600 = vrot.slane %v1592, %v1599
        %v1602 = vunpack.c.l.s4 1966171168
        %v1603 = vunpack.c.0.s8 %v1602
        %v1604 = vlaneseq
        %v1605 = vshrl.u32 %v1604, 7
        %v1606 = vsub.s32 %v1603, %v1605
        %v1607 = vrot.slane %v1593, %v1606
        %v1608 = vcombine.low %v1600, %v1607
        %v1609 = vcombine.low %v1536, %v1537
        %v1610 = vcombine.low %v1538, %v1539
        %v1611 = vcombine.low %v1540, %v1541
        %v1612 = vcombine.low %v1542, %v1543
        %v1614 = vunpack.c.l.s4 1966171168
        %v1615 = vunpack.c.0.s8 %v1614
        %v1616 = vlaneseq
        %v1617 = vshrl.u32 %v1616, 7
        %v1618 = vsub.s32 %v1615, %v1617
        %v1619 = vrot.slane %v1609, %v1618
        %v1621 = vunpack.c.l.s4 1966171168
        %v1622 = vunpack.c.0.s8 %v1621
        %v1623 = vlaneseq
        %v1624 = vshrl.u32 %v1623, 7
        %v1625 = vsub.s32 %v1622, %v1624
        %v1626 = vrot.slane %v1610, %v1625
        %v1628 = vunpack.c.l.s4 1966171168
        %v1629 = vunpack.c.0.s8 %v1628
        %v1630 = vlaneseq
        %v1631 = vshrl.u32 %v1630, 7
        %v1632 = vsub.s32 %v1629, %v1631
        %v1633 = vrot.slane %v1611, %v1632
        %v1635 = vunpack.c.l.s4 1966171168
        %v1636 = vunpack.c.0.s8 %v1635
        %v1637 = vlaneseq
        %v1638 = vshrl.u32 %v1637, 7
        %v1639 = vsub.s32 %v1636, %v1638
        %v1640 = vrot.slane %v1612, %v1639
        %v1641 = vcombine.low %v1619, %v1626
        %v1642 = vcombine.low %v1633, %v1640
        %v1644 = vunpack.c.l.s4 1966171168
        %v1645 = vunpack.c.0.s8 %v1644
        %v1646 = vlaneseq
        %v1647 = vshrl.u32 %v1646, 7
        %v1648 = vsub.s32 %v1645, %v1647
        %v1649 = vrot.slane %v1641, %v1648
        %v1651 = vunpack.c.l.s4 1966171168
        %v1652 = vunpack.c.0.s8 %v1651
        %v1653 = vlaneseq
        %v1654 = vshrl.u32 %v1653, 7
        %v1655 = vsub.s32 %v1652, %v1654
        %v1656 = vrot.slane %v1642, %v1655
        %v1657 = vcombine.low %v1649, %v1656
        %1660 = vst [vmem:[%s362] sm:$0xff] %v1608
        %1661 = vst [vmem:[%s362 + $0x8] sm:$0xff] %v1657
        %s1662 = smul.u32 16, %s16
        %p1663 = scmp.lt.s32.totalorder %s1662, 31
        %s1664 = scalar_select %p1663, %s1662, 31
        %s1665 = scalar_lea.vmem %s5, %s1664
        // Predicated region
        $region64: #{discriminator_forward.6} parent=58 // pred_check
          %p1666 = pneg %p159
        $region65: #{discriminator_forward.6} parent=58 // pred_check_branch
          %1668 = sbr.rel (%p1666) target = $region67
        $region66: #{discriminator_forward.6} parent=58 // pred_region
          %s1669 = smul.u32 16, %s16
        $region67: #{discriminator_forward.6} parent=58 // pred_fallthru
          _
      $region59: #{discriminator_forward.6} parent=5 // pred_fallthru
        _
      %p1670 = scmp.le.s32.totalorder 2, %s11
      // Predicated region
      $region68: #{discriminator_forward.6} parent=5 // pred_check
        %p1671 = pneg %p1670
      $region69: #{discriminator_forward.6} parent=5 // pred_check_branch
        %1673 = sbr.rel (%p1671) target = $region71
      $region70: #{discriminator_forward.6} parent=5 // pred_region
        %s1674 = ssub.s32 %s11, 2
        // Predicated region
        $region72: #{discriminator_forward.6} parent=70 // pred_check
          %p1675 = pneg %p165
        $region73: #{discriminator_forward.6} parent=70 // pred_check_branch
          %1677 = sbr.rel (%p1675) target = $region75
        $region74: #{discriminator_forward.6} parent=70 // pred_region
          %s1678 = smul.u32 16, %s17
          %p1679 = scmp.lt.s32.totalorder %s1678, 31
          %s1680 = scalar_select %p1679, %s1678, 31
          %s1681 = scalar_lea.vmem %s5, %s1680
        $region75: #{discriminator_forward.6} parent=70 // pred_fallthru
          _
      $region71: #{discriminator_forward.6} parent=5 // pred_fallthru
        _
    $region6: #{discriminator_forward.6} parent=1 // loop_footer
      %s15 = sadd.s32 1, %s11
    $region7: #{discriminator_forward.6} parent=1 // loop_footer_branch
      %10 = sbr.rel target = $region3
    $region8: #{discriminator_forward.6} parent=1 // loop_exit
      _

// kernel: discriminator_forward.5
$region0: #{discriminator_forward.5}
  #allocation0 [shape = 'u32[]', space=smem, size = 0x4, offset = 0x4, fixed_abs, tag = 'smem constant byte address 0x4 - core index']
  #allocation1 [shape = 'u32[144,128]{1,0:T(1,128)}', space=vmem, size = 0x12000, scoped, tag = 'internal scratch']
  #allocation2 [shape = 'f32[2,32]{1,0:T(2,128)}', space=vmem, size = 0x400, scoped, tag = 'scratch operand']
  %s0 = inlined_call_operand.vmem [shape: bf16[2,4096], index: 0, kind: input, shape index: {}]
  %s1 = inlined_call_operand.vmem [shape: bf16[4096,32], index: 1, kind: input, shape index: {}]
  %s2 = inlined_call_operand.vmem [shape: f32[1,32], index: 2, kind: input, shape index: {}]
  %s3 = inlined_call_operand.vmem [shape: f32[1,32], index: 3, kind: input, shape index: {}]
  %s4 = inlined_call_operand.vmem [shape: f32[1,32], index: 4, kind: input, shape index: {}]
  %s5 = inlined_call_operand.vmem [shape: bf16[2,32], index: 5, kind: output, shape index: {}]
  %s6 = sld [smem:[#allocation0]]
  $region38: #{discriminator_forward.5} parent=0
    _
  %s8 = ssub.s32 1, %s6
  %s9 = scalar_select 0, %s8, %s6
  // Predicated region
  $region2: #{discriminator_forward.5} parent=0 // pred_check
    _
  $region3: #{discriminator_forward.5} parent=0 // pred_check_branch
    %11 = sbr.rel (0) target = $region5
  $region4: #{discriminator_forward.5} parent=0 // pred_region
    _
  $region5: #{discriminator_forward.5} parent=0 // pred_fallthru
    _
  // Predicated region
  $region6: #{discriminator_forward.5} parent=0 // pred_check
    _
  $region7: #{discriminator_forward.5} parent=0 // pred_check_branch
    %13 = sbr.rel (0) target = $region9
  $region8: #{discriminator_forward.5} parent=0 // pred_region
    _
  $region9: #{discriminator_forward.5} parent=0 // pred_fallthru
    _
  // Predicated region
  $region10: #{discriminator_forward.5} parent=0 // pred_check
    _
  $region11: #{discriminator_forward.5} parent=0 // pred_check_branch
    %15 = sbr.rel (0) target = $region13
  $region12: #{discriminator_forward.5} parent=0 // pred_region
    _
  $region13: #{discriminator_forward.5} parent=0 // pred_fallthru
    _
  // Predicated region
  $region14: #{discriminator_forward.5} parent=0 // pred_check
    _
  $region15: #{discriminator_forward.5} parent=0 // pred_check_branch
    %17 = sbr.rel (0) target = $region17
  $region16: #{discriminator_forward.5} parent=0 // pred_region
    _
  $region17: #{discriminator_forward.5} parent=0 // pred_fallthru
    _
  // Predicated region
  $region18: #{discriminator_forward.5} parent=0 // pred_check
    _
  $region19: #{discriminator_forward.5} parent=0 // pred_check_branch
    %19 = sbr.rel (0) target = $region21
  $region20: #{discriminator_forward.5} parent=0 // pred_region
    _
  $region21: #{discriminator_forward.5} parent=0 // pred_fallthru
    _
  %p21 = scmp.eq.s32.totalorder 0, 0
  // Predicated region
  $region22: #{discriminator_forward.5} parent=0 // pred_check
    %p22 = pneg %p21
  $region23: #{discriminator_forward.5} parent=0 // pred_check_branch
    %24 = sbr.rel (%p22) target = $region25
  $region24: #{discriminator_forward.5} parent=0 // pred_region
    %vm25 = vcmask 254976
    %26 = vst.msk [vmem:[#allocation2] sm:$0x3] %vm25, 0.0
  $region25: #{discriminator_forward.5} parent=0 // pred_fallthru
    _
  %v27 = vld [vmem:[#allocation2] sm:$0x3]
  %v28 = vld [vmem:[%s0] sm:$0xff]
  %v29 = vld [vmem:[%s0 + $0x8] sm:$0xff]
  %v30 = vld [vmem:[%s0 + $0x10] sm:$0xff]
  %v31 = vld [vmem:[%s0 + $0x18] sm:$0xff]
  %v32 = vld [vmem:[%s1] sm:$0xf]
  %v33 = vld [vmem:[%s1 + $0x4] sm:$0xf]
  %v34 = vld [vmem:[%s1 + $0x8] sm:$0xf]
  %v35 = vld [vmem:[%s1 + $0xc] sm:$0xf]
  %v36 = vld [vmem:[%s1 + $0x10] sm:$0xf]
  %v37 = vld [vmem:[%s1 + $0x14] sm:$0xf]
  %v38 = vld [vmem:[%s1 + $0x18] sm:$0xf]
  %v39 = vld [vmem:[%s1 + $0x1c] sm:$0xf]
  %v40 = vld [vmem:[%s1 + $0x20] sm:$0xf]
  %v41 = vld [vmem:[%s1 + $0x24] sm:$0xf]
  %v42 = vld [vmem:[%s1 + $0x28] sm:$0xf]
  %v43 = vld [vmem:[%s1 + $0x2c] sm:$0xf]
  %v44 = vld [vmem:[%s1 + $0x30] sm:$0xf]
  %v45 = vld [vmem:[%s1 + $0x34] sm:$0xf]
  %v46 = vld [vmem:[%s1 + $0x38] sm:$0xf]
  %v47 = vld [vmem:[%s1 + $0x3c] sm:$0xf]
  %v48 = vld [vmem:[%s1 + $0x40] sm:$0xf]
  %v49 = vld [vmem:[%s1 + $0x44] sm:$0xf]
  %v50 = vld [vmem:[%s1 + $0x48] sm:$0xf]
  %v51 = vld [vmem:[%s1 + $0x4c] sm:$0xf]
  %v52 = vld [vmem:[%s1 + $0x50] sm:$0xf]
  %v53 = vld [vmem:[%s1 + $0x54] sm:$0xf]
  %v54 = vld [vmem:[%s1 + $0x58] sm:$0xf]
  %v55 = vld [vmem:[%s1 + $0x5c] sm:$0xf]
  %v56 = vld [vmem:[%s1 + $0x60] sm:$0xf]
  %v57 = vld [vmem:[%s1 + $0x64] sm:$0xf]
  %v58 = vld [vmem:[%s1 + $0x68] sm:$0xf]
  %v59 = vld [vmem:[%s1 + $0x6c] sm:$0xf]
  %v60 = vld [vmem:[%s1 + $0x70] sm:$0xf]
  %v61 = vld [vmem:[%s1 + $0x74] sm:$0xf]
  %v62 = vld [vmem:[%s1 + $0x78] sm:$0xf]
  %v63 = vld [vmem:[%s1 + $0x7c] sm:$0xf]
  %v64 = vld [vmem:[%s1 + $0x80] sm:$0xf]
  %v65 = vld [vmem:[%s1 + $0x84] sm:$0xf]
  %v66 = vld [vmem:[%s1 + $0x88] sm:$0xf]
  %v67 = vld [vmem:[%s1 + $0x8c] sm:$0xf]
  %v68 = vld [vmem:[%s1 + $0x90] sm:$0xf]
  %v69 = vld [vmem:[%s1 + $0x94] sm:$0xf]
  %v70 = vld [vmem:[%s1 + $0x98] sm:$0xf]
  %v71 = vld [vmem:[%s1 + $0x9c] sm:$0xf]
  %v72 = vld [vmem:[%s1 + $0xa0] sm:$0xf]
  %v73 = vld [vmem:[%s1 + $0xa4] sm:$0xf]
  %v74 = vld [vmem:[%s1 + $0xa8] sm:$0xf]
  %v75 = vld [vmem:[%s1 + $0xac] sm:$0xf]
  %v76 = vld [vmem:[%s1 + $0xb0] sm:$0xf]
  %v77 = vld [vmem:[%s1 + $0xb4] sm:$0xf]
  %v78 = vld [vmem:[%s1 + $0xb8] sm:$0xf]
  %v79 = vld [vmem:[%s1 + $0xbc] sm:$0xf]
  %v80 = vld [vmem:[%s1 + $0xc0] sm:$0xf]
  %v81 = vld [vmem:[%s1 + $0xc4] sm:$0xf]
  %v82 = vld [vmem:[%s1 + $0xc8] sm:$0xf]
  %v83 = vld [vmem:[%s1 + $0xcc] sm:$0xf]
  %v84 = vld [vmem:[%s1 + $0xd0] sm:$0xf]
  %v85 = vld [vmem:[%s1 + $0xd4] sm:$0xf]
  %v86 = vld [vmem:[%s1 + $0xd8] sm:$0xf]
  %v87 = vld [vmem:[%s1 + $0xdc] sm:$0xf]
  %v88 = vld [vmem:[%s1 + $0xe0] sm:$0xf]
  %v89 = vld [vmem:[%s1 + $0xe4] sm:$0xf]
  %v90 = vld [vmem:[%s1 + $0xe8] sm:$0xf]
  %v91 = vld [vmem:[%s1 + $0xec] sm:$0xf]
  %v92 = vld [vmem:[%s1 + $0xf0] sm:$0xf]
  %v93 = vld [vmem:[%s1 + $0xf4] sm:$0xf]
  %v94 = vld [vmem:[%s1 + $0xf8] sm:$0xf]
  %v95 = vld [vmem:[%s1 + $0xfc] sm:$0xf]
  %v96 = vld [vmem:[%s1 + $0x100] sm:$0xf]
  %v97 = vld [vmem:[%s1 + $0x104] sm:$0xf]
  %v98 = vld [vmem:[%s1 + $0x108] sm:$0xf]
  %v99 = vld [vmem:[%s1 + $0x10c] sm:$0xf]
  %v100 = vld [vmem:[%s1 + $0x110] sm:$0xf]
  %v101 = vld [vmem:[%s1 + $0x114] sm:$0xf]
  %v102 = vld [vmem:[%s1 + $0x118] sm:$0xf]
  %v103 = vld [vmem:[%s1 + $0x11c] sm:$0xf]
  %v104 = vld [vmem:[%s1 + $0x120] sm:$0xf]
  %v105 = vld [vmem:[%s1 + $0x124] sm:$0xf]
  %v106 = vld [vmem:[%s1 + $0x128] sm:$0xf]
  %v107 = vld [vmem:[%s1 + $0x12c] sm:$0xf]
  %v108 = vld [vmem:[%s1 + $0x130] sm:$0xf]
  %v109 = vld [vmem:[%s1 + $0x134] sm:$0xf]
  %v110 = vld [vmem:[%s1 + $0x138] sm:$0xf]
  %v111 = vld [vmem:[%s1 + $0x13c] sm:$0xf]
  %v112 = vld [vmem:[%s1 + $0x140] sm:$0xf]
  %v113 = vld [vmem:[%s1 + $0x144] sm:$0xf]
  %v114 = vld [vmem:[%s1 + $0x148] sm:$0xf]
  %v115 = vld [vmem:[%s1 + $0x14c] sm:$0xf]
  %v116 = vld [vmem:[%s1 + $0x150] sm:$0xf]
  %v117 = vld [vmem:[%s1 + $0x154] sm:$0xf]
  %v118 = vld [vmem:[%s1 + $0x158] sm:$0xf]
  %v119 = vld [vmem:[%s1 + $0x15c] sm:$0xf]
  %v120 = vld [vmem:[%s1 + $0x160] sm:$0xf]
  %v121 = vld [vmem:[%s1 + $0x164] sm:$0xf]
  %v122 = vld [vmem:[%s1 + $0x168] sm:$0xf]
  %v123 = vld [vmem:[%s1 + $0x16c] sm:$0xf]
  %v124 = vld [vmem:[%s1 + $0x170] sm:$0xf]
  %v125 = vld [vmem:[%s1 + $0x174] sm:$0xf]
  %v126 = vld [vmem:[%s1 + $0x178] sm:$0xf]
  %v127 = vld [vmem:[%s1 + $0x17c] sm:$0xf]
  %v128 = vld [vmem:[%s1 + $0x180] sm:$0xf]
  %v129 = vld [vmem:[%s1 + $0x184] sm:$0xf]
  %v130 = vld [vmem:[%s1 + $0x188] sm:$0xf]
  %v131 = vld [vmem:[%s1 + $0x18c] sm:$0xf]
  %v132 = vld [vmem:[%s1 + $0x190] sm:$0xf]
  %v133 = vld [vmem:[%s1 + $0x194] sm:$0xf]
  %v134 = vld [vmem:[%s1 + $0x198] sm:$0xf]
  %v135 = vld [vmem:[%s1 + $0x19c] sm:$0xf]
  %v136 = vld [vmem:[%s1 + $0x1a0] sm:$0xf]
  %v137 = vld [vmem:[%s1 + $0x1a4] sm:$0xf]
  %v138 = vld [vmem:[%s1 + $0x1a8] sm:$0xf]
  %v139 = vld [vmem:[%s1 + $0x1ac] sm:$0xf]
  %v140 = vld [vmem:[%s1 + $0x1b0] sm:$0xf]
  %v141 = vld [vmem:[%s1 + $0x1b4] sm:$0xf]
  %v142 = vld [vmem:[%s1 + $0x1b8] sm:$0xf]
  %v143 = vld [vmem:[%s1 + $0x1bc] sm:$0xf]
  %v144 = vld [vmem:[%s1 + $0x1c0] sm:$0xf]
  %v145 = vld [vmem:[%s1 + $0x1c4] sm:$0xf]
  %v146 = vld [vmem:[%s1 + $0x1c8] sm:$0xf]
  %v147 = vld [vmem:[%s1 + $0x1cc] sm:$0xf]
  %v148 = vld [vmem:[%s1 + $0x1d0] sm:$0xf]
  %v149 = vld [vmem:[%s1 + $0x1d4] sm:$0xf]
  %v150 = vld [vmem:[%s1 + $0x1d8] sm:$0xf]
  %v151 = vld [vmem:[%s1 + $0x1dc] sm:$0xf]
  %v152 = vld [vmem:[%s1 + $0x1e0] sm:$0xf]
  %v153 = vld [vmem:[%s1 + $0x1e4] sm:$0xf]
  %v154 = vld [vmem:[%s1 + $0x1e8] sm:$0xf]
  %v155 = vld [vmem:[%s1 + $0x1ec] sm:$0xf]
  %v156 = vld [vmem:[%s1 + $0x1f0] sm:$0xf]
  %v157 = vld [vmem:[%s1 + $0x1f4] sm:$0xf]
  %v158 = vld [vmem:[%s1 + $0x1f8] sm:$0xf]
  %v159 = vld [vmem:[%s1 + $0x1fc] sm:$0xf]
  %v160 = vld [vmem:[%s1 + $0x200] sm:$0xf]
  %v161 = vld [vmem:[%s1 + $0x204] sm:$0xf]
  %v162 = vld [vmem:[%s1 + $0x208] sm:$0xf]
  %v163 = vld [vmem:[%s1 + $0x20c] sm:$0xf]
  %v164 = vld [vmem:[%s1 + $0x210] sm:$0xf]
  %v165 = vld [vmem:[%s1 + $0x214] sm:$0xf]
  %v166 = vld [vmem:[%s1 + $0x218] sm:$0xf]
  %v167 = vld [vmem:[%s1 + $0x21c] sm:$0xf]
  %v168 = vld [vmem:[%s1 + $0x220] sm:$0xf]
  %v169 = vld [vmem:[%s1 + $0x224] sm:$0xf]
  %v170 = vld [vmem:[%s1 + $0x228] sm:$0xf]
  %v171 = vld [vmem:[%s1 + $0x22c] sm:$0xf]
  %v172 = vld [vmem:[%s1 + $0x230] sm:$0xf]
  %v173 = vld [vmem:[%s1 + $0x234] sm:$0xf]
  %v174 = vld [vmem:[%s1 + $0x238] sm:$0xf]
  %v175 = vld [vmem:[%s1 + $0x23c] sm:$0xf]
  %v176 = vld [vmem:[%s1 + $0x240] sm:$0xf]
  %v177 = vld [vmem:[%s1 + $0x244] sm:$0xf]
  %v178 = vld [vmem:[%s1 + $0x248] sm:$0xf]
  %v179 = vld [vmem:[%s1 + $0x24c] sm:$0xf]
  %v180 = vld [vmem:[%s1 + $0x250] sm:$0xf]
  %v181 = vld [vmem:[%s1 + $0x254] sm:$0xf]
  %v182 = vld [vmem:[%s1 + $0x258] sm:$0xf]
  %v183 = vld [vmem:[%s1 + $0x25c] sm:$0xf]
  %v184 = vld [vmem:[%s1 + $0x260] sm:$0xf]
  %v185 = vld [vmem:[%s1 + $0x264] sm:$0xf]
  %v186 = vld [vmem:[%s1 + $0x268] sm:$0xf]
  %v187 = vld [vmem:[%s1 + $0x26c] sm:$0xf]
  %v188 = vld [vmem:[%s1 + $0x270] sm:$0xf]
  %v189 = vld [vmem:[%s1 + $0x274] sm:$0xf]
  %v190 = vld [vmem:[%s1 + $0x278] sm:$0xf]
  %v191 = vld [vmem:[%s1 + $0x27c] sm:$0xf]
  %v192 = vld [vmem:[%s1 + $0x280] sm:$0xf]
  %v193 = vld [vmem:[%s1 + $0x284] sm:$0xf]
  %v194 = vld [vmem:[%s1 + $0x288] sm:$0xf]
  %v195 = vld [vmem:[%s1 + $0x28c] sm:$0xf]
  %v196 = vld [vmem:[%s1 + $0x290] sm:$0xf]
  %v197 = vld [vmem:[%s1 + $0x294] sm:$0xf]
  %v198 = vld [vmem:[%s1 + $0x298] sm:$0xf]
  %v199 = vld [vmem:[%s1 + $0x29c] sm:$0xf]
  %v200 = vld [vmem:[%s1 + $0x2a0] sm:$0xf]
  %v201 = vld [vmem:[%s1 + $0x2a4] sm:$0xf]
  %v202 = vld [vmem:[%s1 + $0x2a8] sm:$0xf]
  %v203 = vld [vmem:[%s1 + $0x2ac] sm:$0xf]
  %v204 = vld [vmem:[%s1 + $0x2b0] sm:$0xf]
  %v205 = vld [vmem:[%s1 + $0x2b4] sm:$0xf]
  %v206 = vld [vmem:[%s1 + $0x2b8] sm:$0xf]
  %v207 = vld [vmem:[%s1 + $0x2bc] sm:$0xf]
  %v208 = vld [vmem:[%s1 + $0x2c0] sm:$0xf]
  %v209 = vld [vmem:[%s1 + $0x2c4] sm:$0xf]
  %v210 = vld [vmem:[%s1 + $0x2c8] sm:$0xf]
  %v211 = vld [vmem:[%s1 + $0x2cc] sm:$0xf]
  %v212 = vld [vmem:[%s1 + $0x2d0] sm:$0xf]
  %v213 = vld [vmem:[%s1 + $0x2d4] sm:$0xf]
  %v214 = vld [vmem:[%s1 + $0x2d8] sm:$0xf]
  %v215 = vld [vmem:[%s1 + $0x2dc] sm:$0xf]
  %v216 = vld [vmem:[%s1 + $0x2e0] sm:$0xf]
  %v217 = vld [vmem:[%s1 + $0x2e4] sm:$0xf]
  %v218 = vld [vmem:[%s1 + $0x2e8] sm:$0xf]
  %v219 = vld [vmem:[%s1 + $0x2ec] sm:$0xf]
  %v220 = vld [vmem:[%s1 + $0x2f0] sm:$0xf]
  %v221 = vld [vmem:[%s1 + $0x2f4] sm:$0xf]
  %v222 = vld [vmem:[%s1 + $0x2f8] sm:$0xf]
  %v223 = vld [vmem:[%s1 + $0x2fc] sm:$0xf]
  %v224 = vld [vmem:[%s1 + $0x300] sm:$0xf]
  %v225 = vld [vmem:[%s1 + $0x304] sm:$0xf]
  %v226 = vld [vmem:[%s1 + $0x308] sm:$0xf]
  %v227 = vld [vmem:[%s1 + $0x30c] sm:$0xf]
  %v228 = vld [vmem:[%s1 + $0x310] sm:$0xf]
  %v229 = vld [vmem:[%s1 + $0x314] sm:$0xf]
  %v230 = vld [vmem:[%s1 + $0x318] sm:$0xf]
  %v231 = vld [vmem:[%s1 + $0x31c] sm:$0xf]
  %v232 = vld [vmem:[%s1 + $0x320] sm:$0xf]
  %v233 = vld [vmem:[%s1 + $0x324] sm:$0xf]
  %v234 = vld [vmem:[%s1 + $0x328] sm:$0xf]
  %v235 = vld [vmem:[%s1 + $0x32c] sm:$0xf]
  %v236 = vld [vmem:[%s1 + $0x330] sm:$0xf]
  %v237 = vld [vmem:[%s1 + $0x334] sm:$0xf]
  %v238 = vld [vmem:[%s1 + $0x338] sm:$0xf]
  %v239 = vld [vmem:[%s1 + $0x33c] sm:$0xf]
  %v240 = vld [vmem:[%s1 + $0x340] sm:$0xf]
  %v241 = vld [vmem:[%s1 + $0x344] sm:$0xf]
  %v242 = vld [vmem:[%s1 + $0x348] sm:$0xf]
  %v243 = vld [vmem:[%s1 + $0x34c] sm:$0xf]
  %v244 = vld [vmem:[%s1 + $0x350] sm:$0xf]
  %v245 = vld [vmem:[%s1 + $0x354] sm:$0xf]
  %v246 = vld [vmem:[%s1 + $0x358] sm:$0xf]
  %v247 = vld [vmem:[%s1 + $0x35c] sm:$0xf]
  %v248 = vld [vmem:[%s1 + $0x360] sm:$0xf]
  %v249 = vld [vmem:[%s1 + $0x364] sm:$0xf]
  %v250 = vld [vmem:[%s1 + $0x368] sm:$0xf]
  %v251 = vld [vmem:[%s1 + $0x36c] sm:$0xf]
  %v252 = vld [vmem:[%s1 + $0x370] sm:$0xf]
  %v253 = vld [vmem:[%s1 + $0x374] sm:$0xf]
  %v254 = vld [vmem:[%s1 + $0x378] sm:$0xf]
  %v255 = vld [vmem:[%s1 + $0x37c] sm:$0xf]
  %v256 = vld [vmem:[%s1 + $0x380] sm:$0xf]
  %v257 = vld [vmem:[%s1 + $0x384] sm:$0xf]
  %v258 = vld [vmem:[%s1 + $0x388] sm:$0xf]
  %v259 = vld [vmem:[%s1 + $0x38c] sm:$0xf]
  %v260 = vld [vmem:[%s1 + $0x390] sm:$0xf]
  %v261 = vld [vmem:[%s1 + $0x394] sm:$0xf]
  %v262 = vld [vmem:[%s1 + $0x398] sm:$0xf]
  %v263 = vld [vmem:[%s1 + $0x39c] sm:$0xf]
  %v264 = vld [vmem:[%s1 + $0x3a0] sm:$0xf]
  %v265 = vld [vmem:[%s1 + $0x3a4] sm:$0xf]
  %v266 = vld [vmem:[%s1 + $0x3a8] sm:$0xf]
  %v267 = vld [vmem:[%s1 + $0x3ac] sm:$0xf]
  %v268 = vld [vmem:[%s1 + $0x3b0] sm:$0xf]
  %v269 = vld [vmem:[%s1 + $0x3b4] sm:$0xf]
  %v270 = vld [vmem:[%s1 + $0x3b8] sm:$0xf]
  %v271 = vld [vmem:[%s1 + $0x3bc] sm:$0xf]
  %v272 = vld [vmem:[%s1 + $0x3c0] sm:$0xf]
  %v273 = vld [vmem:[%s1 + $0x3c4] sm:$0xf]
  %v274 = vld [vmem:[%s1 + $0x3c8] sm:$0xf]
  %v275 = vld [vmem:[%s1 + $0x3cc] sm:$0xf]
  %v276 = vld [vmem:[%s1 + $0x3d0] sm:$0xf]
  %v277 = vld [vmem:[%s1 + $0x3d4] sm:$0xf]
  %v278 = vld [vmem:[%s1 + $0x3d8] sm:$0xf]
  %v279 = vld [vmem:[%s1 + $0x3dc] sm:$0xf]
  %v280 = vld [vmem:[%s1 + $0x3e0] sm:$0xf]
  %v281 = vld [vmem:[%s1 + $0x3e4] sm:$0xf]
  %v282 = vld [vmem:[%s1 + $0x3e8] sm:$0xf]
  %v283 = vld [vmem:[%s1 + $0x3ec] sm:$0xf]
  %v284 = vld [vmem:[%s1 + $0x3f0] sm:$0xf]
  %v285 = vld [vmem:[%s1 + $0x3f4] sm:$0xf]
  %v286 = vld [vmem:[%s1 + $0x3f8] sm:$0xf]
  %v287 = vld [vmem:[%s1 + $0x3fc] sm:$0xf]
  %v288 = vld [vmem:[%s1 + $0x400] sm:$0xf]
  %v289 = vld [vmem:[%s1 + $0x404] sm:$0xf]
  %v290 = vld [vmem:[%s1 + $0x408] sm:$0xf]
  %v291 = vld [vmem:[%s1 + $0x40c] sm:$0xf]
  %v292 = vld [vmem:[%s1 + $0x410] sm:$0xf]
  %v293 = vld [vmem:[%s1 + $0x414] sm:$0xf]
  %v294 = vld [vmem:[%s1 + $0x418] sm:$0xf]
  %v295 = vld [vmem:[%s1 + $0x41c] sm:$0xf]
  %v296 = vld [vmem:[%s1 + $0x420] sm:$0xf]
  %v297 = vld [vmem:[%s1 + $0x424] sm:$0xf]
  %v298 = vld [vmem:[%s1 + $0x428] sm:$0xf]
  %v299 = vld [vmem:[%s1 + $0x42c] sm:$0xf]
  %v300 = vld [vmem:[%s1 + $0x430] sm:$0xf]
  %v301 = vld [vmem:[%s1 + $0x434] sm:$0xf]
  %v302 = vld [vmem:[%s1 + $0x438] sm:$0xf]
  %v303 = vld [vmem:[%s1 + $0x43c] sm:$0xf]
  %v304 = vld [vmem:[%s1 + $0x440] sm:$0xf]
  %v305 = vld [vmem:[%s1 + $0x444] sm:$0xf]
  %v306 = vld [vmem:[%s1 + $0x448] sm:$0xf]
  %v307 = vld [vmem:[%s1 + $0x44c] sm:$0xf]
  %v308 = vld [vmem:[%s1 + $0x450] sm:$0xf]
  %v309 = vld [vmem:[%s1 + $0x454] sm:$0xf]
  %v310 = vld [vmem:[%s1 + $0x458] sm:$0xf]
  %v311 = vld [vmem:[%s1 + $0x45c] sm:$0xf]
  %v312 = vld [vmem:[%s1 + $0x460] sm:$0xf]
  %v313 = vld [vmem:[%s1 + $0x464] sm:$0xf]
  %v314 = vld [vmem:[%s1 + $0x468] sm:$0xf]
  %v315 = vld [vmem:[%s1 + $0x46c] sm:$0xf]
  %v316 = vld [vmem:[%s1 + $0x470] sm:$0xf]
  %v317 = vld [vmem:[%s1 + $0x474] sm:$0xf]
  %v318 = vld [vmem:[%s1 + $0x478] sm:$0xf]
  %v319 = vld [vmem:[%s1 + $0x47c] sm:$0xf]
  %v320 = vld [vmem:[%s1 + $0x480] sm:$0xf]
  %v321 = vld [vmem:[%s1 + $0x484] sm:$0xf]
  %v322 = vld [vmem:[%s1 + $0x488] sm:$0xf]
  %v323 = vld [vmem:[%s1 + $0x48c] sm:$0xf]
  %v324 = vld [vmem:[%s1 + $0x490] sm:$0xf]
  %v325 = vld [vmem:[%s1 + $0x494] sm:$0xf]
  %v326 = vld [vmem:[%s1 + $0x498] sm:$0xf]
  %v327 = vld [vmem:[%s1 + $0x49c] sm:$0xf]
  %v328 = vld [vmem:[%s1 + $0x4a0] sm:$0xf]
  %v329 = vld [vmem:[%s1 + $0x4a4] sm:$0xf]
  %v330 = vld [vmem:[%s1 + $0x4a8] sm:$0xf]
  %v331 = vld [vmem:[%s1 + $0x4ac] sm:$0xf]
  %v332 = vld [vmem:[%s1 + $0x4b0] sm:$0xf]
  %v333 = vld [vmem:[%s1 + $0x4b4] sm:$0xf]
  %v334 = vld [vmem:[%s1 + $0x4b8] sm:$0xf]
  %v335 = vld [vmem:[%s1 + $0x4bc] sm:$0xf]
  %v336 = vld [vmem:[%s1 + $0x4c0] sm:$0xf]
  %v337 = vld [vmem:[%s1 + $0x4c4] sm:$0xf]
  %v338 = vld [vmem:[%s1 + $0x4c8] sm:$0xf]
  %v339 = vld [vmem:[%s1 + $0x4cc] sm:$0xf]
  %v340 = vld [vmem:[%s1 + $0x4d0] sm:$0xf]
  %v341 = vld [vmem:[%s1 + $0x4d4] sm:$0xf]
  %v342 = vld [vmem:[%s1 + $0x4d8] sm:$0xf]
  %v343 = vld [vmem:[%s1 + $0x4dc] sm:$0xf]
  %v344 = vld [vmem:[%s1 + $0x4e0] sm:$0xf]
  %v345 = vld [vmem:[%s1 + $0x4e4] sm:$0xf]
  %v346 = vld [vmem:[%s1 + $0x4e8] sm:$0xf]
  %v347 = vld [vmem:[%s1 + $0x4ec] sm:$0xf]
  %v348 = vld [vmem:[%s1 + $0x4f0] sm:$0xf]
  %v349 = vld [vmem:[%s1 + $0x4f4] sm:$0xf]
  %v350 = vld [vmem:[%s1 + $0x4f8] sm:$0xf]
  %v351 = vld [vmem:[%s1 + $0x4fc] sm:$0xf]
  %v352 = vld [vmem:[%s1 + $0x500] sm:$0xf]
  %v353 = vld [vmem:[%s1 + $0x504] sm:$0xf]
  %v354 = vld [vmem:[%s1 + $0x508] sm:$0xf]
  %v355 = vld [vmem:[%s1 + $0x50c] sm:$0xf]
  %v356 = vld [vmem:[%s1 + $0x510] sm:$0xf]
  %v357 = vld [vmem:[%s1 + $0x514] sm:$0xf]
  %v358 = vld [vmem:[%s1 + $0x518] sm:$0xf]
  %v359 = vld [vmem:[%s1 + $0x51c] sm:$0xf]
  %v360 = vld [vmem:[%s1 + $0x520] sm:$0xf]
  %v361 = vld [vmem:[%s1 + $0x524] sm:$0xf]
  %v362 = vld [vmem:[%s1 + $0x528] sm:$0xf]
  %v363 = vld [vmem:[%s1 + $0x52c] sm:$0xf]
  %v364 = vld [vmem:[%s1 + $0x530] sm:$0xf]
  %v365 = vld [vmem:[%s1 + $0x534] sm:$0xf]
  %v366 = vld [vmem:[%s1 + $0x538] sm:$0xf]
  %v367 = vld [vmem:[%s1 + $0x53c] sm:$0xf]
  %v368 = vld [vmem:[%s1 + $0x540] sm:$0xf]
  %v369 = vld [vmem:[%s1 + $0x544] sm:$0xf]
  %v370 = vld [vmem:[%s1 + $0x548] sm:$0xf]
  %v371 = vld [vmem:[%s1 + $0x54c] sm:$0xf]
  %v372 = vld [vmem:[%s1 + $0x550] sm:$0xf]
  %v373 = vld [vmem:[%s1 + $0x554] sm:$0xf]
  %v374 = vld [vmem:[%s1 + $0x558] sm:$0xf]
  %v375 = vld [vmem:[%s1 + $0x55c] sm:$0xf]
  %v376 = vld [vmem:[%s1 + $0x560] sm:$0xf]
  %v377 = vld [vmem:[%s1 + $0x564] sm:$0xf]
  %v378 = vld [vmem:[%s1 + $0x568] sm:$0xf]
  %v379 = vld [vmem:[%s1 + $0x56c] sm:$0xf]
  %v380 = vld [vmem:[%s1 + $0x570] sm:$0xf]
  %v381 = vld [vmem:[%s1 + $0x574] sm:$0xf]
  %v382 = vld [vmem:[%s1 + $0x578] sm:$0xf]
  %v383 = vld [vmem:[%s1 + $0x57c] sm:$0xf]
  %v384 = vld [vmem:[%s1 + $0x580] sm:$0xf]
  %v385 = vld [vmem:[%s1 + $0x584] sm:$0xf]
  %v386 = vld [vmem:[%s1 + $0x588] sm:$0xf]
  %v387 = vld [vmem:[%s1 + $0x58c] sm:$0xf]
  %v388 = vld [vmem:[%s1 + $0x590] sm:$0xf]
  %v389 = vld [vmem:[%s1 + $0x594] sm:$0xf]
  %v390 = vld [vmem:[%s1 + $0x598] sm:$0xf]
  %v391 = vld [vmem:[%s1 + $0x59c] sm:$0xf]
  %v392 = vld [vmem:[%s1 + $0x5a0] sm:$0xf]
  %v393 = vld [vmem:[%s1 + $0x5a4] sm:$0xf]
  %v394 = vld [vmem:[%s1 + $0x5a8] sm:$0xf]
  %v395 = vld [vmem:[%s1 + $0x5ac] sm:$0xf]
  %v396 = vld [vmem:[%s1 + $0x5b0] sm:$0xf]
  %v397 = vld [vmem:[%s1 + $0x5b4] sm:$0xf]
  %v398 = vld [vmem:[%s1 + $0x5b8] sm:$0xf]
  %v399 = vld [vmem:[%s1 + $0x5bc] sm:$0xf]
  %v400 = vld [vmem:[%s1 + $0x5c0] sm:$0xf]
  %v401 = vld [vmem:[%s1 + $0x5c4] sm:$0xf]
  %v402 = vld [vmem:[%s1 + $0x5c8] sm:$0xf]
  %v403 = vld [vmem:[%s1 + $0x5cc] sm:$0xf]
  %v404 = vld [vmem:[%s1 + $0x5d0] sm:$0xf]
  %v405 = vld [vmem:[%s1 + $0x5d4] sm:$0xf]
  %v406 = vld [vmem:[%s1 + $0x5d8] sm:$0xf]
  %v407 = vld [vmem:[%s1 + $0x5dc] sm:$0xf]
  %v408 = vld [vmem:[%s1 + $0x5e0] sm:$0xf]
  %v409 = vld [vmem:[%s1 + $0x5e4] sm:$0xf]
  %v410 = vld [vmem:[%s1 + $0x5e8] sm:$0xf]
  %v411 = vld [vmem:[%s1 + $0x5ec] sm:$0xf]
  %v412 = vld [vmem:[%s1 + $0x5f0] sm:$0xf]
  %v413 = vld [vmem:[%s1 + $0x5f4] sm:$0xf]
  %v414 = vld [vmem:[%s1 + $0x5f8] sm:$0xf]
  %v415 = vld [vmem:[%s1 + $0x5fc] sm:$0xf]
  %v416 = vld [vmem:[%s1 + $0x600] sm:$0xf]
  %v417 = vld [vmem:[%s1 + $0x604] sm:$0xf]
  %v418 = vld [vmem:[%s1 + $0x608] sm:$0xf]
  %v419 = vld [vmem:[%s1 + $0x60c] sm:$0xf]
  %v420 = vld [vmem:[%s1 + $0x610] sm:$0xf]
  %v421 = vld [vmem:[%s1 + $0x614] sm:$0xf]
  %v422 = vld [vmem:[%s1 + $0x618] sm:$0xf]
  %v423 = vld [vmem:[%s1 + $0x61c] sm:$0xf]
  %v424 = vld [vmem:[%s1 + $0x620] sm:$0xf]
  %v425 = vld [vmem:[%s1 + $0x624] sm:$0xf]
  %v426 = vld [vmem:[%s1 + $0x628] sm:$0xf]
  %v427 = vld [vmem:[%s1 + $0x62c] sm:$0xf]
  %v428 = vld [vmem:[%s1 + $0x630] sm:$0xf]
  %v429 = vld [vmem:[%s1 + $0x634] sm:$0xf]
  %v430 = vld [vmem:[%s1 + $0x638] sm:$0xf]
  %v431 = vld [vmem:[%s1 + $0x63c] sm:$0xf]
  %v432 = vld [vmem:[%s1 + $0x640] sm:$0xf]
  %v433 = vld [vmem:[%s1 + $0x644] sm:$0xf]
  %v434 = vld [vmem:[%s1 + $0x648] sm:$0xf]
  %v435 = vld [vmem:[%s1 + $0x64c] sm:$0xf]
  %v436 = vld [vmem:[%s1 + $0x650] sm:$0xf]
  %v437 = vld [vmem:[%s1 + $0x654] sm:$0xf]
  %v438 = vld [vmem:[%s1 + $0x658] sm:$0xf]
  %v439 = vld [vmem:[%s1 + $0x65c] sm:$0xf]
  %v440 = vld [vmem:[%s1 + $0x660] sm:$0xf]
  %v441 = vld [vmem:[%s1 + $0x664] sm:$0xf]
  %v442 = vld [vmem:[%s1 + $0x668] sm:$0xf]
  %v443 = vld [vmem:[%s1 + $0x66c] sm:$0xf]
  %v444 = vld [vmem:[%s1 + $0x670] sm:$0xf]
  %v445 = vld [vmem:[%s1 + $0x674] sm:$0xf]
  %v446 = vld [vmem:[%s1 + $0x678] sm:$0xf]
  %v447 = vld [vmem:[%s1 + $0x67c] sm:$0xf]
  %v448 = vld [vmem:[%s1 + $0x680] sm:$0xf]
  %v449 = vld [vmem:[%s1 + $0x684] sm:$0xf]
  %v450 = vld [vmem:[%s1 + $0x688] sm:$0xf]
  %v451 = vld [vmem:[%s1 + $0x68c] sm:$0xf]
  %v452 = vld [vmem:[%s1 + $0x690] sm:$0xf]
  %v453 = vld [vmem:[%s1 + $0x694] sm:$0xf]
  %v454 = vld [vmem:[%s1 + $0x698] sm:$0xf]
  %v455 = vld [vmem:[%s1 + $0x69c] sm:$0xf]
  %v456 = vld [vmem:[%s1 + $0x6a0] sm:$0xf]
  %v457 = vld [vmem:[%s1 + $0x6a4] sm:$0xf]
  %v458 = vld [vmem:[%s1 + $0x6a8] sm:$0xf]
  %v459 = vld [vmem:[%s1 + $0x6ac] sm:$0xf]
  %v460 = vld [vmem:[%s1 + $0x6b0] sm:$0xf]
  %v461 = vld [vmem:[%s1 + $0x6b4] sm:$0xf]
  %v462 = vld [vmem:[%s1 + $0x6b8] sm:$0xf]
  %v463 = vld [vmem:[%s1 + $0x6bc] sm:$0xf]
  %v464 = vld [vmem:[%s1 + $0x6c0] sm:$0xf]
  %v465 = vld [vmem:[%s1 + $0x6c4] sm:$0xf]
  %v466 = vld [vmem:[%s1 + $0x6c8] sm:$0xf]
  %v467 = vld [vmem:[%s1 + $0x6cc] sm:$0xf]
  %v468 = vld [vmem:[%s1 + $0x6d0] sm:$0xf]
  %v469 = vld [vmem:[%s1 + $0x6d4] sm:$0xf]
  %v470 = vld [vmem:[%s1 + $0x6d8] sm:$0xf]
  %v471 = vld [vmem:[%s1 + $0x6dc] sm:$0xf]
  %v472 = vld [vmem:[%s1 + $0x6e0] sm:$0xf]
  %v473 = vld [vmem:[%s1 + $0x6e4] sm:$0xf]
  %v474 = vld [vmem:[%s1 + $0x6e8] sm:$0xf]
  %v475 = vld [vmem:[%s1 + $0x6ec] sm:$0xf]
  %v476 = vld [vmem:[%s1 + $0x6f0] sm:$0xf]
  %v477 = vld [vmem:[%s1 + $0x6f4] sm:$0xf]
  %v478 = vld [vmem:[%s1 + $0x6f8] sm:$0xf]
  %v479 = vld [vmem:[%s1 + $0x6fc] sm:$0xf]
  %v480 = vld [vmem:[%s1 + $0x700] sm:$0xf]
  %v481 = vld [vmem:[%s1 + $0x704] sm:$0xf]
  %v482 = vld [vmem:[%s1 + $0x708] sm:$0xf]
  %v483 = vld [vmem:[%s1 + $0x70c] sm:$0xf]
  %v484 = vld [vmem:[%s1 + $0x710] sm:$0xf]
  %v485 = vld [vmem:[%s1 + $0x714] sm:$0xf]
  %v486 = vld [vmem:[%s1 + $0x718] sm:$0xf]
  %v487 = vld [vmem:[%s1 + $0x71c] sm:$0xf]
  %v488 = vld [vmem:[%s1 + $0x720] sm:$0xf]
  %v489 = vld [vmem:[%s1 + $0x724] sm:$0xf]
  %v490 = vld [vmem:[%s1 + $0x728] sm:$0xf]
  %v491 = vld [vmem:[%s1 + $0x72c] sm:$0xf]
  %v492 = vld [vmem:[%s1 + $0x730] sm:$0xf]
  %v493 = vld [vmem:[%s1 + $0x734] sm:$0xf]
  %v494 = vld [vmem:[%s1 + $0x738] sm:$0xf]
  %v495 = vld [vmem:[%s1 + $0x73c] sm:$0xf]
  %v496 = vld [vmem:[%s1 + $0x740] sm:$0xf]
  %v497 = vld [vmem:[%s1 + $0x744] sm:$0xf]
  %v498 = vld [vmem:[%s1 + $0x748] sm:$0xf]
  %v499 = vld [vmem:[%s1 + $0x74c] sm:$0xf]
  %v500 = vld [vmem:[%s1 + $0x750] sm:$0xf]
  %v501 = vld [vmem:[%s1 + $0x754] sm:$0xf]
  %v502 = vld [vmem:[%s1 + $0x758] sm:$0xf]
  %v503 = vld [vmem:[%s1 + $0x75c] sm:$0xf]
  %v504 = vld [vmem:[%s1 + $0x760] sm:$0xf]
  %v505 = vld [vmem:[%s1 + $0x764] sm:$0xf]
  %v506 = vld [vmem:[%s1 + $0x768] sm:$0xf]
  %v507 = vld [vmem:[%s1 + $0x76c] sm:$0xf]
  %v508 = vld [vmem:[%s1 + $0x770] sm:$0xf]
  %v509 = vld [vmem:[%s1 + $0x774] sm:$0xf]
  %v510 = vld [vmem:[%s1 + $0x778] sm:$0xf]
  %v511 = vld [vmem:[%s1 + $0x77c] sm:$0xf]
  %v512 = vld [vmem:[%s1 + $0x780] sm:$0xf]
  %v513 = vld [vmem:[%s1 + $0x784] sm:$0xf]
  %v514 = vld [vmem:[%s1 + $0x788] sm:$0xf]
  %v515 = vld [vmem:[%s1 + $0x78c] sm:$0xf]
  %v516 = vld [vmem:[%s1 + $0x790] sm:$0xf]
  %v517 = vld [vmem:[%s1 + $0x794] sm:$0xf]
  %v518 = vld [vmem:[%s1 + $0x798] sm:$0xf]
  %v519 = vld [vmem:[%s1 + $0x79c] sm:$0xf]
  %v520 = vld [vmem:[%s1 + $0x7a0] sm:$0xf]
  %v521 = vld [vmem:[%s1 + $0x7a4] sm:$0xf]
  %v522 = vld [vmem:[%s1 + $0x7a8] sm:$0xf]
  %v523 = vld [vmem:[%s1 + $0x7ac] sm:$0xf]
  %v524 = vld [vmem:[%s1 + $0x7b0] sm:$0xf]
  %v525 = vld [vmem:[%s1 + $0x7b4] sm:$0xf]
  %v526 = vld [vmem:[%s1 + $0x7b8] sm:$0xf]
  %v527 = vld [vmem:[%s1 + $0x7bc] sm:$0xf]
  %v528 = vld [vmem:[%s1 + $0x7c0] sm:$0xf]
  %v529 = vld [vmem:[%s1 + $0x7c4] sm:$0xf]
  %v530 = vld [vmem:[%s1 + $0x7c8] sm:$0xf]
  %v531 = vld [vmem:[%s1 + $0x7cc] sm:$0xf]
  %v532 = vld [vmem:[%s1 + $0x7d0] sm:$0xf]
  %v533 = vld [vmem:[%s1 + $0x7d4] sm:$0xf]
  %v534 = vld [vmem:[%s1 + $0x7d8] sm:$0xf]
  %v535 = vld [vmem:[%s1 + $0x7dc] sm:$0xf]
  %v536 = vld [vmem:[%s1 + $0x7e0] sm:$0xf]
  %v537 = vld [vmem:[%s1 + $0x7e4] sm:$0xf]
  %v538 = vld [vmem:[%s1 + $0x7e8] sm:$0xf]
  %v539 = vld [vmem:[%s1 + $0x7ec] sm:$0xf]
  %v540 = vld [vmem:[%s1 + $0x7f0] sm:$0xf]
  %v541 = vld [vmem:[%s1 + $0x7f4] sm:$0xf]
  %v542 = vld [vmem:[%s1 + $0x7f8] sm:$0xf]
  %v543 = vld [vmem:[%s1 + $0x7fc] sm:$0xf]
  %v548 = vcombine.high %v28, %v28
  %v550 = vunpack.c.l.s4 1966171168
  %v551 = vunpack.c.0.s8 %v550
  %v552 = vlaneseq
  %v553 = vshrl.u32 %v552, 7
  %v554 = vsub.s32 %v551, %v553
  %v555 = vrot.slane %v28, %v554
  %v557 = vunpack.c.l.s4 1966171168
  %v558 = vunpack.c.0.s8 %v557
  %v559 = vlaneseq
  %v560 = vshrl.u32 %v559, 7
  %v561 = vsub.s32 %v558, %v560
  %v562 = vrot.slane %v548, %v561
  %v563 = vcombine.high %v555, %v555
  %v564 = vcombine.high %v562, %v562
  %v566 = vunpack.c.l.s4 1966171168
  %v567 = vunpack.c.0.s8 %v566
  %v568 = vlaneseq
  %v569 = vshrl.u32 %v568, 7
  %v570 = vsub.s32 %v567, %v569
  %v571 = vrot.slane %v555, %v570
  %v573 = vunpack.c.l.s4 1966171168
  %v574 = vunpack.c.0.s8 %v573
  %v575 = vlaneseq
  %v576 = vshrl.u32 %v575, 7
  %v577 = vsub.s32 %v574, %v576
  %v578 = vrot.slane %v562, %v577
  %v580 = vunpack.c.l.s4 1966171168
  %v581 = vunpack.c.0.s8 %v580
  %v582 = vlaneseq
  %v583 = vshrl.u32 %v582, 7
  %v584 = vsub.s32 %v581, %v583
  %v585 = vrot.slane %v563, %v584
  %v587 = vunpack.c.l.s4 1966171168
  %v588 = vunpack.c.0.s8 %v587
  %v589 = vlaneseq
  %v590 = vshrl.u32 %v589, 7
  %v591 = vsub.s32 %v588, %v590
  %v592 = vrot.slane %v564, %v591
  %v593 = vcombine.high %v571, %v571
  %v594 = vcombine.high %v578, %v578
  %v595 = vcombine.high %v585, %v585
  %v596 = vcombine.high %v592, %v592
  %v597 = vcombine.high %v29, %v29
  %v599 = vunpack.c.l.s4 1966171168
  %v600 = vunpack.c.0.s8 %v599
  %v601 = vlaneseq
  %v602 = vshrl.u32 %v601, 7
  %v603 = vsub.s32 %v600, %v602
  %v604 = vrot.slane %v29, %v603
  %v606 = vunpack.c.l.s4 1966171168
  %v607 = vunpack.c.0.s8 %v606
  %v608 = vlaneseq
  %v609 = vshrl.u32 %v608, 7
  %v610 = vsub.s32 %v607, %v609
  %v611 = vrot.slane %v597, %v610
  %v612 = vcombine.high %v604, %v604
  %v613 = vcombine.high %v611, %v611
  %v615 = vunpack.c.l.s4 1966171168
  %v616 = vunpack.c.0.s8 %v615
  %v617 = vlaneseq
  %v618 = vshrl.u32 %v617, 7
  %v619 = vsub.s32 %v616, %v618
  %v620 = vrot.slane %v604, %v619
  %v622 = vunpack.c.l.s4 1966171168
  %v623 = vunpack.c.0.s8 %v622
  %v624 = vlaneseq
  %v625 = vshrl.u32 %v624, 7
  %v626 = vsub.s32 %v623, %v625
  %v627 = vrot.slane %v611, %v626
  %v629 = vunpack.c.l.s4 1966171168
  %v630 = vunpack.c.0.s8 %v629
  %v631 = vlaneseq
  %v632 = vshrl.u32 %v631, 7
  %v633 = vsub.s32 %v630, %v632
  %v634 = vrot.slane %v612, %v633
  %v636 = vunpack.c.l.s4 1966171168
  %v637 = vunpack.c.0.s8 %v636
  %v638 = vlaneseq
  %v639 = vshrl.u32 %v638, 7
  %v640 = vsub.s32 %v637, %v639
  %v641 = vrot.slane %v613, %v640
  %v642 = vcombine.high %v620, %v620
  %v643 = vcombine.high %v627, %v627
  %v644 = vcombine.high %v634, %v634
  %v645 = vcombine.high %v641, %v641
  %v646 = vcombine.high %v30, %v30
  %v648 = vunpack.c.l.s4 1966171168
  %v649 = vunpack.c.0.s8 %v648
  %v650 = vlaneseq
  %v651 = vshrl.u32 %v650, 7
  %v652 = vsub.s32 %v649, %v651
  %v653 = vrot.slane %v30, %v652
  %v655 = vunpack.c.l.s4 1966171168
  %v656 = vunpack.c.0.s8 %v655
  %v657 = vlaneseq
  %v658 = vshrl.u32 %v657, 7
  %v659 = vsub.s32 %v656, %v658
  %v660 = vrot.slane %v646, %v659
  %v661 = vcombine.high %v653, %v653
  %v662 = vcombine.high %v660, %v660
  %v664 = vunpack.c.l.s4 1966171168
  %v665 = vunpack.c.0.s8 %v664
  %v666 = vlaneseq
  %v667 = vshrl.u32 %v666, 7
  %v668 = vsub.s32 %v665, %v667
  %v669 = vrot.slane %v653, %v668
  %v671 = vunpack.c.l.s4 1966171168
  %v672 = vunpack.c.0.s8 %v671
  %v673 = vlaneseq
  %v674 = vshrl.u32 %v673, 7
  %v675 = vsub.s32 %v672, %v674
  %v676 = vrot.slane %v660, %v675
  %v678 = vunpack.c.l.s4 1966171168
  %v679 = vunpack.c.0.s8 %v678
  %v680 = vlaneseq
  %v681 = vshrl.u32 %v680, 7
  %v682 = vsub.s32 %v679, %v681
  %v683 = vrot.slane %v661, %v682
  %v685 = vunpack.c.l.s4 1966171168
  %v686 = vunpack.c.0.s8 %v685
  %v687 = vlaneseq
  %v688 = vshrl.u32 %v687, 7
  %v689 = vsub.s32 %v686, %v688
  %v690 = vrot.slane %v662, %v689
  %v691 = vcombine.high %v669, %v669
  %v692 = vcombine.high %v676, %v676
  %v693 = vcombine.high %v683, %v683
  %v694 = vcombine.high %v690, %v690
  %v695 = vcombine.high %v31, %v31
  %v697 = vunpack.c.l.s4 1966171168
  %v698 = vunpack.c.0.s8 %v697
  %v699 = vlaneseq
  %v700 = vshrl.u32 %v699, 7
  %v701 = vsub.s32 %v698, %v700
  %v702 = vrot.slane %v31, %v701
  %v704 = vunpack.c.l.s4 1966171168
  %v705 = vunpack.c.0.s8 %v704
  %v706 = vlaneseq
  %v707 = vshrl.u32 %v706, 7
  %v708 = vsub.s32 %v705, %v707
  %v709 = vrot.slane %v695, %v708
  %v710 = vcombine.high %v702, %v702
  %v711 = vcombine.high %v709, %v709
  %v713 = vunpack.c.l.s4 1966171168
  %v714 = vunpack.c.0.s8 %v713
  %v715 = vlaneseq
  %v716 = vshrl.u32 %v715, 7
  %v717 = vsub.s32 %v714, %v716
  %v718 = vrot.slane %v702, %v717
  %v720 = vunpack.c.l.s4 1966171168
  %v721 = vunpack.c.0.s8 %v720
  %v722 = vlaneseq
  %v723 = vshrl.u32 %v722, 7
  %v724 = vsub.s32 %v721, %v723
  %v725 = vrot.slane %v709, %v724
  %v727 = vunpack.c.l.s4 1966171168
  %v728 = vunpack.c.0.s8 %v727
  %v729 = vlaneseq
  %v730 = vshrl.u32 %v729, 7
  %v731 = vsub.s32 %v728, %v730
  %v732 = vrot.slane %v710, %v731
  %v734 = vunpack.c.l.s4 1966171168
  %v735 = vunpack.c.0.s8 %v734
  %v736 = vlaneseq
  %v737 = vshrl.u32 %v736, 7
  %v738 = vsub.s32 %v735, %v737
  %v739 = vrot.slane %v711, %v738
  %v740 = vcombine.high %v718, %v718
  %v741 = vcombine.high %v725, %v725
  %v742 = vcombine.high %v732, %v732
  %v743 = vcombine.high %v739, %v739
  %v1288 = vunpack.c.l.b16 %v32
  %v1289 = vunpack.c.l.b16 %v33
  %v1290 = vunpack.c.l.b16 %v34
  %v1291 = vunpack.c.l.b16 %v35
  %v1292 = vunpack.c.l.b16 %v36
  %v1293 = vunpack.c.l.b16 %v37
  %v1294 = vunpack.c.l.b16 %v38
  %v1295 = vunpack.c.l.b16 %v39
  %v1296 = vunpack.c.l.b16 %v40
  %v1297 = vunpack.c.l.b16 %v41
  %v1298 = vunpack.c.l.b16 %v42
  %v1299 = vunpack.c.l.b16 %v43
  %v1300 = vunpack.c.l.b16 %v44
  %v1301 = vunpack.c.l.b16 %v45
  %v1302 = vunpack.c.l.b16 %v46
  %v1303 = vunpack.c.l.b16 %v47
  %v1304 = vunpack.c.l.b16 %v48
  %v1305 = vunpack.c.l.b16 %v49
  %v1306 = vunpack.c.l.b16 %v50
  %v1307 = vunpack.c.l.b16 %v51
  %v1308 = vunpack.c.l.b16 %v52
  %v1309 = vunpack.c.l.b16 %v53
  %v1310 = vunpack.c.l.b16 %v54
  %v1311 = vunpack.c.l.b16 %v55
  %v1312 = vunpack.c.l.b16 %v56
  %v1313 = vunpack.c.l.b16 %v57
  %v1314 = vunpack.c.l.b16 %v58
  %v1315 = vunpack.c.l.b16 %v59
  %v1316 = vunpack.c.l.b16 %v60
  %v1317 = vunpack.c.l.b16 %v61
  %v1318 = vunpack.c.l.b16 %v62
  %v1319 = vunpack.c.l.b16 %v63
  %v1320 = vunpack.c.l.b16 %v64
  %v1321 = vunpack.c.l.b16 %v65
  %v1322 = vunpack.c.l.b16 %v66
  %v1323 = vunpack.c.l.b16 %v67
  %v1324 = vunpack.c.l.b16 %v68
  %v1325 = vunpack.c.l.b16 %v69
  %v1326 = vunpack.c.l.b16 %v70
  %v1327 = vunpack.c.l.b16 %v71
  %v1328 = vunpack.c.l.b16 %v72
  %v1329 = vunpack.c.l.b16 %v73
  %v1330 = vunpack.c.l.b16 %v74
  %v1331 = vunpack.c.l.b16 %v75
  %v1332 = vunpack.c.l.b16 %v76
  %v1333 = vunpack.c.l.b16 %v77
  %v1334 = vunpack.c.l.b16 %v78
  %v1335 = vunpack.c.l.b16 %v79
  %v1336 = vunpack.c.l.b16 %v80
  %v1337 = vunpack.c.l.b16 %v81
  %v1338 = vunpack.c.l.b16 %v82
  %v1339 = vunpack.c.l.b16 %v83
  %v1340 = vunpack.c.l.b16 %v84
  %v1341 = vunpack.c.l.b16 %v85
  %v1342 = vunpack.c.l.b16 %v86
  %v1343 = vunpack.c.l.b16 %v87
  %v1344 = vunpack.c.l.b16 %v88
  %v1345 = vunpack.c.l.b16 %v89
  %v1346 = vunpack.c.l.b16 %v90
  %v1347 = vunpack.c.l.b16 %v91
  %v1348 = vunpack.c.l.b16 %v92
  %v1349 = vunpack.c.l.b16 %v93
  %v1350 = vunpack.c.l.b16 %v94
  %v1351 = vunpack.c.l.b16 %v95
  %v1352 = vunpack.c.l.b16 %v96
  %v1353 = vunpack.c.l.b16 %v97
  %v1354 = vunpack.c.l.b16 %v98
  %v1355 = vunpack.c.l.b16 %v99
  %v1356 = vunpack.c.l.b16 %v100
  %v1357 = vunpack.c.l.b16 %v101
  %v1358 = vunpack.c.l.b16 %v102
  %v1359 = vunpack.c.l.b16 %v103
  %v1360 = vunpack.c.l.b16 %v104
  %v1361 = vunpack.c.l.b16 %v105
  %v1362 = vunpack.c.l.b16 %v106
  %v1363 = vunpack.c.l.b16 %v107
  %v1364 = vunpack.c.l.b16 %v108
  %v1365 = vunpack.c.l.b16 %v109
  %v1366 = vunpack.c.l.b16 %v110
  %v1367 = vunpack.c.l.b16 %v111
  %v1368 = vunpack.c.l.b16 %v112
  %v1369 = vunpack.c.l.b16 %v113
  %v1370 = vunpack.c.l.b16 %v114
  %v1371 = vunpack.c.l.b16 %v115
  %v1372 = vunpack.c.l.b16 %v116
  %v1373 = vunpack.c.l.b16 %v117
  %v1374 = vunpack.c.l.b16 %v118
  %v1375 = vunpack.c.l.b16 %v119
  %v1376 = vunpack.c.l.b16 %v120
  %v1377 = vunpack.c.l.b16 %v121
  %v1378 = vunpack.c.l.b16 %v122
  %v1379 = vunpack.c.l.b16 %v123
  %v1380 = vunpack.c.l.b16 %v124
  %v1381 = vunpack.c.l.b16 %v125
  %v1382 = vunpack.c.l.b16 %v126
  %v1383 = vunpack.c.l.b16 %v127
  %v1384 = vunpack.c.l.b16 %v128
  %v1385 = vunpack.c.l.b16 %v129
  %v1386 = vunpack.c.l.b16 %v130
  %v1387 = vunpack.c.l.b16 %v131
  %v1388 = vunpack.c.l.b16 %v132
  %v1389 = vunpack.c.l.b16 %v133
  %v1390 = vunpack.c.l.b16 %v134
  %v1391 = vunpack.c.l.b16 %v135
  %v1392 = vunpack.c.l.b16 %v136
  %v1393 = vunpack.c.l.b16 %v137
  %v1394 = vunpack.c.l.b16 %v138
  %v1395 = vunpack.c.l.b16 %v139
  %v1396 = vunpack.c.l.b16 %v140
  %v1397 = vunpack.c.l.b16 %v141
  %v1398 = vunpack.c.l.b16 %v142
  %v1399 = vunpack.c.l.b16 %v143
  %v1400 = vunpack.c.l.b16 %v144
  %v1401 = vunpack.c.l.b16 %v145
  %v1402 = vunpack.c.l.b16 %v146
  %v1403 = vunpack.c.l.b16 %v147
  %v1404 = vunpack.c.l.b16 %v148
  %v1405 = vunpack.c.l.b16 %v149
  %v1406 = vunpack.c.l.b16 %v150
  %v1407 = vunpack.c.l.b16 %v151
  %v1408 = vunpack.c.l.b16 %v152
  %v1409 = vunpack.c.l.b16 %v153
  %v1410 = vunpack.c.l.b16 %v154
  %v1411 = vunpack.c.l.b16 %v155
  %v1412 = vunpack.c.l.b16 %v156
  %v1413 = vunpack.c.l.b16 %v157
  %v1414 = vunpack.c.l.b16 %v158
  %v1415 = vunpack.c.l.b16 %v159
  %v1416 = vunpack.c.l.b16 %v160
  %v1417 = vunpack.c.l.b16 %v161
  %v1418 = vunpack.c.l.b16 %v162
  %v1419 = vunpack.c.l.b16 %v163
  %v1420 = vunpack.c.l.b16 %v164
  %v1421 = vunpack.c.l.b16 %v165
  %v1422 = vunpack.c.l.b16 %v166
  %v1423 = vunpack.c.l.b16 %v167
  %v1424 = vunpack.c.l.b16 %v168
  %v1425 = vunpack.c.l.b16 %v169
  %v1426 = vunpack.c.l.b16 %v170
  %v1427 = vunpack.c.l.b16 %v171
  %v1428 = vunpack.c.l.b16 %v172
  %v1429 = vunpack.c.l.b16 %v173
  %v1430 = vunpack.c.l.b16 %v174
  %v1431 = vunpack.c.l.b16 %v175
  %v1432 = vunpack.c.l.b16 %v176
  %v1433 = vunpack.c.l.b16 %v177
  %v1434 = vunpack.c.l.b16 %v178
  %v1435 = vunpack.c.l.b16 %v179
  %v1436 = vunpack.c.l.b16 %v180
  %v1437 = vunpack.c.l.b16 %v181
  %v1438 = vunpack.c.l.b16 %v182
  %v1439 = vunpack.c.l.b16 %v183
  %v1440 = vunpack.c.l.b16 %v184
  %v1441 = vunpack.c.l.b16 %v185
  %v1442 = vunpack.c.l.b16 %v186
  %v1443 = vunpack.c.l.b16 %v187
  %v1444 = vunpack.c.l.b16 %v188
  %v1445 = vunpack.c.l.b16 %v189
  %v1446 = vunpack.c.l.b16 %v190
  %v1447 = vunpack.c.l.b16 %v191
  %v1448 = vunpack.c.l.b16 %v192
  %v1449 = vunpack.c.l.b16 %v193
  %v1450 = vunpack.c.l.b16 %v194
  %v1451 = vunpack.c.l.b16 %v195
  %v1452 = vunpack.c.l.b16 %v196
  %v1453 = vunpack.c.l.b16 %v197
  %v1454 = vunpack.c.l.b16 %v198
  %v1455 = vunpack.c.l.b16 %v199
  %v1456 = vunpack.c.l.b16 %v200
  %v1457 = vunpack.c.l.b16 %v201
  %v1458 = vunpack.c.l.b16 %v202
  %v1459 = vunpack.c.l.b16 %v203
  %v1460 = vunpack.c.l.b16 %v204
  %v1461 = vunpack.c.l.b16 %v205
  %v1462 = vunpack.c.l.b16 %v206
  %v1463 = vunpack.c.l.b16 %v207
  %v1464 = vunpack.c.l.b16 %v208
  %v1465 = vunpack.c.l.b16 %v209
  %v1466 = vunpack.c.l.b16 %v210
  %v1467 = vunpack.c.l.b16 %v211
  %v1468 = vunpack.c.l.b16 %v212
  %v1469 = vunpack.c.l.b16 %v213
  %v1470 = vunpack.c.l.b16 %v214
  %v1471 = vunpack.c.l.b16 %v215
  %v1472 = vunpack.c.l.b16 %v216
  %v1473 = vunpack.c.l.b16 %v217
  %v1474 = vunpack.c.l.b16 %v218
  %v1475 = vunpack.c.l.b16 %v219
  %v1476 = vunpack.c.l.b16 %v220
  %v1477 = vunpack.c.l.b16 %v221
  %v1478 = vunpack.c.l.b16 %v222
  %v1479 = vunpack.c.l.b16 %v223
  %v1480 = vunpack.c.l.b16 %v224
  %v1481 = vunpack.c.l.b16 %v225
  %v1482 = vunpack.c.l.b16 %v226
  %v1483 = vunpack.c.l.b16 %v227
  %v1484 = vunpack.c.l.b16 %v228
  %v1485 = vunpack.c.l.b16 %v229
  %v1486 = vunpack.c.l.b16 %v230
  %v1487 = vunpack.c.l.b16 %v231
  %v1488 = vunpack.c.l.b16 %v232
  %v1489 = vunpack.c.l.b16 %v233
  %v1490 = vunpack.c.l.b16 %v234
  %v1491 = vunpack.c.l.b16 %v235
  %v1492 = vunpack.c.l.b16 %v236
  %v1493 = vunpack.c.l.b16 %v237
  %v1494 = vunpack.c.l.b16 %v238
  %v1495 = vunpack.c.l.b16 %v239
  %v1496 = vunpack.c.l.b16 %v240
  %v1497 = vunpack.c.l.b16 %v241
  %v1498 = vunpack.c.l.b16 %v242
  %v1499 = vunpack.c.l.b16 %v243
  %v1500 = vunpack.c.l.b16 %v244
  %v1501 = vunpack.c.l.b16 %v245
  %v1502 = vunpack.c.l.b16 %v246
  %v1503 = vunpack.c.l.b16 %v247
  %v1504 = vunpack.c.l.b16 %v248
  %v1505 = vunpack.c.l.b16 %v249
  %v1506 = vunpack.c.l.b16 %v250
  %v1507 = vunpack.c.l.b16 %v251
  %v1508 = vunpack.c.l.b16 %v252
  %v1509 = vunpack.c.l.b16 %v253
  %v1510 = vunpack.c.l.b16 %v254
  %v1511 = vunpack.c.l.b16 %v255
  %v1512 = vunpack.c.l.b16 %v256
  %v1513 = vunpack.c.l.b16 %v257
  %v1514 = vunpack.c.l.b16 %v258
  %v1515 = vunpack.c.l.b16 %v259
  %v1516 = vunpack.c.l.b16 %v260
  %v1517 = vunpack.c.l.b16 %v261
  %v1518 = vunpack.c.l.b16 %v262
  %v1519 = vunpack.c.l.b16 %v263
  %v1520 = vunpack.c.l.b16 %v264
  %v1521 = vunpack.c.l.b16 %v265
  %v1522 = vunpack.c.l.b16 %v266
  %v1523 = vunpack.c.l.b16 %v267
  %v1524 = vunpack.c.l.b16 %v268
  %v1525 = vunpack.c.l.b16 %v269
  %v1526 = vunpack.c.l.b16 %v270
  %v1527 = vunpack.c.l.b16 %v271
  %v1528 = vunpack.c.l.b16 %v272
  %v1529 = vunpack.c.l.b16 %v273
  %v1530 = vunpack.c.l.b16 %v274
  %v1531 = vunpack.c.l.b16 %v275
  %v1532 = vunpack.c.l.b16 %v276
  %v1533 = vunpack.c.l.b16 %v277
  %v1534 = vunpack.c.l.b16 %v278
  %v1535 = vunpack.c.l.b16 %v279
  %v1536 = vunpack.c.l.b16 %v280
  %v1537 = vunpack.c.l.b16 %v281
  %v1538 = vunpack.c.l.b16 %v282
  %v1539 = vunpack.c.l.b16 %v283
  %v1540 = vunpack.c.l.b16 %v284
  %v1541 = vunpack.c.l.b16 %v285
  %v1542 = vunpack.c.l.b16 %v286
  %v1543 = vunpack.c.l.b16 %v287
  %v1544 = vunpack.c.l.b16 %v288
  %v1545 = vunpack.c.l.b16 %v289
  %v1546 = vunpack.c.l.b16 %v290
  %v1547 = vunpack.c.l.b16 %v291
  %v1548 = vunpack.c.l.b16 %v292
  %v1549 = vunpack.c.l.b16 %v293
  %v1550 = vunpack.c.l.b16 %v294
  %v1551 = vunpack.c.l.b16 %v295
  %v1552 = vunpack.c.l.b16 %v296
  %v1553 = vunpack.c.l.b16 %v297
  %v1554 = vunpack.c.l.b16 %v298
  %v1555 = vunpack.c.l.b16 %v299
  %v1556 = vunpack.c.l.b16 %v300
  %v1557 = vunpack.c.l.b16 %v301
  %v1558 = vunpack.c.l.b16 %v302
  %v1559 = vunpack.c.l.b16 %v303
  %v1560 = vunpack.c.l.b16 %v304
  %v1561 = vunpack.c.l.b16 %v305
  %v1562 = vunpack.c.l.b16 %v306
  %v1563 = vunpack.c.l.b16 %v307
  %v1564 = vunpack.c.l.b16 %v308
  %v1565 = vunpack.c.l.b16 %v309
  %v1566 = vunpack.c.l.b16 %v310
  %v1567 = vunpack.c.l.b16 %v311
  %v1568 = vunpack.c.l.b16 %v312
  %v1569 = vunpack.c.l.b16 %v313
  %v1570 = vunpack.c.l.b16 %v314
  %v1571 = vunpack.c.l.b16 %v315
  %v1572 = vunpack.c.l.b16 %v316
  %v1573 = vunpack.c.l.b16 %v317
  %v1574 = vunpack.c.l.b16 %v318
  %v1575 = vunpack.c.l.b16 %v319
  %v1576 = vunpack.c.l.b16 %v320
  %v1577 = vunpack.c.l.b16 %v321
  %v1578 = vunpack.c.l.b16 %v322
  %v1579 = vunpack.c.l.b16 %v323
  %v1580 = vunpack.c.l.b16 %v324
  %v1581 = vunpack.c.l.b16 %v325
  %v1582 = vunpack.c.l.b16 %v326
  %v1583 = vunpack.c.l.b16 %v327
  %v1584 = vunpack.c.l.b16 %v328
  %v1585 = vunpack.c.l.b16 %v329
  %v1586 = vunpack.c.l.b16 %v330
  %v1587 = vunpack.c.l.b16 %v331
  %v1588 = vunpack.c.l.b16 %v332
  %v1589 = vunpack.c.l.b16 %v333
  %v1590 = vunpack.c.l.b16 %v334
  %v1591 = vunpack.c.l.b16 %v335
  %v1592 = vunpack.c.l.b16 %v336
  %v1593 = vunpack.c.l.b16 %v337
  %v1594 = vunpack.c.l.b16 %v338
  %v1595 = vunpack.c.l.b16 %v339
  %v1596 = vunpack.c.l.b16 %v340
  %v1597 = vunpack.c.l.b16 %v341
  %v1598 = vunpack.c.l.b16 %v342
  %v1599 = vunpack.c.l.b16 %v343
  %v1600 = vunpack.c.l.b16 %v344
  %v1601 = vunpack.c.l.b16 %v345
  %v1602 = vunpack.c.l.b16 %v346
  %v1603 = vunpack.c.l.b16 %v347
  %v1604 = vunpack.c.l.b16 %v348
  %v1605 = vunpack.c.l.b16 %v349
  %v1606 = vunpack.c.l.b16 %v350
  %v1607 = vunpack.c.l.b16 %v351
  %v1608 = vunpack.c.l.b16 %v352
  %v1609 = vunpack.c.l.b16 %v353
  %v1610 = vunpack.c.l.b16 %v354
  %v1611 = vunpack.c.l.b16 %v355
  %v1612 = vunpack.c.l.b16 %v356
  %v1613 = vunpack.c.l.b16 %v357
  %v1614 = vunpack.c.l.b16 %v358
  %v1615 = vunpack.c.l.b16 %v359
  %v1616 = vunpack.c.l.b16 %v360
  %v1617 = vunpack.c.l.b16 %v361
  %v1618 = vunpack.c.l.b16 %v362
  %v1619 = vunpack.c.l.b16 %v363
  %v1620 = vunpack.c.l.b16 %v364
  %v1621 = vunpack.c.l.b16 %v365
  %v1622 = vunpack.c.l.b16 %v366
  %v1623 = vunpack.c.l.b16 %v367
  %v1624 = vunpack.c.l.b16 %v368
  %v1625 = vunpack.c.l.b16 %v369
  %v1626 = vunpack.c.l.b16 %v370
  %v1627 = vunpack.c.l.b16 %v371
  %v1628 = vunpack.c.l.b16 %v372
  %v1629 = vunpack.c.l.b16 %v373
  %v1630 = vunpack.c.l.b16 %v374
  %v1631 = vunpack.c.l.b16 %v375
  %v1632 = vunpack.c.l.b16 %v376
  %v1633 = vunpack.c.l.b16 %v377
  %v1634 = vunpack.c.l.b16 %v378
  %v1635 = vunpack.c.l.b16 %v379
  %v1636 = vunpack.c.l.b16 %v380
  %v1637 = vunpack.c.l.b16 %v381
  %v1638 = vunpack.c.l.b16 %v382
  %v1639 = vunpack.c.l.b16 %v383
  %v1640 = vunpack.c.l.b16 %v384
  %v1641 = vunpack.c.l.b16 %v385
  %v1642 = vunpack.c.l.b16 %v386
  %v1643 = vunpack.c.l.b16 %v387
  %v1644 = vunpack.c.l.b16 %v388
  %v1645 = vunpack.c.l.b16 %v389
  %v1646 = vunpack.c.l.b16 %v390
  %v1647 = vunpack.c.l.b16 %v391
  %v1648 = vunpack.c.l.b16 %v392
  %v1649 = vunpack.c.l.b16 %v393
  %v1650 = vunpack.c.l.b16 %v394
  %v1651 = vunpack.c.l.b16 %v395
  %v1652 = vunpack.c.l.b16 %v396
  %v1653 = vunpack.c.l.b16 %v397
  %v1654 = vunpack.c.l.b16 %v398
  %v1655 = vunpack.c.l.b16 %v399
  %v1656 = vunpack.c.l.b16 %v400
  %v1657 = vunpack.c.l.b16 %v401
  %v1658 = vunpack.c.l.b16 %v402
  %v1659 = vunpack.c.l.b16 %v403
  %v1660 = vunpack.c.l.b16 %v404
  %v1661 = vunpack.c.l.b16 %v405
  %v1662 = vunpack.c.l.b16 %v406
  %v1663 = vunpack.c.l.b16 %v407
  %v1664 = vunpack.c.l.b16 %v408
  %v1665 = vunpack.c.l.b16 %v409
  %v1666 = vunpack.c.l.b16 %v410
  %v1667 = vunpack.c.l.b16 %v411
  %v1668 = vunpack.c.l.b16 %v412
  %v1669 = vunpack.c.l.b16 %v413
  %v1670 = vunpack.c.l.b16 %v414
  %v1671 = vunpack.c.l.b16 %v415
  %v1672 = vunpack.c.l.b16 %v416
  %v1673 = vunpack.c.l.b16 %v417
  %v1674 = vunpack.c.l.b16 %v418
  %v1675 = vunpack.c.l.b16 %v419
  %v1676 = vunpack.c.l.b16 %v420
  %v1677 = vunpack.c.l.b16 %v421
  %v1678 = vunpack.c.l.b16 %v422
  %v1679 = vunpack.c.l.b16 %v423
  %v1680 = vunpack.c.l.b16 %v424
  %v1681 = vunpack.c.l.b16 %v425
  %v1682 = vunpack.c.l.b16 %v426
  %v1683 = vunpack.c.l.b16 %v427
  %v1684 = vunpack.c.l.b16 %v428
  %v1685 = vunpack.c.l.b16 %v429
  %v1686 = vunpack.c.l.b16 %v430
  %v1687 = vunpack.c.l.b16 %v431
  %v1688 = vunpack.c.l.b16 %v432
  %v1689 = vunpack.c.l.b16 %v433
  %v1690 = vunpack.c.l.b16 %v434
  %v1691 = vunpack.c.l.b16 %v435
  %v1692 = vunpack.c.l.b16 %v436
  %v1693 = vunpack.c.l.b16 %v437
  %v1694 = vunpack.c.l.b16 %v438
  %v1695 = vunpack.c.l.b16 %v439
  %v1696 = vunpack.c.l.b16 %v440
  %v1697 = vunpack.c.l.b16 %v441
  %v1698 = vunpack.c.l.b16 %v442
  %v1699 = vunpack.c.l.b16 %v443
  %v1700 = vunpack.c.l.b16 %v444
  %v1701 = vunpack.c.l.b16 %v445
  %v1702 = vunpack.c.l.b16 %v446
  %v1703 = vunpack.c.l.b16 %v447
  %v1704 = vunpack.c.l.b16 %v448
  %v1705 = vunpack.c.l.b16 %v449
  %v1706 = vunpack.c.l.b16 %v450
  %v1707 = vunpack.c.l.b16 %v451
  %v1708 = vunpack.c.l.b16 %v452
  %v1709 = vunpack.c.l.b16 %v453
  %v1710 = vunpack.c.l.b16 %v454
  %v1711 = vunpack.c.l.b16 %v455
  %v1712 = vunpack.c.l.b16 %v456
  %v1713 = vunpack.c.l.b16 %v457
  %v1714 = vunpack.c.l.b16 %v458
  %v1715 = vunpack.c.l.b16 %v459
  %v1716 = vunpack.c.l.b16 %v460
  %v1717 = vunpack.c.l.b16 %v461
  %v1718 = vunpack.c.l.b16 %v462
  %v1719 = vunpack.c.l.b16 %v463
  %v1720 = vunpack.c.l.b16 %v464
  %v1721 = vunpack.c.l.b16 %v465
  %v1722 = vunpack.c.l.b16 %v466
  %v1723 = vunpack.c.l.b16 %v467
  %v1724 = vunpack.c.l.b16 %v468
  %v1725 = vunpack.c.l.b16 %v469
  %v1726 = vunpack.c.l.b16 %v470
  %v1727 = vunpack.c.l.b16 %v471
  %v1728 = vunpack.c.l.b16 %v472
  %v1729 = vunpack.c.l.b16 %v473
  %v1730 = vunpack.c.l.b16 %v474
  %v1731 = vunpack.c.l.b16 %v475
  %v1732 = vunpack.c.l.b16 %v476
  %v1733 = vunpack.c.l.b16 %v477
  %v1734 = vunpack.c.l.b16 %v478
  %v1735 = vunpack.c.l.b16 %v479
  %v1736 = vunpack.c.l.b16 %v480
  %v1737 = vunpack.c.l.b16 %v481
  %v1738 = vunpack.c.l.b16 %v482
  %v1739 = vunpack.c.l.b16 %v483
  %v1740 = vunpack.c.l.b16 %v484
  %v1741 = vunpack.c.l.b16 %v485
  %v1742 = vunpack.c.l.b16 %v486
  %v1743 = vunpack.c.l.b16 %v487
  %v1744 = vunpack.c.l.b16 %v488
  %v1745 = vunpack.c.l.b16 %v489
  %v1746 = vunpack.c.l.b16 %v490
  %v1747 = vunpack.c.l.b16 %v491
  %v1748 = vunpack.c.l.b16 %v492
  %v1749 = vunpack.c.l.b16 %v493
  %v1750 = vunpack.c.l.b16 %v494
  %v1751 = vunpack.c.l.b16 %v495
  %v1752 = vunpack.c.l.b16 %v496
  %v1753 = vunpack.c.l.b16 %v497
  %v1754 = vunpack.c.l.b16 %v498
  %v1755 = vunpack.c.l.b16 %v499
  %v1756 = vunpack.c.l.b16 %v500
  %v1757 = vunpack.c.l.b16 %v501
  %v1758 = vunpack.c.l.b16 %v502
  %v1759 = vunpack.c.l.b16 %v503
  %v1760 = vunpack.c.l.b16 %v504
  %v1761 = vunpack.c.l.b16 %v505
  %v1762 = vunpack.c.l.b16 %v506
  %v1763 = vunpack.c.l.b16 %v507
  %v1764 = vunpack.c.l.b16 %v508
  %v1765 = vunpack.c.l.b16 %v509
  %v1766 = vunpack.c.l.b16 %v510
  %v1767 = vunpack.c.l.b16 %v511
  %v1768 = vunpack.c.l.b16 %v512
  %v1769 = vunpack.c.l.b16 %v513
  %v1770 = vunpack.c.l.b16 %v514
  %v1771 = vunpack.c.l.b16 %v515
  %v1772 = vunpack.c.l.b16 %v516
  %v1773 = vunpack.c.l.b16 %v517
  %v1774 = vunpack.c.l.b16 %v518
  %v1775 = vunpack.c.l.b16 %v519
  %v1776 = vunpack.c.l.b16 %v520
  %v1777 = vunpack.c.l.b16 %v521
  %v1778 = vunpack.c.l.b16 %v522
  %v1779 = vunpack.c.l.b16 %v523
  %v1780 = vunpack.c.l.b16 %v524
  %v1781 = vunpack.c.l.b16 %v525
  %v1782 = vunpack.c.l.b16 %v526
  %v1783 = vunpack.c.l.b16 %v527
  %v1784 = vunpack.c.l.b16 %v528
  %v1785 = vunpack.c.l.b16 %v529
  %v1786 = vunpack.c.l.b16 %v530
  %v1787 = vunpack.c.l.b16 %v531
  %v1788 = vunpack.c.l.b16 %v532
  %v1789 = vunpack.c.l.b16 %v533
  %v1790 = vunpack.c.l.b16 %v534
  %v1791 = vunpack.c.l.b16 %v535
  %v1792 = vunpack.c.l.b16 %v536
  %v1793 = vunpack.c.l.b16 %v537
  %v1794 = vunpack.c.l.b16 %v538
  %v1795 = vunpack.c.l.b16 %v539
  %v1796 = vunpack.c.l.b16 %v540
  %v1797 = vunpack.c.l.b16 %v541
  %v1798 = vunpack.c.l.b16 %v542
  %v1799 = vunpack.c.l.b16 %v543
  %v1800 = vpack.c.b16 %v1289, %v1288
  %v1801 = vpack.c.b16 %v1291, %v1290
  %v1802 = vpack.c.b16 %v1293, %v1292
  %v1803 = vpack.c.b16 %v1295, %v1294
  %v1804 = vpack.c.b16 %v1297, %v1296
  %v1805 = vpack.c.b16 %v1299, %v1298
  %v1806 = vpack.c.b16 %v1301, %v1300
  %v1807 = vpack.c.b16 %v1303, %v1302
  %v1808 = vpack.c.b16 %v1305, %v1304
  %v1809 = vpack.c.b16 %v1307, %v1306
  %v1810 = vpack.c.b16 %v1309, %v1308
  %v1811 = vpack.c.b16 %v1311, %v1310
  %v1812 = vpack.c.b16 %v1313, %v1312
  %v1813 = vpack.c.b16 %v1315, %v1314
  %v1814 = vpack.c.b16 %v1317, %v1316
  %v1815 = vpack.c.b16 %v1319, %v1318
  %v1816 = vpack.c.b16 %v1321, %v1320
  %v1817 = vpack.c.b16 %v1323, %v1322
  %v1818 = vpack.c.b16 %v1325, %v1324
  %v1819 = vpack.c.b16 %v1327, %v1326
  %v1820 = vpack.c.b16 %v1329, %v1328
  %v1821 = vpack.c.b16 %v1331, %v1330
  %v1822 = vpack.c.b16 %v1333, %v1332
  %v1823 = vpack.c.b16 %v1335, %v1334
  %v1824 = vpack.c.b16 %v1337, %v1336
  %v1825 = vpack.c.b16 %v1339, %v1338
  %v1826 = vpack.c.b16 %v1341, %v1340
  %v1827 = vpack.c.b16 %v1343, %v1342
  %v1828 = vpack.c.b16 %v1345, %v1344
  %v1829 = vpack.c.b16 %v1347, %v1346
  %v1830 = vpack.c.b16 %v1349, %v1348
  %v1831 = vpack.c.b16 %v1351, %v1350
  %v1832 = vpack.c.b16 %v1353, %v1352
  %v1833 = vpack.c.b16 %v1355, %v1354
  %v1834 = vpack.c.b16 %v1357, %v1356
  %v1835 = vpack.c.b16 %v1359, %v1358
  %v1836 = vpack.c.b16 %v1361, %v1360
  %v1837 = vpack.c.b16 %v1363, %v1362
  %v1838 = vpack.c.b16 %v1365, %v1364
  %v1839 = vpack.c.b16 %v1367, %v1366
  %v1840 = vpack.c.b16 %v1369, %v1368
  %v1841 = vpack.c.b16 %v1371, %v1370
  %v1842 = vpack.c.b16 %v1373, %v1372
  %v1843 = vpack.c.b16 %v1375, %v1374
  %v1844 = vpack.c.b16 %v1377, %v1376
  %v1845 = vpack.c.b16 %v1379, %v1378
  %v1846 = vpack.c.b16 %v1381, %v1380
  %v1847 = vpack.c.b16 %v1383, %v1382
  %v1848 = vpack.c.b16 %v1385, %v1384
  %v1849 = vpack.c.b16 %v1387, %v1386
  %v1850 = vpack.c.b16 %v1389, %v1388
  %v1851 = vpack.c.b16 %v1391, %v1390
  %v1852 = vpack.c.b16 %v1393, %v1392
  %v1853 = vpack.c.b16 %v1395, %v1394
  %v1854 = vpack.c.b16 %v1397, %v1396
  %v1855 = vpack.c.b16 %v1399, %v1398
  %v1856 = vpack.c.b16 %v1401, %v1400
  %v1857 = vpack.c.b16 %v1403, %v1402
  %v1858 = vpack.c.b16 %v1405, %v1404
  %v1859 = vpack.c.b16 %v1407, %v1406
  %v1860 = vpack.c.b16 %v1409, %v1408
  %v1861 = vpack.c.b16 %v1411, %v1410
  %v1862 = vpack.c.b16 %v1413, %v1412
  %v1863 = vpack.c.b16 %v1415, %v1414
  %v1864 = vpack.c.b16 %v1417, %v1416
  %v1865 = vpack.c.b16 %v1419, %v1418
  %v1866 = vpack.c.b16 %v1421, %v1420
  %v1867 = vpack.c.b16 %v1423, %v1422
  %v1868 = vpack.c.b16 %v1425, %v1424
  %v1869 = vpack.c.b16 %v1427, %v1426
  %v1870 = vpack.c.b16 %v1429, %v1428
  %v1871 = vpack.c.b16 %v1431, %v1430
  %v1872 = vpack.c.b16 %v1433, %v1432
  %v1873 = vpack.c.b16 %v1435, %v1434
  %v1874 = vpack.c.b16 %v1437, %v1436
  %v1875 = vpack.c.b16 %v1439, %v1438
  %v1876 = vpack.c.b16 %v1441, %v1440
  %v1877 = vpack.c.b16 %v1443, %v1442
  %v1878 = vpack.c.b16 %v1445, %v1444
  %v1879 = vpack.c.b16 %v1447, %v1446
  %v1880 = vpack.c.b16 %v1449, %v1448
  %v1881 = vpack.c.b16 %v1451, %v1450
  %v1882 = vpack.c.b16 %v1453, %v1452
  %v1883 = vpack.c.b16 %v1455, %v1454
  %v1884 = vpack.c.b16 %v1457, %v1456
  %v1885 = vpack.c.b16 %v1459, %v1458
  %v1886 = vpack.c.b16 %v1461, %v1460
  %v1887 = vpack.c.b16 %v1463, %v1462
  %v1888 = vpack.c.b16 %v1465, %v1464
  %v1889 = vpack.c.b16 %v1467, %v1466
  %v1890 = vpack.c.b16 %v1469, %v1468
  %v1891 = vpack.c.b16 %v1471, %v1470
  %v1892 = vpack.c.b16 %v1473, %v1472
  %v1893 = vpack.c.b16 %v1475, %v1474
  %v1894 = vpack.c.b16 %v1477, %v1476
  %v1895 = vpack.c.b16 %v1479, %v1478
  %v1896 = vpack.c.b16 %v1481, %v1480
  %v1897 = vpack.c.b16 %v1483, %v1482
  %v1898 = vpack.c.b16 %v1485, %v1484
  %v1899 = vpack.c.b16 %v1487, %v1486
  %v1900 = vpack.c.b16 %v1489, %v1488
  %v1901 = vpack.c.b16 %v1491, %v1490
  %v1902 = vpack.c.b16 %v1493, %v1492
  %v1903 = vpack.c.b16 %v1495, %v1494
  %v1904 = vpack.c.b16 %v1497, %v1496
  %v1905 = vpack.c.b16 %v1499, %v1498
  %v1906 = vpack.c.b16 %v1501, %v1500
  %v1907 = vpack.c.b16 %v1503, %v1502
  %v1908 = vpack.c.b16 %v1505, %v1504
  %v1909 = vpack.c.b16 %v1507, %v1506
  %v1910 = vpack.c.b16 %v1509, %v1508
  %v1911 = vpack.c.b16 %v1511, %v1510
  %v1912 = vpack.c.b16 %v1513, %v1512
  %v1913 = vpack.c.b16 %v1515, %v1514
  %v1914 = vpack.c.b16 %v1517, %v1516
  %v1915 = vpack.c.b16 %v1519, %v1518
  %v1916 = vpack.c.b16 %v1521, %v1520
  %v1917 = vpack.c.b16 %v1523, %v1522
  %v1918 = vpack.c.b16 %v1525, %v1524
  %v1919 = vpack.c.b16 %v1527, %v1526
  %v1920 = vpack.c.b16 %v1529, %v1528
  %v1921 = vpack.c.b16 %v1531, %v1530
  %v1922 = vpack.c.b16 %v1533, %v1532
  %v1923 = vpack.c.b16 %v1535, %v1534
  %v1924 = vpack.c.b16 %v1537, %v1536
  %v1925 = vpack.c.b16 %v1539, %v1538
  %v1926 = vpack.c.b16 %v1541, %v1540
  %v1927 = vpack.c.b16 %v1543, %v1542
  %v1928 = vpack.c.b16 %v1545, %v1544
  %v1929 = vpack.c.b16 %v1547, %v1546
  %v1930 = vpack.c.b16 %v1549, %v1548
  %v1931 = vpack.c.b16 %v1551, %v1550
  %v1932 = vpack.c.b16 %v1553, %v1552
  %v1933 = vpack.c.b16 %v1555, %v1554
  %v1934 = vpack.c.b16 %v1557, %v1556
  %v1935 = vpack.c.b16 %v1559, %v1558
  %v1936 = vpack.c.b16 %v1561, %v1560
  %v1937 = vpack.c.b16 %v1563, %v1562
  %v1938 = vpack.c.b16 %v1565, %v1564
  %v1939 = vpack.c.b16 %v1567, %v1566
  %v1940 = vpack.c.b16 %v1569, %v1568
  %v1941 = vpack.c.b16 %v1571, %v1570
  %v1942 = vpack.c.b16 %v1573, %v1572
  %v1943 = vpack.c.b16 %v1575, %v1574
  %v1944 = vpack.c.b16 %v1577, %v1576
  %v1945 = vpack.c.b16 %v1579, %v1578
  %v1946 = vpack.c.b16 %v1581, %v1580
  %v1947 = vpack.c.b16 %v1583, %v1582
  %v1948 = vpack.c.b16 %v1585, %v1584
  %v1949 = vpack.c.b16 %v1587, %v1586
  %v1950 = vpack.c.b16 %v1589, %v1588
  %v1951 = vpack.c.b16 %v1591, %v1590
  %v1952 = vpack.c.b16 %v1593, %v1592
  %v1953 = vpack.c.b16 %v1595, %v1594
  %v1954 = vpack.c.b16 %v1597, %v1596
  %v1955 = vpack.c.b16 %v1599, %v1598
  %v1956 = vpack.c.b16 %v1601, %v1600
  %v1957 = vpack.c.b16 %v1603, %v1602
  %v1958 = vpack.c.b16 %v1605, %v1604
  %v1959 = vpack.c.b16 %v1607, %v1606
  %v1960 = vpack.c.b16 %v1609, %v1608
  %v1961 = vpack.c.b16 %v1611, %v1610
  %v1962 = vpack.c.b16 %v1613, %v1612
  %v1963 = vpack.c.b16 %v1615, %v1614
  %v1964 = vpack.c.b16 %v1617, %v1616
  %v1965 = vpack.c.b16 %v1619, %v1618
  %v1966 = vpack.c.b16 %v1621, %v1620
  %v1967 = vpack.c.b16 %v1623, %v1622
  %v1968 = vpack.c.b16 %v1625, %v1624
  %v1969 = vpack.c.b16 %v1627, %v1626
  %v1970 = vpack.c.b16 %v1629, %v1628
  %v1971 = vpack.c.b16 %v1631, %v1630
  %v1972 = vpack.c.b16 %v1633, %v1632
  %v1973 = vpack.c.b16 %v1635, %v1634
  %v1974 = vpack.c.b16 %v1637, %v1636
  %v1975 = vpack.c.b16 %v1639, %v1638
  %v1976 = vpack.c.b16 %v1641, %v1640
  %v1977 = vpack.c.b16 %v1643, %v1642
  %v1978 = vpack.c.b16 %v1645, %v1644
  %v1979 = vpack.c.b16 %v1647, %v1646
  %v1980 = vpack.c.b16 %v1649, %v1648
  %v1981 = vpack.c.b16 %v1651, %v1650
  %v1982 = vpack.c.b16 %v1653, %v1652
  %v1983 = vpack.c.b16 %v1655, %v1654
  %v1984 = vpack.c.b16 %v1657, %v1656
  %v1985 = vpack.c.b16 %v1659, %v1658
  %v1986 = vpack.c.b16 %v1661, %v1660
  %v1987 = vpack.c.b16 %v1663, %v1662
  %v1988 = vpack.c.b16 %v1665, %v1664
  %v1989 = vpack.c.b16 %v1667, %v1666
  %v1990 = vpack.c.b16 %v1669, %v1668
  %v1991 = vpack.c.b16 %v1671, %v1670
  %v1992 = vpack.c.b16 %v1673, %v1672
  %v1993 = vpack.c.b16 %v1675, %v1674
  %v1994 = vpack.c.b16 %v1677, %v1676
  %v1995 = vpack.c.b16 %v1679, %v1678
  %v1996 = vpack.c.b16 %v1681, %v1680
  %v1997 = vpack.c.b16 %v1683, %v1682
  %v1998 = vpack.c.b16 %v1685, %v1684
  %v1999 = vpack.c.b16 %v1687, %v1686
  %v2000 = vpack.c.b16 %v1689, %v1688
  %v2001 = vpack.c.b16 %v1691, %v1690
  %v2002 = vpack.c.b16 %v1693, %v1692
  %v2003 = vpack.c.b16 %v1695, %v1694
  %v2004 = vpack.c.b16 %v1697, %v1696
  %v2005 = vpack.c.b16 %v1699, %v1698
  %v2006 = vpack.c.b16 %v1701, %v1700
  %v2007 = vpack.c.b16 %v1703, %v1702
  %v2008 = vpack.c.b16 %v1705, %v1704
  %v2009 = vpack.c.b16 %v1707, %v1706
  %v2010 = vpack.c.b16 %v1709, %v1708
  %v2011 = vpack.c.b16 %v1711, %v1710
  %v2012 = vpack.c.b16 %v1713, %v1712
  %v2013 = vpack.c.b16 %v1715, %v1714
  %v2014 = vpack.c.b16 %v1717, %v1716
  %v2015 = vpack.c.b16 %v1719, %v1718
  %v2016 = vpack.c.b16 %v1721, %v1720
  %v2017 = vpack.c.b16 %v1723, %v1722
  %v2018 = vpack.c.b16 %v1725, %v1724
  %v2019 = vpack.c.b16 %v1727, %v1726
  %v2020 = vpack.c.b16 %v1729, %v1728
  %v2021 = vpack.c.b16 %v1731, %v1730
  %v2022 = vpack.c.b16 %v1733, %v1732
  %v2023 = vpack.c.b16 %v1735, %v1734
  %v2024 = vpack.c.b16 %v1737, %v1736
  %v2025 = vpack.c.b16 %v1739, %v1738
  %v2026 = vpack.c.b16 %v1741, %v1740
  %v2027 = vpack.c.b16 %v1743, %v1742
  %v2028 = vpack.c.b16 %v1745, %v1744
  %v2029 = vpack.c.b16 %v1747, %v1746
  %v2030 = vpack.c.b16 %v1749, %v1748
  %v2031 = vpack.c.b16 %v1751, %v1750
  %v2032 = vpack.c.b16 %v1753, %v1752
  %v2033 = vpack.c.b16 %v1755, %v1754
  %v2034 = vpack.c.b16 %v1757, %v1756
  %v2035 = vpack.c.b16 %v1759, %v1758
  %v2036 = vpack.c.b16 %v1761, %v1760
  %v2037 = vpack.c.b16 %v1763, %v1762
  %v2038 = vpack.c.b16 %v1765, %v1764
  %v2039 = vpack.c.b16 %v1767, %v1766
  %v2040 = vpack.c.b16 %v1769, %v1768
  %v2041 = vpack.c.b16 %v1771, %v1770
  %v2042 = vpack.c.b16 %v1773, %v1772
  %v2043 = vpack.c.b16 %v1775, %v1774
  %v2044 = vpack.c.b16 %v1777, %v1776
  %v2045 = vpack.c.b16 %v1779, %v1778
  %v2046 = vpack.c.b16 %v1781, %v1780
  %v2047 = vpack.c.b16 %v1783, %v1782
  %v2048 = vpack.c.b16 %v1785, %v1784
  %v2049 = vpack.c.b16 %v1787, %v1786
  %v2050 = vpack.c.b16 %v1789, %v1788
  %v2051 = vpack.c.b16 %v1791, %v1790
  %v2052 = vpack.c.b16 %v1793, %v1792
  %v2053 = vpack.c.b16 %v1795, %v1794
  %v2054 = vpack.c.b16 %v1797, %v1796
  %v2055 = vpack.c.b16 %v1799, %v1798
  %2312 = vmatprep.subr.bf16.mxu0 0
  %2313 = vmatpush1.bf16.msra.mxu0 %v1800
  %2314 = vmatprep.subr.bf16.mxu0 0
  %2315 = vmatpush1.bf16.msra.mxu0 %v1801
  %2316 = vmatprep.subr.bf16.mxu0 0
  %2317 = vmatpush1.bf16.msra.mxu0 %v1802
  %2318 = vmatprep.subr.bf16.mxu0 0
  %2319 = vmatpush1.bf16.msra.mxu0 %v1803
  %2320 = vmatprep.subr.bf16.mxu0 0
  %2321 = vmatpush1.bf16.msra.mxu0 %v1804
  %2322 = vmatprep.subr.bf16.mxu0 0
  %2323 = vmatpush1.bf16.msra.mxu0 %v1805
  %2324 = vmatprep.subr.bf16.mxu0 0
  %2325 = vmatpush1.bf16.msra.mxu0 %v1806
  %2326 = vmatprep.subr.bf16.mxu0 0
  %2327 = vmatpush1.bf16.msra.mxu0 %v1807
  %2328 = vmatprep.subr.bf16.mxu0 0
  %2329 = vmatpush1.bf16.msra.mxu0 %v1808
  %2330 = vmatprep.subr.bf16.mxu0 0
  %2331 = vmatpush1.bf16.msra.mxu0 %v1809
  %2332 = vmatprep.subr.bf16.mxu0 0
  %2333 = vmatpush1.bf16.msra.mxu0 %v1810
  %2334 = vmatprep.subr.bf16.mxu0 0
  %2335 = vmatpush1.bf16.msra.mxu0 %v1811
  %2336 = vmatprep.subr.bf16.mxu0 0
  %2337 = vmatpush1.bf16.msra.mxu0 %v1812
  %2338 = vmatprep.subr.bf16.mxu0 0
  %2339 = vmatpush1.bf16.msra.mxu0 %v1813
  %2340 = vmatprep.subr.bf16.mxu0 0
  %2341 = vmatpush1.bf16.msra.mxu0 %v1814
  %2342 = vmatprep.subr.bf16.mxu0 0
  %2343 = vmatpush1.bf16.msra.mxu0 %v1815
  %2344 = vmatprep.mubr.bf16.mxu0 %v585
  %2345 = vmatmul.mubr.bf16.gmra.mrb[0].mxu0 %v571
  %v2346 = vpop.f32.mrb[0].mxu0
  %v2347 = vadd.f32 0.0, %v2346
  %v2348 = vpop.f32.mrb[0].mxu0
  %v2349 = vpop.f32.mrb[0].mxu0
  %v2350 = vpop.f32.mrb[0].mxu0
  %2351 = vdwg.mxu0
  %2352 = vmatprep.subr.bf16.mxu0 0
  %2353 = vmatpush1.bf16.msra.mxu0 %v1816
  %2354 = vmatprep.subr.bf16.mxu0 0
  %2355 = vmatpush1.bf16.msra.mxu0 %v1817
  %2356 = vmatprep.subr.bf16.mxu0 0
  %2357 = vmatpush1.bf16.msra.mxu0 %v1818
  %2358 = vmatprep.subr.bf16.mxu0 0
  %2359 = vmatpush1.bf16.msra.mxu0 %v1819
  %2360 = vmatprep.subr.bf16.mxu0 0
  %2361 = vmatpush1.bf16.msra.mxu0 %v1820
  %2362 = vmatprep.subr.bf16.mxu0 0
  %2363 = vmatpush1.bf16.msra.mxu0 %v1821
  %2364 = vmatprep.subr.bf16.mxu0 0
  %2365 = vmatpush1.bf16.msra.mxu0 %v1822
  %2366 = vmatprep.subr.bf16.mxu0 0
  %2367 = vmatpush1.bf16.msra.mxu0 %v1823
  %2368 = vmatprep.subr.bf16.mxu0 0
  %2369 = vmatpush1.bf16.msra.mxu0 %v1824
  %2370 = vmatprep.subr.bf16.mxu0 0
  %2371 = vmatpush1.bf16.msra.mxu0 %v1825
  %2372 = vmatprep.subr.bf16.mxu0 0
  %2373 = vmatpush1.bf16.msra.mxu0 %v1826
  %2374 = vmatprep.subr.bf16.mxu0 0
  %2375 = vmatpush1.bf16.msra.mxu0 %v1827
  %2376 = vmatprep.subr.bf16.mxu0 0
  %2377 = vmatpush1.bf16.msra.mxu0 %v1828
  %2378 = vmatprep.subr.bf16.mxu0 0
  %2379 = vmatpush1.bf16.msra.mxu0 %v1829
  %2380 = vmatprep.subr.bf16.mxu0 0
  %2381 = vmatpush1.bf16.msra.mxu0 %v1830
  %2382 = vmatprep.subr.bf16.mxu0 0
  %2383 = vmatpush1.bf16.msra.mxu0 %v1831
  %2384 = vmatprep.mubr.bf16.mxu0 %v595
  %2385 = vmatmul.mubr.bf16.gmra.mrb[0].mxu0 %v593
  %v2386 = vpop.f32.mrb[0].mxu0
  %v2387 = vadd.f32 %v2347, %v2386
  %v2388 = vpop.f32.mrb[0].mxu0
  %v2389 = vpop.f32.mrb[0].mxu0
  %v2390 = vpop.f32.mrb[0].mxu0
  %2391 = vdwg.mxu0
  %2392 = vmatprep.subr.bf16.mxu0 0
  %2393 = vmatpush1.bf16.msra.mxu0 %v1832
  %2394 = vmatprep.subr.bf16.mxu0 0
  %2395 = vmatpush1.bf16.msra.mxu0 %v1833
  %2396 = vmatprep.subr.bf16.mxu0 0
  %2397 = vmatpush1.bf16.msra.mxu0 %v1834
  %2398 = vmatprep.subr.bf16.mxu0 0
  %2399 = vmatpush1.bf16.msra.mxu0 %v1835
  %2400 = vmatprep.subr.bf16.mxu0 0
  %2401 = vmatpush1.bf16.msra.mxu0 %v1836
  %2402 = vmatprep.subr.bf16.mxu0 0
  %2403 = vmatpush1.bf16.msra.mxu0 %v1837
  %2404 = vmatprep.subr.bf16.mxu0 0
  %2405 = vmatpush1.bf16.msra.mxu0 %v1838
  %2406 = vmatprep.subr.bf16.mxu0 0
  %2407 = vmatpush1.bf16.msra.mxu0 %v1839
  %2408 = vmatprep.subr.bf16.mxu0 0
  %2409 = vmatpush1.bf16.msra.mxu0 %v1840
  %2410 = vmatprep.subr.bf16.mxu0 0
  %2411 = vmatpush1.bf16.msra.mxu0 %v1841
  %2412 = vmatprep.subr.bf16.mxu0 0
  %2413 = vmatpush1.bf16.msra.mxu0 %v1842
  %2414 = vmatprep.subr.bf16.mxu0 0
  %2415 = vmatpush1.bf16.msra.mxu0 %v1843
  %2416 = vmatprep.subr.bf16.mxu0 0
  %2417 = vmatpush1.bf16.msra.mxu0 %v1844
  %2418 = vmatprep.subr.bf16.mxu0 0
  %2419 = vmatpush1.bf16.msra.mxu0 %v1845
  %2420 = vmatprep.subr.bf16.mxu0 0
  %2421 = vmatpush1.bf16.msra.mxu0 %v1846
  %2422 = vmatprep.subr.bf16.mxu0 0
  %2423 = vmatpush1.bf16.msra.mxu0 %v1847
  %2424 = vmatprep.mubr.bf16.mxu0 %v592
  %2425 = vmatmul.mubr.bf16.gmra.mrb[0].mxu0 %v578
  %v2426 = vpop.f32.mrb[0].mxu0
  %v2427 = vadd.f32 %v2387, %v2426
  %v2428 = vpop.f32.mrb[0].mxu0
  %v2429 = vpop.f32.mrb[0].mxu0
  %v2430 = vpop.f32.mrb[0].mxu0
  %2431 = vdwg.mxu0
  %2432 = vmatprep.subr.bf16.mxu0 0
  %2433 = vmatpush1.bf16.msra.mxu0 %v1848
  %2434 = vmatprep.subr.bf16.mxu0 0
  %2435 = vmatpush1.bf16.msra.mxu0 %v1849
  %2436 = vmatprep.subr.bf16.mxu0 0
  %2437 = vmatpush1.bf16.msra.mxu0 %v1850
  %2438 = vmatprep.subr.bf16.mxu0 0
  %2439 = vmatpush1.bf16.msra.mxu0 %v1851
  %2440 = vmatprep.subr.bf16.mxu0 0
  %2441 = vmatpush1.bf16.msra.mxu0 %v1852
  %2442 = vmatprep.subr.bf16.mxu0 0
  %2443 = vmatpush1.bf16.msra.mxu0 %v1853
  %2444 = vmatprep.subr.bf16.mxu0 0
  %2445 = vmatpush1.bf16.msra.mxu0 %v1854
  %2446 = vmatprep.subr.bf16.mxu0 0
  %2447 = vmatpush1.bf16.msra.mxu0 %v1855
  %2448 = vmatprep.subr.bf16.mxu0 0
  %2449 = vmatpush1.bf16.msra.mxu0 %v1856
  %2450 = vmatprep.subr.bf16.mxu0 0
  %2451 = vmatpush1.bf16.msra.mxu0 %v1857
  %2452 = vmatprep.subr.bf16.mxu0 0
  %2453 = vmatpush1.bf16.msra.mxu0 %v1858
  %2454 = vmatprep.subr.bf16.mxu0 0
  %2455 = vmatpush1.bf16.msra.mxu0 %v1859
  %2456 = vmatprep.subr.bf16.mxu0 0
  %2457 = vmatpush1.bf16.msra.mxu0 %v1860
  %2458 = vmatprep.subr.bf16.mxu0 0
  %2459 = vmatpush1.bf16.msra.mxu0 %v1861
  %2460 = vmatprep.subr.bf16.mxu0 0
  %2461 = vmatpush1.bf16.msra.mxu0 %v1862
  %2462 = vmatprep.subr.bf16.mxu0 0
  %2463 = vmatpush1.bf16.msra.mxu0 %v1863
  %2464 = vmatprep.mubr.bf16.mxu0 %v596
  %2465 = vmatmul.mubr.bf16.gmra.mrb[0].mxu0 %v594
  %v2466 = vpop.f32.mrb[0].mxu0
  %v2467 = vadd.f32 %v2427, %v2466
  %v2468 = vpop.f32.mrb[0].mxu0
  %v2469 = vpop.f32.mrb[0].mxu0
  %v2470 = vpop.f32.mrb[0].mxu0
  %2471 = vdwg.mxu0
  %2472 = vmatprep.subr.bf16.mxu0 0
  %2473 = vmatpush1.bf16.msra.mxu0 %v1864
  %2474 = vmatprep.subr.bf16.mxu0 0
  %2475 = vmatpush1.bf16.msra.mxu0 %v1865
  %2476 = vmatprep.subr.bf16.mxu0 0
  %2477 = vmatpush1.bf16.msra.mxu0 %v1866
  %2478 = vmatprep.subr.bf16.mxu0 0
  %2479 = vmatpush1.bf16.msra.mxu0 %v1867
  %2480 = vmatprep.subr.bf16.mxu0 0
  %2481 = vmatpush1.bf16.msra.mxu0 %v1868
  %2482 = vmatprep.subr.bf16.mxu0 0
  %2483 = vmatpush1.bf16.msra.mxu0 %v1869
  %2484 = vmatprep.subr.bf16.mxu0 0
  %2485 = vmatpush1.bf16.msra.mxu0 %v1870
  %2486 = vmatprep.subr.bf16.mxu0 0
  %2487 = vmatpush1.bf16.msra.mxu0 %v1871
  %2488 = vmatprep.subr.bf16.mxu0 0
  %2489 = vmatpush1.bf16.msra.mxu0 %v1872
  %2490 = vmatprep.subr.bf16.mxu0 0
  %2491 = vmatpush1.bf16.msra.mxu0 %v1873
  %2492 = vmatprep.subr.bf16.mxu0 0
  %2493 = vmatpush1.bf16.msra.mxu0 %v1874
  %2494 = vmatprep.subr.bf16.mxu0 0
  %2495 = vmatpush1.bf16.msra.mxu0 %v1875
  %2496 = vmatprep.subr.bf16.mxu0 0
  %2497 = vmatpush1.bf16.msra.mxu0 %v1876
  %2498 = vmatprep.subr.bf16.mxu0 0
  %2499 = vmatpush1.bf16.msra.mxu0 %v1877
  %2500 = vmatprep.subr.bf16.mxu0 0
  %2501 = vmatpush1.bf16.msra.mxu0 %v1878
  %2502 = vmatprep.subr.bf16.mxu0 0
  %2503 = vmatpush1.bf16.msra.mxu0 %v1879
  %2504 = vmatprep.mubr.bf16.mxu0 %v634
  %2505 = vmatmul.mubr.bf16.gmra.mrb[0].mxu0 %v620
  %v2506 = vpop.f32.mrb[0].mxu0
  %v2507 = vadd.f32 %v2467, %v2506
  %v2508 = vpop.f32.mrb[0].mxu0
  %v2509 = vpop.f32.mrb[0].mxu0
  %v2510 = vpop.f32.mrb[0].mxu0
  %2511 = vdwg.mxu0
  %2512 = vmatprep.subr.bf16.mxu0 0
  %2513 = vmatpush1.bf16.msra.mxu0 %v1880
  %2514 = vmatprep.subr.bf16.mxu0 0
  %2515 = vmatpush1.bf16.msra.mxu0 %v1881
  %2516 = vmatprep.subr.bf16.mxu0 0
  %2517 = vmatpush1.bf16.msra.mxu0 %v1882
  %2518 = vmatprep.subr.bf16.mxu0 0
  %2519 = vmatpush1.bf16.msra.mxu0 %v1883
  %2520 = vmatprep.subr.bf16.mxu0 0
  %2521 = vmatpush1.bf16.msra.mxu0 %v1884
  %2522 = vmatprep.subr.bf16.mxu0 0
  %2523 = vmatpush1.bf16.msra.mxu0 %v1885
  %2524 = vmatprep.subr.bf16.mxu0 0
  %2525 = vmatpush1.bf16.msra.mxu0 %v1886
  %2526 = vmatprep.subr.bf16.mxu0 0
  %2527 = vmatpush1.bf16.msra.mxu0 %v1887
  %2528 = vmatprep.subr.bf16.mxu0 0
  %2529 = vmatpush1.bf16.msra.mxu0 %v1888
  %2530 = vmatprep.subr.bf16.mxu0 0
  %2531 = vmatpush1.bf16.msra.mxu0 %v1889
  %2532 = vmatprep.subr.bf16.mxu0 0
  %2533 = vmatpush1.bf16.msra.mxu0 %v1890
  %2534 = vmatprep.subr.bf16.mxu0 0
  %2535 = vmatpush1.bf16.msra.mxu0 %v1891
  %2536 = vmatprep.subr.bf16.mxu0 0
  %2537 = vmatpush1.bf16.msra.mxu0 %v1892
  %2538 = vmatprep.subr.bf16.mxu0 0
  %2539 = vmatpush1.bf16.msra.mxu0 %v1893
  %2540 = vmatprep.subr.bf16.mxu0 0
  %2541 = vmatpush1.bf16.msra.mxu0 %v1894
  %2542 = vmatprep.subr.bf16.mxu0 0
  %2543 = vmatpush1.bf16.msra.mxu0 %v1895
  %2544 = vmatprep.mubr.bf16.mxu0 %v644
  %2545 = vmatmul.mubr.bf16.gmra.mrb[0].mxu0 %v642
  %v2546 = vpop.f32.mrb[0].mxu0
  %v2547 = vadd.f32 %v2507, %v2546
  %v2548 = vpop.f32.mrb[0].mxu0
  %v2549 = vpop.f32.mrb[0].mxu0
  %v2550 = vpop.f32.mrb[0].mxu0
  %2551 = vdwg.mxu0
  %2552 = vmatprep.subr.bf16.mxu0 0
  %2553 = vmatpush1.bf16.msra.mxu0 %v1896
  %2554 = vmatprep.subr.bf16.mxu0 0
  %2555 = vmatpush1.bf16.msra.mxu0 %v1897
  %2556 = vmatprep.subr.bf16.mxu0 0
  %2557 = vmatpush1.bf16.msra.mxu0 %v1898
  %2558 = vmatprep.subr.bf16.mxu0 0
  %2559 = vmatpush1.bf16.msra.mxu0 %v1899
  %2560 = vmatprep.subr.bf16.mxu0 0
  %2561 = vmatpush1.bf16.msra.mxu0 %v1900
  %2562 = vmatprep.subr.bf16.mxu0 0
  %2563 = vmatpush1.bf16.msra.mxu0 %v1901
  %2564 = vmatprep.subr.bf16.mxu0 0
  %2565 = vmatpush1.bf16.msra.mxu0 %v1902
  %2566 = vmatprep.subr.bf16.mxu0 0
  %2567 = vmatpush1.bf16.msra.mxu0 %v1903
  %2568 = vmatprep.subr.bf16.mxu0 0
  %2569 = vmatpush1.bf16.msra.mxu0 %v1904
  %2570 = vmatprep.subr.bf16.mxu0 0
  %2571 = vmatpush1.bf16.msra.mxu0 %v1905
  %2572 = vmatprep.subr.bf16.mxu0 0
  %2573 = vmatpush1.bf16.msra.mxu0 %v1906
  %2574 = vmatprep.subr.bf16.mxu0 0
  %2575 = vmatpush1.bf16.msra.mxu0 %v1907
  %2576 = vmatprep.subr.bf16.mxu0 0
  %2577 = vmatpush1.bf16.msra.mxu0 %v1908
  %2578 = vmatprep.subr.bf16.mxu0 0
  %2579 = vmatpush1.bf16.msra.mxu0 %v1909
  %2580 = vmatprep.subr.bf16.mxu0 0
  %2581 = vmatpush1.bf16.msra.mxu0 %v1910
  %2582 = vmatprep.subr.bf16.mxu0 0
  %2583 = vmatpush1.bf16.msra.mxu0 %v1911
  %2584 = vmatprep.mubr.bf16.mxu0 %v641
  %2585 = vmatmul.mubr.bf16.gmra.mrb[0].mxu0 %v627
  %v2586 = vpop.f32.mrb[0].mxu0
  %v2587 = vadd.f32 %v2547, %v2586
  %v2588 = vpop.f32.mrb[0].mxu0
  %v2589 = vpop.f32.mrb[0].mxu0
  %v2590 = vpop.f32.mrb[0].mxu0
  %2591 = vdwg.mxu0
  %2592 = vmatprep.subr.bf16.mxu0 0
  %2593 = vmatpush1.bf16.msra.mxu0 %v1912
  %2594 = vmatprep.subr.bf16.mxu0 0
  %2595 = vmatpush1.bf16.msra.mxu0 %v1913
  %2596 = vmatprep.subr.bf16.mxu0 0
  %2597 = vmatpush1.bf16.msra.mxu0 %v1914
  %2598 = vmatprep.subr.bf16.mxu0 0
  %2599 = vmatpush1.bf16.msra.mxu0 %v1915
  %2600 = vmatprep.subr.bf16.mxu0 0
  %2601 = vmatpush1.bf16.msra.mxu0 %v1916
  %2602 = vmatprep.subr.bf16.mxu0 0
  %2603 = vmatpush1.bf16.msra.mxu0 %v1917
  %2604 = vmatprep.subr.bf16.mxu0 0
  %2605 = vmatpush1.bf16.msra.mxu0 %v1918
  %2606 = vmatprep.subr.bf16.mxu0 0
  %2607 = vmatpush1.bf16.msra.mxu0 %v1919
  %2608 = vmatprep.subr.bf16.mxu0 0
  %2609 = vmatpush1.bf16.msra.mxu0 %v1920
  %2610 = vmatprep.subr.bf16.mxu0 0
  %2611 = vmatpush1.bf16.msra.mxu0 %v1921
  %2612 = vmatprep.subr.bf16.mxu0 0
  %2613 = vmatpush1.bf16.msra.mxu0 %v1922
  %2614 = vmatprep.subr.bf16.mxu0 0
  %2615 = vmatpush1.bf16.msra.mxu0 %v1923
  %2616 = vmatprep.subr.bf16.mxu0 0
  %2617 = vmatpush1.bf16.msra.mxu0 %v1924
  %2618 = vmatprep.subr.bf16.mxu0 0
  %2619 = vmatpush1.bf16.msra.mxu0 %v1925
  %2620 = vmatprep.subr.bf16.mxu0 0
  %2621 = vmatpush1.bf16.msra.mxu0 %v1926
  %2622 = vmatprep.subr.bf16.mxu0 0
  %2623 = vmatpush1.bf16.msra.mxu0 %v1927
  %2624 = vmatprep.mubr.bf16.mxu0 %v645
  %2625 = vmatmul.mubr.bf16.gmra.mrb[0].mxu0 %v643
  %v2626 = vpop.f32.mrb[0].mxu0
  %v2627 = vadd.f32 %v2587, %v2626
  %v2628 = vpop.f32.mrb[0].mxu0
  %v2629 = vpop.f32.mrb[0].mxu0
  %v2630 = vpop.f32.mrb[0].mxu0
  %2631 = vdwg.mxu0
  %2632 = vmatprep.subr.bf16.mxu0 0
  %2633 = vmatpush1.bf16.msra.mxu0 %v1928
  %2634 = vmatprep.subr.bf16.mxu0 0
  %2635 = vmatpush1.bf16.msra.mxu0 %v1929
  %2636 = vmatprep.subr.bf16.mxu0 0
  %2637 = vmatpush1.bf16.msra.mxu0 %v1930
  %2638 = vmatprep.subr.bf16.mxu0 0
  %2639 = vmatpush1.bf16.msra.mxu0 %v1931
  %2640 = vmatprep.subr.bf16.mxu0 0
  %2641 = vmatpush1.bf16.msra.mxu0 %v1932
  %2642 = vmatprep.subr.bf16.mxu0 0
  %2643 = vmatpush1.bf16.msra.mxu0 %v1933
  %2644 = vmatprep.subr.bf16.mxu0 0
  %2645 = vmatpush1.bf16.msra.mxu0 %v1934
  %2646 = vmatprep.subr.bf16.mxu0 0
  %2647 = vmatpush1.bf16.msra.mxu0 %v1935
  %2648 = vmatprep.subr.bf16.mxu0 0
  %2649 = vmatpush1.bf16.msra.mxu0 %v1936
  %2650 = vmatprep.subr.bf16.mxu0 0
  %2651 = vmatpush1.bf16.msra.mxu0 %v1937
  %2652 = vmatprep.subr.bf16.mxu0 0
  %2653 = vmatpush1.bf16.msra.mxu0 %v1938
  %2654 = vmatprep.subr.bf16.mxu0 0
  %2655 = vmatpush1.bf16.msra.mxu0 %v1939
  %2656 = vmatprep.subr.bf16.mxu0 0
  %2657 = vmatpush1.bf16.msra.mxu0 %v1940
  %2658 = vmatprep.subr.bf16.mxu0 0
  %2659 = vmatpush1.bf16.msra.mxu0 %v1941
  %2660 = vmatprep.subr.bf16.mxu0 0
  %2661 = vmatpush1.bf16.msra.mxu0 %v1942
  %2662 = vmatprep.subr.bf16.mxu0 0
  %2663 = vmatpush1.bf16.msra.mxu0 %v1943
  %2664 = vmatprep.mubr.bf16.mxu0 %v683
  %2665 = vmatmul.mubr.bf16.gmra.mrb[0].mxu0 %v669
  %v2666 = vpop.f32.mrb[0].mxu0
  %v2667 = vadd.f32 %v2627, %v2666
  %v2668 = vpop.f32.mrb[0].mxu0
  %v2669 = vpop.f32.mrb[0].mxu0
  %v2670 = vpop.f32.mrb[0].mxu0
  %2671 = vdwg.mxu0
  %2672 = vmatprep.subr.bf16.mxu0 0
  %2673 = vmatpush1.bf16.msra.mxu0 %v1944
  %2674 = vmatprep.subr.bf16.mxu0 0
  %2675 = vmatpush1.bf16.msra.mxu0 %v1945
  %2676 = vmatprep.subr.bf16.mxu0 0
  %2677 = vmatpush1.bf16.msra.mxu0 %v1946
  %2678 = vmatprep.subr.bf16.mxu0 0
  %2679 = vmatpush1.bf16.msra.mxu0 %v1947
  %2680 = vmatprep.subr.bf16.mxu0 0
  %2681 = vmatpush1.bf16.msra.mxu0 %v1948
  %2682 = vmatprep.subr.bf16.mxu0 0
  %2683 = vmatpush1.bf16.msra.mxu0 %v1949
  %2684 = vmatprep.subr.bf16.mxu0 0
  %2685 = vmatpush1.bf16.msra.mxu0 %v1950
  %2686 = vmatprep.subr.bf16.mxu0 0
  %2687 = vmatpush1.bf16.msra.mxu0 %v1951
  %2688 = vmatprep.subr.bf16.mxu0 0
  %2689 = vmatpush1.bf16.msra.mxu0 %v1952
  %2690 = vmatprep.subr.bf16.mxu0 0
  %2691 = vmatpush1.bf16.msra.mxu0 %v1953
  %2692 = vmatprep.subr.bf16.mxu0 0
  %2693 = vmatpush1.bf16.msra.mxu0 %v1954
  %2694 = vmatprep.subr.bf16.mxu0 0
  %2695 = vmatpush1.bf16.msra.mxu0 %v1955
  %2696 = vmatprep.subr.bf16.mxu0 0
  %2697 = vmatpush1.bf16.msra.mxu0 %v1956
  %2698 = vmatprep.subr.bf16.mxu0 0
  %2699 = vmatpush1.bf16.msra.mxu0 %v1957
  %2700 = vmatprep.subr.bf16.mxu0 0
  %2701 = vmatpush1.bf16.msra.mxu0 %v1958
  %2702 = vmatprep.subr.bf16.mxu0 0
  %2703 = vmatpush1.bf16.msra.mxu0 %v1959
  %2704 = vmatprep.mubr.bf16.mxu0 %v693
  %2705 = vmatmul.mubr.bf16.gmra.mrb[0].mxu0 %v691
  %v2706 = vpop.f32.mrb[0].mxu0
  %v2707 = vadd.f32 %v2667, %v2706
  %v2708 = vpop.f32.mrb[0].mxu0
  %v2709 = vpop.f32.mrb[0].mxu0
  %v2710 = vpop.f32.mrb[0].mxu0
  %2711 = vdwg.mxu0
  %2712 = vmatprep.subr.bf16.mxu0 0
  %2713 = vmatpush1.bf16.msra.mxu0 %v1960
  %2714 = vmatprep.subr.bf16.mxu0 0
  %2715 = vmatpush1.bf16.msra.mxu0 %v1961
  %2716 = vmatprep.subr.bf16.mxu0 0
  %2717 = vmatpush1.bf16.msra.mxu0 %v1962
  %2718 = vmatprep.subr.bf16.mxu0 0
  %2719 = vmatpush1.bf16.msra.mxu0 %v1963
  %2720 = vmatprep.subr.bf16.mxu0 0
  %2721 = vmatpush1.bf16.msra.mxu0 %v1964
  %2722 = vmatprep.subr.bf16.mxu0 0
  %2723 = vmatpush1.bf16.msra.mxu0 %v1965
  %2724 = vmatprep.subr.bf16.mxu0 0
  %2725 = vmatpush1.bf16.msra.mxu0 %v1966
  %2726 = vmatprep.subr.bf16.mxu0 0
  %2727 = vmatpush1.bf16.msra.mxu0 %v1967
  %2728 = vmatprep.subr.bf16.mxu0 0
  %2729 = vmatpush1.bf16.msra.mxu0 %v1968
  %2730 = vmatprep.subr.bf16.mxu0 0
  %2731 = vmatpush1.bf16.msra.mxu0 %v1969
  %2732 = vmatprep.subr.bf16.mxu0 0
  %2733 = vmatpush1.bf16.msra.mxu0 %v1970
  %2734 = vmatprep.subr.bf16.mxu0 0
  %2735 = vmatpush1.bf16.msra.mxu0 %v1971
  %2736 = vmatprep.subr.bf16.mxu0 0
  %2737 = vmatpush1.bf16.msra.mxu0 %v1972
  %2738 = vmatprep.subr.bf16.mxu0 0
  %2739 = vmatpush1.bf16.msra.mxu0 %v1973
  %2740 = vmatprep.subr.bf16.mxu0 0
  %2741 = vmatpush1.bf16.msra.mxu0 %v1974
  %2742 = vmatprep.subr.bf16.mxu0 0
  %2743 = vmatpush1.bf16.msra.mxu0 %v1975
  %2744 = vmatprep.mubr.bf16.mxu0 %v690
  %2745 = vmatmul.mubr.bf16.gmra.mrb[0].mxu0 %v676
  %v2746 = vpop.f32.mrb[0].mxu0
  %v2747 = vadd.f32 %v2707, %v2746
  %v2748 = vpop.f32.mrb[0].mxu0
  %v2749 = vpop.f32.mrb[0].mxu0
  %v2750 = vpop.f32.mrb[0].mxu0
  %2751 = vdwg.mxu0
  %2752 = vmatprep.subr.bf16.mxu0 0
  %2753 = vmatpush1.bf16.msra.mxu0 %v1976
  %2754 = vmatprep.subr.bf16.mxu0 0
  %2755 = vmatpush1.bf16.msra.mxu0 %v1977
  %2756 = vmatprep.subr.bf16.mxu0 0
  %2757 = vmatpush1.bf16.msra.mxu0 %v1978
  %2758 = vmatprep.subr.bf16.mxu0 0
  %2759 = vmatpush1.bf16.msra.mxu0 %v1979
  %2760 = vmatprep.subr.bf16.mxu0 0
  %2761 = vmatpush1.bf16.msra.mxu0 %v1980
  %2762 = vmatprep.subr.bf16.mxu0 0
  %2763 = vmatpush1.bf16.msra.mxu0 %v1981
  %2764 = vmatprep.subr.bf16.mxu0 0
  %2765 = vmatpush1.bf16.msra.mxu0 %v1982
  %2766 = vmatprep.subr.bf16.mxu0 0
  %2767 = vmatpush1.bf16.msra.mxu0 %v1983
  %2768 = vmatprep.subr.bf16.mxu0 0
  %2769 = vmatpush1.bf16.msra.mxu0 %v1984
  %2770 = vmatprep.subr.bf16.mxu0 0
  %2771 = vmatpush1.bf16.msra.mxu0 %v1985
  %2772 = vmatprep.subr.bf16.mxu0 0
  %2773 = vmatpush1.bf16.msra.mxu0 %v1986
  %2774 = vmatprep.subr.bf16.mxu0 0
  %2775 = vmatpush1.bf16.msra.mxu0 %v1987
  %2776 = vmatprep.subr.bf16.mxu0 0
  %2777 = vmatpush1.bf16.msra.mxu0 %v1988
  %2778 = vmatprep.subr.bf16.mxu0 0
  %2779 = vmatpush1.bf16.msra.mxu0 %v1989
  %2780 = vmatprep.subr.bf16.mxu0 0
  %2781 = vmatpush1.bf16.msra.mxu0 %v1990
  %2782 = vmatprep.subr.bf16.mxu0 0
  %2783 = vmatpush1.bf16.msra.mxu0 %v1991
  %2784 = vmatprep.mubr.bf16.mxu0 %v694
  %2785 = vmatmul.mubr.bf16.gmra.mrb[0].mxu0 %v692
  %v2786 = vpop.f32.mrb[0].mxu0
  %v2787 = vadd.f32 %v2747, %v2786
  %v2788 = vpop.f32.mrb[0].mxu0
  %v2789 = vpop.f32.mrb[0].mxu0
  %v2790 = vpop.f32.mrb[0].mxu0
  %2791 = vdwg.mxu0
  %2792 = vmatprep.subr.bf16.mxu0 0
  %2793 = vmatpush1.bf16.msra.mxu0 %v1992
  %2794 = vmatprep.subr.bf16.mxu0 0
  %2795 = vmatpush1.bf16.msra.mxu0 %v1993
  %2796 = vmatprep.subr.bf16.mxu0 0
  %2797 = vmatpush1.bf16.msra.mxu0 %v1994
  %2798 = vmatprep.subr.bf16.mxu0 0
  %2799 = vmatpush1.bf16.msra.mxu0 %v1995
  %2800 = vmatprep.subr.bf16.mxu0 0
  %2801 = vmatpush1.bf16.msra.mxu0 %v1996
  %2802 = vmatprep.subr.bf16.mxu0 0
  %2803 = vmatpush1.bf16.msra.mxu0 %v1997
  %2804 = vmatprep.subr.bf16.mxu0 0
  %2805 = vmatpush1.bf16.msra.mxu0 %v1998
  %2806 = vmatprep.subr.bf16.mxu0 0
  %2807 = vmatpush1.bf16.msra.mxu0 %v1999
  %2808 = vmatprep.subr.bf16.mxu0 0
  %2809 = vmatpush1.bf16.msra.mxu0 %v2000
  %2810 = vmatprep.subr.bf16.mxu0 0
  %2811 = vmatpush1.bf16.msra.mxu0 %v2001
  %2812 = vmatprep.subr.bf16.mxu0 0
  %2813 = vmatpush1.bf16.msra.mxu0 %v2002
  %2814 = vmatprep.subr.bf16.mxu0 0
  %2815 = vmatpush1.bf16.msra.mxu0 %v2003
  %2816 = vmatprep.subr.bf16.mxu0 0
  %2817 = vmatpush1.bf16.msra.mxu0 %v2004
  %2818 = vmatprep.subr.bf16.mxu0 0
  %2819 = vmatpush1.bf16.msra.mxu0 %v2005
  %2820 = vmatprep.subr.bf16.mxu0 0
  %2821 = vmatpush1.bf16.msra.mxu0 %v2006
  %2822 = vmatprep.subr.bf16.mxu0 0
  %2823 = vmatpush1.bf16.msra.mxu0 %v2007
  %2824 = vmatprep.mubr.bf16.mxu0 %v732
  %2825 = vmatmul.mubr.bf16.gmra.mrb[0].mxu0 %v718
  %v2826 = vpop.f32.mrb[0].mxu0
  %v2827 = vadd.f32 %v2787, %v2826
  %v2828 = vpop.f32.mrb[0].mxu0
  %v2829 = vpop.f32.mrb[0].mxu0
  %v2830 = vpop.f32.mrb[0].mxu0
  %2831 = vdwg.mxu0
  %2832 = vmatprep.subr.bf16.mxu0 0
  %2833 = vmatpush1.bf16.msra.mxu0 %v2008
  %2834 = vmatprep.subr.bf16.mxu0 0
  %2835 = vmatpush1.bf16.msra.mxu0 %v2009
  %2836 = vmatprep.subr.bf16.mxu0 0
  %2837 = vmatpush1.bf16.msra.mxu0 %v2010
  %2838 = vmatprep.subr.bf16.mxu0 0
  %2839 = vmatpush1.bf16.msra.mxu0 %v2011
  %2840 = vmatprep.subr.bf16.mxu0 0
  %2841 = vmatpush1.bf16.msra.mxu0 %v2012
  %2842 = vmatprep.subr.bf16.mxu0 0
  %2843 = vmatpush1.bf16.msra.mxu0 %v2013
  %2844 = vmatprep.subr.bf16.mxu0 0
  %2845 = vmatpush1.bf16.msra.mxu0 %v2014
  %2846 = vmatprep.subr.bf16.mxu0 0
  %2847 = vmatpush1.bf16.msra.mxu0 %v2015
  %2848 = vmatprep.subr.bf16.mxu0 0
  %2849 = vmatpush1.bf16.msra.mxu0 %v2016
  %2850 = vmatprep.subr.bf16.mxu0 0
  %2851 = vmatpush1.bf16.msra.mxu0 %v2017
  %2852 = vmatprep.subr.bf16.mxu0 0
  %2853 = vmatpush1.bf16.msra.mxu0 %v2018
  %2854 = vmatprep.subr.bf16.mxu0 0
  %2855 = vmatpush1.bf16.msra.mxu0 %v2019
  %2856 = vmatprep.subr.bf16.mxu0 0
  %2857 = vmatpush1.bf16.msra.mxu0 %v2020
  %2858 = vmatprep.subr.bf16.mxu0 0
  %2859 = vmatpush1.bf16.msra.mxu0 %v2021
  %2860 = vmatprep.subr.bf16.mxu0 0
  %2861 = vmatpush1.bf16.msra.mxu0 %v2022
  %2862 = vmatprep.subr.bf16.mxu0 0
  %2863 = vmatpush1.bf16.msra.mxu0 %v2023
  %2864 = vmatprep.mubr.bf16.mxu0 %v742
  %2865 = vmatmul.mubr.bf16.gmra.mrb[0].mxu0 %v740
  %v2866 = vpop.f32.mrb[0].mxu0
  %v2867 = vadd.f32 %v2827, %v2866
  %v2868 = vpop.f32.mrb[0].mxu0
  %v2869 = vpop.f32.mrb[0].mxu0
  %v2870 = vpop.f32.mrb[0].mxu0
  %2871 = vdwg.mxu0
  %2872 = vmatprep.subr.bf16.mxu0 0
  %2873 = vmatpush1.bf16.msra.mxu0 %v2024
  %2874 = vmatprep.subr.bf16.mxu0 0
  %2875 = vmatpush1.bf16.msra.mxu0 %v2025
  %2876 = vmatprep.subr.bf16.mxu0 0
  %2877 = vmatpush1.bf16.msra.mxu0 %v2026
  %2878 = vmatprep.subr.bf16.mxu0 0
  %2879 = vmatpush1.bf16.msra.mxu0 %v2027
  %2880 = vmatprep.subr.bf16.mxu0 0
  %2881 = vmatpush1.bf16.msra.mxu0 %v2028
  %2882 = vmatprep.subr.bf16.mxu0 0
  %2883 = vmatpush1.bf16.msra.mxu0 %v2029
  %2884 = vmatprep.subr.bf16.mxu0 0
  %2885 = vmatpush1.bf16.msra.mxu0 %v2030
  %2886 = vmatprep.subr.bf16.mxu0 0
  %2887 = vmatpush1.bf16.msra.mxu0 %v2031
  %2888 = vmatprep.subr.bf16.mxu0 0
  %2889 = vmatpush1.bf16.msra.mxu0 %v2032
  %2890 = vmatprep.subr.bf16.mxu0 0
  %2891 = vmatpush1.bf16.msra.mxu0 %v2033
  %2892 = vmatprep.subr.bf16.mxu0 0
  %2893 = vmatpush1.bf16.msra.mxu0 %v2034
  %2894 = vmatprep.subr.bf16.mxu0 0
  %2895 = vmatpush1.bf16.msra.mxu0 %v2035
  %2896 = vmatprep.subr.bf16.mxu0 0
  %2897 = vmatpush1.bf16.msra.mxu0 %v2036
  %2898 = vmatprep.subr.bf16.mxu0 0
  %2899 = vmatpush1.bf16.msra.mxu0 %v2037
  %2900 = vmatprep.subr.bf16.mxu0 0
  %2901 = vmatpush1.bf16.msra.mxu0 %v2038
  %2902 = vmatprep.subr.bf16.mxu0 0
  %2903 = vmatpush1.bf16.msra.mxu0 %v2039
  %2904 = vmatprep.mubr.bf16.mxu0 %v739
  %2905 = vmatmul.mubr.bf16.gmra.mrb[0].mxu0 %v725
  %v2906 = vpop.f32.mrb[0].mxu0
  %v2907 = vadd.f32 %v2867, %v2906
  %v2908 = vpop.f32.mrb[0].mxu0
  %v2909 = vpop.f32.mrb[0].mxu0
  %v2910 = vpop.f32.mrb[0].mxu0
  %2911 = vdwg.mxu0
  %2912 = vmatprep.subr.bf16.mxu0 0
  %2913 = vmatpush1.bf16.msra.mxu0 %v2040
  %2914 = vmatprep.subr.bf16.mxu0 0
  %2915 = vmatpush1.bf16.msra.mxu0 %v2041
  %2916 = vmatprep.subr.bf16.mxu0 0
  %2917 = vmatpush1.bf16.msra.mxu0 %v2042
  %2918 = vmatprep.subr.bf16.mxu0 0
  %2919 = vmatpush1.bf16.msra.mxu0 %v2043
  %2920 = vmatprep.subr.bf16.mxu0 0
  %2921 = vmatpush1.bf16.msra.mxu0 %v2044
  %2922 = vmatprep.subr.bf16.mxu0 0
  %2923 = vmatpush1.bf16.msra.mxu0 %v2045
  %2924 = vmatprep.subr.bf16.mxu0 0
  %2925 = vmatpush1.bf16.msra.mxu0 %v2046
  %2926 = vmatprep.subr.bf16.mxu0 0
  %2927 = vmatpush1.bf16.msra.mxu0 %v2047
  %2928 = vmatprep.subr.bf16.mxu0 0
  %2929 = vmatpush1.bf16.msra.mxu0 %v2048
  %2930 = vmatprep.subr.bf16.mxu0 0
  %2931 = vmatpush1.bf16.msra.mxu0 %v2049
  %2932 = vmatprep.subr.bf16.mxu0 0
  %2933 = vmatpush1.bf16.msra.mxu0 %v2050
  %2934 = vmatprep.subr.bf16.mxu0 0
  %2935 = vmatpush1.bf16.msra.mxu0 %v2051
  %2936 = vmatprep.subr.bf16.mxu0 0
  %2937 = vmatpush1.bf16.msra.mxu0 %v2052
  %2938 = vmatprep.subr.bf16.mxu0 0
  %2939 = vmatpush1.bf16.msra.mxu0 %v2053
  %2940 = vmatprep.subr.bf16.mxu0 0
  %2941 = vmatpush1.bf16.msra.mxu0 %v2054
  %2942 = vmatprep.subr.bf16.mxu0 0
  %2943 = vmatpush1.bf16.msra.mxu0 %v2055
  %2944 = vmatprep.mubr.bf16.mxu0 %v743
  %2945 = vmatmul.mubr.bf16.gmra.mrb[0].mxu0 %v741
  %v2946 = vpop.f32.mrb[0].mxu0
  %v2947 = vadd.f32 %v2907, %v2946
  %v2948 = vpop.f32.mrb[0].mxu0
  %v2949 = vpop.f32.mrb[0].mxu0
  %v2950 = vpop.f32.mrb[0].mxu0
  %2951 = vdwg.mxu0
  %v2952 = vadd.f32 %v27, %v2947
  %vm2953 = vcmask 254976
  %2954 = vst.msk [vmem:[#allocation2] sm:$0x3] %vm2953, %v2952
  // Predicated region
  $region26: #{discriminator_forward.5} parent=0 // pred_check
    %p2955 = pneg %p21
  $region27: #{discriminator_forward.5} parent=0 // pred_check_branch
    %2957 = sbr.rel (%p2955) target = $region29
  $region28: #{discriminator_forward.5} parent=0 // pred_region
    %v2958 = vld [vmem:[#allocation2] sm:$0x3]
    %v2959 = vld [vmem:[%s2] sm:$0x1]
    %v2961 = vlaneseq
    %v2962 = vshrl.u32 %v2961, 7
    %v2963 = vsub.s32 0, %v2962
    %v2964 = vrot.slane %v2959, %v2963
    %v2966 = vadd.f32 %v2958, %v2964
    %v2967 = vsel %vm2953, %v2966, 0.0
    %v2968 = vrot.slane %v2967, 4
    %v2969 = vadd.f32 %v2967, %v2968
    %v2970 = vrot.slane %v2969, 2
    %v2971 = vadd.f32 %v2969, %v2970
    %v2972 = vrot.slane %v2971, 1
    %v2973 = vadd.f32 %v2971, %v2972
    %v2974 = vrcp.pop 2.0
    %v2975 = vmul.f32 %v2973, %v2974
    %v2976 = vsub.f32 %v2966, %v2975
    %v2977 = vmul.f32 %v2976, %v2976
    %v2978 = vsel %vm2953, %v2977, 0.0
    %v2979 = vrot.slane %v2978, 4
    %v2980 = vadd.f32 %v2978, %v2979
    %v2981 = vrot.slane %v2980, 2
    %v2982 = vadd.f32 %v2980, %v2981
    %v2983 = vrot.slane %v2982, 1
    %v2984 = vadd.f32 %v2982, %v2983
    %v2985 = vmul.f32 %v2984, %v2974
    %v2986 = vadd.f32 %v2985, 0.8
    %v2987 = vrsqrt.pop %v2986
    %v2988 = vmul.f32 %v2976, %v2987
    %v2989 = vld [vmem:[%s3] sm:$0x1]
    %v2991 = vlaneseq
    %v2992 = vshrl.u32 %v2991, 7
    %v2993 = vsub.s32 0, %v2992
    %v2994 = vrot.slane %v2989, %v2993
    %v2996 = vmul.f32 %v2988, %v2994
    %v2997 = vld [vmem:[%s4] sm:$0x1]
    %v2999 = vlaneseq
    %v3000 = vshrl.u32 %v2999, 7
    %v3001 = vsub.s32 0, %v3000
    %v3002 = vrot.slane %v2997, %v3001
    %v3004 = vadd.f32 %v2996, %v3002
    %v3005 = vmax.f32 %v3004, 0.0
    %v3006 = vpack.c.bf16 %v3005, %v3005
    %vm3007 = vcmask 253952
    %3008 = vst.msk [vmem:[%s5] sm:$0x1] %vm3007, %v3006
  $region29: #{discriminator_forward.5} parent=0 // pred_fallthru
    _
  // Predicated region
  $region30: #{discriminator_forward.5} parent=0 // pred_check
    _
  $region31: #{discriminator_forward.5} parent=0 // pred_check_branch
    %3010 = sbr.rel (0) target = $region33
  $region32: #{discriminator_forward.5} parent=0 // pred_region
    _
  $region33: #{discriminator_forward.5} parent=0 // pred_fallthru
    _
  // Predicated region
  $region34: #{discriminator_forward.5} parent=0 // pred_check
    _
  $region35: #{discriminator_forward.5} parent=0 // pred_check_branch
    %3012 = sbr.rel (0) target = $region37
  $region36: #{discriminator_forward.5} parent=0 // pred_region
    _
  $region37: #{discriminator_forward.5} parent=0 // pred_fallthru
    _

// kernel: discriminator_forward.7
$region0: #{discriminator_forward.7}
  #allocation0 [shape = 'u32[]', space=smem, size = 0x4, offset = 0x4, fixed_abs, tag = 'smem constant byte address 0x4 - core index']
  #allocation1 [shape = 'u32[144,128]{1,0:T(1,128)}', space=vmem, size = 0x12000, scoped, tag = 'internal scratch']
  %s0 = inlined_call_operand.vmem [shape: bf16[8,576], index: 0, kind: input, shape index: {}]
  %s1 = inlined_call_operand.vmem [shape: bf16[576,512], index: 1, kind: input, shape index: {}]
  %s2 = inlined_call_operand.vmem [shape: f32[8,1], index: 2, kind: input, shape index: {}]
  %s3 = inlined_call_operand.vmem [shape: f32[8,512], index: 3, kind: output, shape index: {}]
  %s4 = sld [smem:[#allocation0]]
  $region83: #{discriminator_forward.7} parent=0
    _
  %s6 = ssub.s32 1, %s4
  %s7 = scalar_select 0, %s6, %s4
  $region1: #{discriminator_forward.7} parent=0
    #allocation2 [shape = 'u8[589824]{0}', space=vmem, size = 0x90000, scoped, tag = 'input window, operand 1']
    loop: start=0, step=1, limit=4
    $region2: #{discriminator_forward.7} parent=1 // loop_pre_header
      _
    $region3: #{discriminator_forward.7} parent=1 // loop_header
      %s9 = sphi 0, %s13
      %p10 = scmp.ge.s32.totalorder %s9, 4
      %s17 = sphi 0, %s17
      %s19 = sphi 0, %s17
      %s20 = sphi 0, %s19
      %s34 = sphi 0, %s20
      %s40 = sphi 0, %s42
      %s43 = sphi 0, %s40
      %s44 = sphi 0, %s43
      %s60 = sphi 0, %s44
      %s64 = sphi 0, %s64
      %s66 = sphi 0, %s64
      %s67 = sphi 0, %s66
      %s81 = sphi 0, %s67
      %s87 = sphi 0, %s89
      %s90 = sphi 0, %s87
      %s91 = sphi 0, %s90
      %s107 = sphi 0, %s91
    $region4: #{discriminator_forward.7} parent=1 // loop_header_branch
      %12 = sbr.rel (%p10) target = $region8
    $region5: #{discriminator_forward.7} parent=1 // loop_body
      %s14 = ssub.s32 %s9, 1
      %s15 = ssub.s32 %s9, 2
      %s16 = sadd.s32 %s9, 1
      %s18 = sadd.s32 %s17, 1
      %p21 = scmp.eq.s32.totalorder %s9, 1
      %p22 = scmp.ne.s32.totalorder %s17, %s19
      %p23 = scmp.eq.s32.totalorder %s9, 0
      %p24 = por %p22, %p23
      %p25 = scmp.ne.s32.totalorder %s17, %s19
      %p26 = scmp.eq.s32.totalorder %s14, 1
      %p27 = por %p25, %p26
      %p28 = scmp.ne.s32.totalorder %s19, %s20
      %p29 = scmp.eq.s32.totalorder %s14, 0
      %p30 = por %p28, %p29
      %p31 = scmp.ne.s32.totalorder %s19, %s20
      %p32 = scmp.eq.s32.totalorder %s15, 1
      %p33 = por %p31, %p32
      %p35 = scmp.ne.s32.totalorder %s20, %s34
      %p36 = scmp.eq.s32.totalorder %s15, 0
      %p37 = por %p35, %p36
      %s38 = ssub.s32 %s9, %s16
      %p39 = scmp.eq.s32.totalorder %s38, 0
      %s41 = sadd.s32 %s40, 1
      %s42 = scalar_select %p39, %s40, %s41
      %p45 = pneg %p39
      %p46 = scmp.eq.s32.totalorder %s9, 1
      %p47 = por %p45, %p46
      %p48 = scmp.ne.s32.totalorder %s40, %s43
      %p49 = scmp.eq.s32.totalorder %s9, 0
      %p50 = por %p48, %p49
      %p51 = scmp.ne.s32.totalorder %s40, %s43
      %p52 = scmp.eq.s32.totalorder %s14, 1
      %p53 = por %p51, %p52
      %p54 = scmp.ne.s32.totalorder %s43, %s44
      %p55 = scmp.eq.s32.totalorder %s14, 0
      %p56 = por %p54, %p55
      %p57 = scmp.ne.s32.totalorder %s43, %s44
      %p58 = scmp.eq.s32.totalorder %s15, 1
      %p59 = por %p57, %p58
      %p61 = scmp.ne.s32.totalorder %s44, %s60
      %p62 = scmp.eq.s32.totalorder %s15, 0
      %p63 = por %p61, %p62
      %s65 = sadd.s32 %s64, 1
      %p68 = scmp.eq.s32.totalorder %s9, 1
      %p69 = scmp.ne.s32.totalorder %s64, %s66
      %p70 = scmp.eq.s32.totalorder %s9, 0
      %p71 = por %p69, %p70
      %p72 = scmp.ne.s32.totalorder %s64, %s66
      %p73 = scmp.eq.s32.totalorder %s14, 1
      %p74 = por %p72, %p73
      %p75 = scmp.ne.s32.totalorder %s66, %s67
      %p76 = scmp.eq.s32.totalorder %s14, 0
      %p77 = por %p75, %p76
      %p78 = scmp.ne.s32.totalorder %s66, %s67
      %p79 = scmp.eq.s32.totalorder %s15, 1
      %p80 = por %p78, %p79
      %p82 = scmp.ne.s32.totalorder %s67, %s81
      %p83 = scmp.eq.s32.totalorder %s15, 0
      %p84 = por %p82, %p83
      %s85 = ssub.s32 %s9, %s16
      %p86 = scmp.eq.s32.totalorder %s85, 0
      %s88 = sadd.s32 %s87, 1
      %s89 = scalar_select %p86, %s87, %s88
      %p92 = pneg %p86
      %p93 = scmp.eq.s32.totalorder %s9, 1
      %p94 = por %p92, %p93
      %p95 = scmp.ne.s32.totalorder %s87, %s90
      %p96 = scmp.eq.s32.totalorder %s9, 0
      %p97 = por %p95, %p96
      %p98 = scmp.ne.s32.totalorder %s87, %s90
      %p99 = scmp.eq.s32.totalorder %s14, 1
      %p100 = por %p98, %p99
      %p101 = scmp.ne.s32.totalorder %s90, %s91
      %p102 = scmp.eq.s32.totalorder %s14, 0
      %p103 = por %p101, %p102
      %p104 = scmp.ne.s32.totalorder %s90, %s91
      %p105 = scmp.eq.s32.totalorder %s15, 1
      %p106 = por %p104, %p105
      %p108 = scmp.ne.s32.totalorder %s91, %s107
      %p109 = scmp.eq.s32.totalorder %s15, 0
      %p110 = por %p108, %p109
      %p111 = scmp.le.s32.totalorder 1, %s9
      %p112 = scmp.lt.s32.totalorder %s9, 3
      %p113 = pnand %p111, %p112
      %p114 = pneg %p113
      // Predicated region
      $region9: #{discriminator_forward.7} parent=5 // pred_check
        _
      $region10: #{discriminator_forward.7} parent=5 // pred_check_branch
        %116 = sbr.rel (%p113) target = $region12
      $region11: #{discriminator_forward.7} parent=5 // pred_region
        %s117 = ssub.s32 %s9, 1
        // Predicated region
        $region13: #{discriminator_forward.7} parent=11 // pred_check
          %p118 = pneg %p30
        $region14: #{discriminator_forward.7} parent=11 // pred_check_branch
          %120 = sbr.rel (%p118) target = $region16
        $region15: #{discriminator_forward.7} parent=11 // pred_region
          _
        $region16: #{discriminator_forward.7} parent=11 // pred_fallthru
          _
        // Predicated region
        $region17: #{discriminator_forward.7} parent=11 // pred_check
          %p121 = pneg %p77
        $region18: #{discriminator_forward.7} parent=11 // pred_check_branch
          %123 = sbr.rel (%p121) target = $region20
        $region19: #{discriminator_forward.7} parent=11 // pred_region
          _
        $region20: #{discriminator_forward.7} parent=11 // pred_fallthru
          _
      $region12: #{discriminator_forward.7} parent=5 // pred_fallthru
        _
      %p124 = scmp.lt.s32.totalorder %s9, 2
      // Predicated region
      $region21: #{discriminator_forward.7} parent=5 // pred_check
        %p125 = pneg %p124
      $region22: #{discriminator_forward.7} parent=5 // pred_check_branch
        %127 = sbr.rel (%p125) target = $region24
      $region23: #{discriminator_forward.7} parent=5 // pred_region
        // Predicated region
        $region25: #{discriminator_forward.7} parent=23 // pred_check
          %p128 = pneg %p50
        $region26: #{discriminator_forward.7} parent=23 // pred_check_branch
          %130 = sbr.rel (%p128) target = $region28
        $region27: #{discriminator_forward.7} parent=23 // pred_region
          %s131 = sand.u32 %s40, 1
          %s132 = sand.u32 %s40, 1
          %s133 = smul.addr %s132, 576
          %s134 = scalar_lea.vmem [#allocation2], %s133
          %s135 = smul.u32 2, %s9
          %s136 = smul.addr %s135, 4
          %s137 = scalar_lea.vmem %s1, %s136
          // Predicated region
          $region29: #{discriminator_forward.7} parent=27 // pred_check
            _
          $region30: #{discriminator_forward.7} parent=27 // pred_check_branch
            %139 = sbr.rel (0) target = $region32
          $region31: #{discriminator_forward.7} parent=27 // pred_region
            // Predicated region
            $region33: #{discriminator_forward.7} parent=31 // pred_check
              _
            $region34: #{discriminator_forward.7} parent=31 // pred_check_branch
              %141 = sbr.rel (0) target = $region36
            $region35: #{discriminator_forward.7} parent=31 // pred_region
              // Predicated region
              $region48: #{discriminator_forward.7} parent=35 // pred_check
                _
              $region49: #{discriminator_forward.7} parent=35 // pred_check_branch
                %298 = sbr.rel (0) target = $region51
              $region50: #{discriminator_forward.7} parent=35 // pred_region
                loop: start=0, step=1, limit=1
                $region52: #{discriminator_forward.7} parent=50 // loop_pre_header
                  _
                $region53: #{discriminator_forward.7} parent=50 // loop_header
                  %s300 = sphi 0, %s304
                  %p301 = scmp.ge.s32.totalorder %s300, 1
                  %s305 = sphi %s137, %s137
                  %s306 = sphi %s134, %s134
                $region54: #{discriminator_forward.7} parent=50 // loop_header_branch
                  %303 = sbr.rel (%p301) target = $region58
                $region55: #{discriminator_forward.7} parent=50 // loop_body
                  %v307 = vld [vmem:[%s305] sm:$0xff]
                  %308 = vst [vmem:[%s306] sm:$0xff] %v307
                  %v309 = vld [vmem:[%s305 + $0x10] sm:$0xff]
                  %310 = vst [vmem:[%s306 + $0x8] sm:$0xff] %v309
                  %v311 = vld [vmem:[%s305 + $0x20] sm:$0xff]
                  %312 = vst [vmem:[%s306 + $0x10] sm:$0xff] %v311
                  %v313 = vld [vmem:[%s305 + $0x30] sm:$0xff]
                  %314 = vst [vmem:[%s306 + $0x18] sm:$0xff] %v313
                  %v315 = vld [vmem:[%s305 + $0x40] sm:$0xff]
                  %316 = vst [vmem:[%s306 + $0x20] sm:$0xff] %v315
                  %v317 = vld [vmem:[%s305 + $0x50] sm:$0xff]
                  %318 = vst [vmem:[%s306 + $0x28] sm:$0xff] %v317
                  %v319 = vld [vmem:[%s305 + $0x60] sm:$0xff]
                  %320 = vst [vmem:[%s306 + $0x30] sm:$0xff] %v319
                  %v321 = vld [vmem:[%s305 + $0x70] sm:$0xff]
                  %322 = vst [vmem:[%s306 + $0x38] sm:$0xff] %v321
                  %v323 = vld [vmem:[%s305 + $0x80] sm:$0xff]
                  %324 = vst [vmem:[%s306 + $0x40] sm:$0xff] %v323
                  %v325 = vld [vmem:[%s305 + $0x90] sm:$0xff]
                  %326 = vst [vmem:[%s306 + $0x48] sm:$0xff] %v325
                  %v327 = vld [vmem:[%s305 + $0xa0] sm:$0xff]
                  %328 = vst [vmem:[%s306 + $0x50] sm:$0xff] %v327
                  %v329 = vld [vmem:[%s305 + $0xb0] sm:$0xff]
                  %330 = vst [vmem:[%s306 + $0x58] sm:$0xff] %v329
                  %v331 = vld [vmem:[%s305 + $0xc0] sm:$0xff]
                  %332 = vst [vmem:[%s306 + $0x60] sm:$0xff] %v331
                  %v333 = vld [vmem:[%s305 + $0xd0] sm:$0xff]
                  %334 = vst [vmem:[%s306 + $0x68] sm:$0xff] %v333
                  %v335 = vld [vmem:[%s305 + $0xe0] sm:$0xff]
                  %336 = vst [vmem:[%s306 + $0x70] sm:$0xff] %v335
                  %v337 = vld [vmem:[%s305 + $0xf0] sm:$0xff]
                  %338 = vst [vmem:[%s306 + $0x78] sm:$0xff] %v337
                  %v339 = vld [vmem:[%s305 + $0x100] sm:$0xff]
                  %340 = vst [vmem:[%s306 + $0x80] sm:$0xff] %v339
                  %v341 = vld [vmem:[%s305 + $0x110] sm:$0xff]
                  %342 = vst [vmem:[%s306 + $0x88] sm:$0xff] %v341
                  %v343 = vld [vmem:[%s305 + $0x120] sm:$0xff]
                  %344 = vst [vmem:[%s306 + $0x90] sm:$0xff] %v343
                  %v345 = vld [vmem:[%s305 + $0x130] sm:$0xff]
                  %346 = vst [vmem:[%s306 + $0x98] sm:$0xff] %v345
                  %v347 = vld [vmem:[%s305 + $0x140] sm:$0xff]
                  %348 = vst [vmem:[%s306 + $0xa0] sm:$0xff] %v347
                  %v349 = vld [vmem:[%s305 + $0x150] sm:$0xff]
                  %350 = vst [vmem:[%s306 + $0xa8] sm:$0xff] %v349
                  %v351 = vld [vmem:[%s305 + $0x160] sm:$0xff]
                  %352 = vst [vmem:[%s306 + $0xb0] sm:$0xff] %v351
                  %v353 = vld [vmem:[%s305 + $0x170] sm:$0xff]
                  %354 = vst [vmem:[%s306 + $0xb8] sm:$0xff] %v353
                  %v355 = vld [vmem:[%s305 + $0x180] sm:$0xff]
                  %356 = vst [vmem:[%s306 + $0xc0] sm:$0xff] %v355
                  %v357 = vld [vmem:[%s305 + $0x190] sm:$0xff]
                  %358 = vst [vmem:[%s306 + $0xc8] sm:$0xff] %v357
                  %v359 = vld [vmem:[%s305 + $0x1a0] sm:$0xff]
                  %360 = vst [vmem:[%s306 + $0xd0] sm:$0xff] %v359
                  %v361 = vld [vmem:[%s305 + $0x1b0] sm:$0xff]
                  %362 = vst [vmem:[%s306 + $0xd8] sm:$0xff] %v361
                  %v363 = vld [vmem:[%s305 + $0x1c0] sm:$0xff]
                  %364 = vst [vmem:[%s306 + $0xe0] sm:$0xff] %v363
                  %v365 = vld [vmem:[%s305 + $0x1d0] sm:$0xff]
                  %366 = vst [vmem:[%s306 + $0xe8] sm:$0xff] %v365
                  %v367 = vld [vmem:[%s305 + $0x1e0] sm:$0xff]
                  %368 = vst [vmem:[%s306 + $0xf0] sm:$0xff] %v367
                  %v369 = vld [vmem:[%s305 + $0x1f0] sm:$0xff]
                  %370 = vst [vmem:[%s306 + $0xf8] sm:$0xff] %v369
                  %v371 = vld [vmem:[%s305 + $0x200] sm:$0xff]
                  %372 = vst [vmem:[%s306 + $0x100] sm:$0xff] %v371
                  %v373 = vld [vmem:[%s305 + $0x210] sm:$0xff]
                  %374 = vst [vmem:[%s306 + $0x108] sm:$0xff] %v373
                  %v375 = vld [vmem:[%s305 + $0x220] sm:$0xff]
                  %376 = vst [vmem:[%s306 + $0x110] sm:$0xff] %v375
                  %v377 = vld [vmem:[%s305 + $0x230] sm:$0xff]
                  %378 = vst [vmem:[%s306 + $0x118] sm:$0xff] %v377
                  %v379 = vld [vmem:[%s305 + $0x240] sm:$0xff]
                  %380 = vst [vmem:[%s306 + $0x120] sm:$0xff] %v379
                  %v381 = vld [vmem:[%s305 + $0x250] sm:$0xff]
                  %382 = vst [vmem:[%s306 + $0x128] sm:$0xff] %v381
                  %v383 = vld [vmem:[%s305 + $0x260] sm:$0xff]
                  %384 = vst [vmem:[%s306 + $0x130] sm:$0xff] %v383
                  %v385 = vld [vmem:[%s305 + $0x270] sm:$0xff]
                  %386 = vst [vmem:[%s306 + $0x138] sm:$0xff] %v385
                  %v387 = vld [vmem:[%s305 + $0x280] sm:$0xff]
                  %388 = vst [vmem:[%s306 + $0x140] sm:$0xff] %v387
                  %v389 = vld [vmem:[%s305 + $0x290] sm:$0xff]
                  %390 = vst [vmem:[%s306 + $0x148] sm:$0xff] %v389
                  %v391 = vld [vmem:[%s305 + $0x2a0] sm:$0xff]
                  %392 = vst [vmem:[%s306 + $0x150] sm:$0xff] %v391
                  %v393 = vld [vmem:[%s305 + $0x2b0] sm:$0xff]
                  %394 = vst [vmem:[%s306 + $0x158] sm:$0xff] %v393
                  %v395 = vld [vmem:[%s305 + $0x2c0] sm:$0xff]
                  %396 = vst [vmem:[%s306 + $0x160] sm:$0xff] %v395
                  %v397 = vld [vmem:[%s305 + $0x2d0] sm:$0xff]
                  %398 = vst [vmem:[%s306 + $0x168] sm:$0xff] %v397
                  %v399 = vld [vmem:[%s305 + $0x2e0] sm:$0xff]
                  %400 = vst [vmem:[%s306 + $0x170] sm:$0xff] %v399
                  %v401 = vld [vmem:[%s305 + $0x2f0] sm:$0xff]
                  %402 = vst [vmem:[%s306 + $0x178] sm:$0xff] %v401
                  %v403 = vld [vmem:[%s305 + $0x300] sm:$0xff]
                  %404 = vst [vmem:[%s306 + $0x180] sm:$0xff] %v403
                  %v405 = vld [vmem:[%s305 + $0x310] sm:$0xff]
                  %406 = vst [vmem:[%s306 + $0x188] sm:$0xff] %v405
                  %v407 = vld [vmem:[%s305 + $0x320] sm:$0xff]
                  %408 = vst [vmem:[%s306 + $0x190] sm:$0xff] %v407
                  %v409 = vld [vmem:[%s305 + $0x330] sm:$0xff]
                  %410 = vst [vmem:[%s306 + $0x198] sm:$0xff] %v409
                  %v411 = vld [vmem:[%s305 + $0x340] sm:$0xff]
                  %412 = vst [vmem:[%s306 + $0x1a0] sm:$0xff] %v411
                  %v413 = vld [vmem:[%s305 + $0x350] sm:$0xff]
                  %414 = vst [vmem:[%s306 + $0x1a8] sm:$0xff] %v413
                  %v415 = vld [vmem:[%s305 + $0x360] sm:$0xff]
                  %416 = vst [vmem:[%s306 + $0x1b0] sm:$0xff] %v415
                  %v417 = vld [vmem:[%s305 + $0x370] sm:$0xff]
                  %418 = vst [vmem:[%s306 + $0x1b8] sm:$0xff] %v417
                  %v419 = vld [vmem:[%s305 + $0x380] sm:$0xff]
                  %420 = vst [vmem:[%s306 + $0x1c0] sm:$0xff] %v419
                  %v421 = vld [vmem:[%s305 + $0x390] sm:$0xff]
                  %422 = vst [vmem:[%s306 + $0x1c8] sm:$0xff] %v421
                  %v423 = vld [vmem:[%s305 + $0x3a0] sm:$0xff]
                  %424 = vst [vmem:[%s306 + $0x1d0] sm:$0xff] %v423
                  %v425 = vld [vmem:[%s305 + $0x3b0] sm:$0xff]
                  %426 = vst [vmem:[%s306 + $0x1d8] sm:$0xff] %v425
                  %v427 = vld [vmem:[%s305 + $0x3c0] sm:$0xff]
                  %428 = vst [vmem:[%s306 + $0x1e0] sm:$0xff] %v427
                  %v429 = vld [vmem:[%s305 + $0x3d0] sm:$0xff]
                  %430 = vst [vmem:[%s306 + $0x1e8] sm:$0xff] %v429
                  %v431 = vld [vmem:[%s305 + $0x3e0] sm:$0xff]
                  %432 = vst [vmem:[%s306 + $0x1f0] sm:$0xff] %v431
                  %v433 = vld [vmem:[%s305 + $0x3f0] sm:$0xff]
                  %434 = vst [vmem:[%s306 + $0x1f8] sm:$0xff] %v433
                  %v435 = vld [vmem:[%s305 + $0x400] sm:$0xff]
                  %436 = vst [vmem:[%s306 + $0x200] sm:$0xff] %v435
                  %v437 = vld [vmem:[%s305 + $0x410] sm:$0xff]
                  %438 = vst [vmem:[%s306 + $0x208] sm:$0xff] %v437
                  %v439 = vld [vmem:[%s305 + $0x420] sm:$0xff]
                  %440 = vst [vmem:[%s306 + $0x210] sm:$0xff] %v439
                  %v441 = vld [vmem:[%s305 + $0x430] sm:$0xff]
                  %442 = vst [vmem:[%s306 + $0x218] sm:$0xff] %v441
                  %v443 = vld [vmem:[%s305 + $0x440] sm:$0xff]
                  %444 = vst [vmem:[%s306 + $0x220] sm:$0xff] %v443
                  %v445 = vld [vmem:[%s305 + $0x450] sm:$0xff]
                  %446 = vst [vmem:[%s306 + $0x228] sm:$0xff] %v445
                  %v447 = vld [vmem:[%s305 + $0x460] sm:$0xff]
                  %448 = vst [vmem:[%s306 + $0x230] sm:$0xff] %v447
                  %v449 = vld [vmem:[%s305 + $0x470] sm:$0xff]
                  %450 = vst [vmem:[%s306 + $0x238] sm:$0xff] %v449
                $region56: #{discriminator_forward.7} parent=50 // loop_footer
                  %s304 = sadd.s32 1, %s300
                $region57: #{discriminator_forward.7} parent=50 // loop_footer_branch
                  %299 = sbr.rel target = $region53
                $region58: #{discriminator_forward.7} parent=50 // loop_exit
                  _
              $region51: #{discriminator_forward.7} parent=35 // pred_fallthru
                _
              // Predicated region
              $region59: #{discriminator_forward.7} parent=35 // pred_check
                _
              $region60: #{discriminator_forward.7} parent=35 // pred_check_branch
                %452 = sbr.rel target = $region62
              $region61: #{discriminator_forward.7} parent=35 // pred_region
                _
              $region62: #{discriminator_forward.7} parent=35 // pred_fallthru
                _
            $region36: #{discriminator_forward.7} parent=31 // pred_fallthru
              _
            // Predicated region
            $region37: #{discriminator_forward.7} parent=31 // pred_check
              _
            $region38: #{discriminator_forward.7} parent=31 // pred_check_branch
              %143 = sbr.rel target = $region40
            $region39: #{discriminator_forward.7} parent=31 // pred_region
              loop: start=0, step=1, limit=1
              $region41: #{discriminator_forward.7} parent=39 // loop_pre_header
                _
              $region42: #{discriminator_forward.7} parent=39 // loop_header
                %s146 = sphi 0, %s150
                %p147 = scmp.ge.s32.totalorder %s146, 1
                %s151 = sphi %s137, %s137
                %s152 = sphi %s134, %s134
              $region43: #{discriminator_forward.7} parent=39 // loop_header_branch
                %149 = sbr.rel (%p147) target = $region47
              $region44: #{discriminator_forward.7} parent=39 // loop_body
                %v153 = vld [vmem:[%s151] sm:$0xff]
                %154 = vst [vmem:[%s152] sm:$0xff] %v153
                %v155 = vld [vmem:[%s151 + $0x10] sm:$0xff]
                %156 = vst [vmem:[%s152 + $0x8] sm:$0xff] %v155
                %v157 = vld [vmem:[%s151 + $0x20] sm:$0xff]
                %158 = vst [vmem:[%s152 + $0x10] sm:$0xff] %v157
                %v159 = vld [vmem:[%s151 + $0x30] sm:$0xff]
                %160 = vst [vmem:[%s152 + $0x18] sm:$0xff] %v159
                %v161 = vld [vmem:[%s151 + $0x40] sm:$0xff]
                %162 = vst [vmem:[%s152 + $0x20] sm:$0xff] %v161
                %v163 = vld [vmem:[%s151 + $0x50] sm:$0xff]
                %164 = vst [vmem:[%s152 + $0x28] sm:$0xff] %v163
                %v165 = vld [vmem:[%s151 + $0x60] sm:$0xff]
                %166 = vst [vmem:[%s152 + $0x30] sm:$0xff] %v165
                %v167 = vld [vmem:[%s151 + $0x70] sm:$0xff]
                %168 = vst [vmem:[%s152 + $0x38] sm:$0xff] %v167
                %v169 = vld [vmem:[%s151 + $0x80] sm:$0xff]
                %170 = vst [vmem:[%s152 + $0x40] sm:$0xff] %v169
                %v171 = vld [vmem:[%s151 + $0x90] sm:$0xff]
                %172 = vst [vmem:[%s152 + $0x48] sm:$0xff] %v171
                %v173 = vld [vmem:[%s151 + $0xa0] sm:$0xff]
                %174 = vst [vmem:[%s152 + $0x50] sm:$0xff] %v173
                %v175 = vld [vmem:[%s151 + $0xb0] sm:$0xff]
                %176 = vst [vmem:[%s152 + $0x58] sm:$0xff] %v175
                %v177 = vld [vmem:[%s151 + $0xc0] sm:$0xff]
                %178 = vst [vmem:[%s152 + $0x60] sm:$0xff] %v177
                %v179 = vld [vmem:[%s151 + $0xd0] sm:$0xff]
                %180 = vst [vmem:[%s152 + $0x68] sm:$0xff] %v179
                %v181 = vld [vmem:[%s151 + $0xe0] sm:$0xff]
                %182 = vst [vmem:[%s152 + $0x70] sm:$0xff] %v181
                %v183 = vld [vmem:[%s151 + $0xf0] sm:$0xff]
                %184 = vst [vmem:[%s152 + $0x78] sm:$0xff] %v183
                %v185 = vld [vmem:[%s151 + $0x100] sm:$0xff]
                %186 = vst [vmem:[%s152 + $0x80] sm:$0xff] %v185
                %v187 = vld [vmem:[%s151 + $0x110] sm:$0xff]
                %188 = vst [vmem:[%s152 + $0x88] sm:$0xff] %v187
                %v189 = vld [vmem:[%s151 + $0x120] sm:$0xff]
                %190 = vst [vmem:[%s152 + $0x90] sm:$0xff] %v189
                %v191 = vld [vmem:[%s151 + $0x130] sm:$0xff]
                %192 = vst [vmem:[%s152 + $0x98] sm:$0xff] %v191
                %v193 = vld [vmem:[%s151 + $0x140] sm:$0xff]
                %194 = vst [vmem:[%s152 + $0xa0] sm:$0xff] %v193
                %v195 = vld [vmem:[%s151 + $0x150] sm:$0xff]
                %196 = vst [vmem:[%s152 + $0xa8] sm:$0xff] %v195
                %v197 = vld [vmem:[%s151 + $0x160] sm:$0xff]
                %198 = vst [vmem:[%s152 + $0xb0] sm:$0xff] %v197
                %v199 = vld [vmem:[%s151 + $0x170] sm:$0xff]
                %200 = vst [vmem:[%s152 + $0xb8] sm:$0xff] %v199
                %v201 = vld [vmem:[%s151 + $0x180] sm:$0xff]
                %202 = vst [vmem:[%s152 + $0xc0] sm:$0xff] %v201
                %v203 = vld [vmem:[%s151 + $0x190] sm:$0xff]
                %204 = vst [vmem:[%s152 + $0xc8] sm:$0xff] %v203
                %v205 = vld [vmem:[%s151 + $0x1a0] sm:$0xff]
                %206 = vst [vmem:[%s152 + $0xd0] sm:$0xff] %v205
                %v207 = vld [vmem:[%s151 + $0x1b0] sm:$0xff]
                %208 = vst [vmem:[%s152 + $0xd8] sm:$0xff] %v207
                %v209 = vld [vmem:[%s151 + $0x1c0] sm:$0xff]
                %210 = vst [vmem:[%s152 + $0xe0] sm:$0xff] %v209
                %v211 = vld [vmem:[%s151 + $0x1d0] sm:$0xff]
                %212 = vst [vmem:[%s152 + $0xe8] sm:$0xff] %v211
                %v213 = vld [vmem:[%s151 + $0x1e0] sm:$0xff]
                %214 = vst [vmem:[%s152 + $0xf0] sm:$0xff] %v213
                %v215 = vld [vmem:[%s151 + $0x1f0] sm:$0xff]
                %216 = vst [vmem:[%s152 + $0xf8] sm:$0xff] %v215
                %v217 = vld [vmem:[%s151 + $0x200] sm:$0xff]
                %218 = vst [vmem:[%s152 + $0x100] sm:$0xff] %v217
                %v219 = vld [vmem:[%s151 + $0x210] sm:$0xff]
                %220 = vst [vmem:[%s152 + $0x108] sm:$0xff] %v219
                %v221 = vld [vmem:[%s151 + $0x220] sm:$0xff]
                %222 = vst [vmem:[%s152 + $0x110] sm:$0xff] %v221
                %v223 = vld [vmem:[%s151 + $0x230] sm:$0xff]
                %224 = vst [vmem:[%s152 + $0x118] sm:$0xff] %v223
                %v225 = vld [vmem:[%s151 + $0x240] sm:$0xff]
                %226 = vst [vmem:[%s152 + $0x120] sm:$0xff] %v225
                %v227 = vld [vmem:[%s151 + $0x250] sm:$0xff]
                %228 = vst [vmem:[%s152 + $0x128] sm:$0xff] %v227
                %v229 = vld [vmem:[%s151 + $0x260] sm:$0xff]
                %230 = vst [vmem:[%s152 + $0x130] sm:$0xff] %v229
                %v231 = vld [vmem:[%s151 + $0x270] sm:$0xff]
                %232 = vst [vmem:[%s152 + $0x138] sm:$0xff] %v231
                %v233 = vld [vmem:[%s151 + $0x280] sm:$0xff]
                %234 = vst [vmem:[%s152 + $0x140] sm:$0xff] %v233
                %v235 = vld [vmem:[%s151 + $0x290] sm:$0xff]
                %236 = vst [vmem:[%s152 + $0x148] sm:$0xff] %v235
                %v237 = vld [vmem:[%s151 + $0x2a0] sm:$0xff]
                %238 = vst [vmem:[%s152 + $0x150] sm:$0xff] %v237
                %v239 = vld [vmem:[%s151 + $0x2b0] sm:$0xff]
                %240 = vst [vmem:[%s152 + $0x158] sm:$0xff] %v239
                %v241 = vld [vmem:[%s151 + $0x2c0] sm:$0xff]
                %242 = vst [vmem:[%s152 + $0x160] sm:$0xff] %v241
                %v243 = vld [vmem:[%s151 + $0x2d0] sm:$0xff]
                %244 = vst [vmem:[%s152 + $0x168] sm:$0xff] %v243
                %v245 = vld [vmem:[%s151 + $0x2e0] sm:$0xff]
                %246 = vst [vmem:[%s152 + $0x170] sm:$0xff] %v245
                %v247 = vld [vmem:[%s151 + $0x2f0] sm:$0xff]
                %248 = vst [vmem:[%s152 + $0x178] sm:$0xff] %v247
                %v249 = vld [vmem:[%s151 + $0x300] sm:$0xff]
                %250 = vst [vmem:[%s152 + $0x180] sm:$0xff] %v249
                %v251 = vld [vmem:[%s151 + $0x310] sm:$0xff]
                %252 = vst [vmem:[%s152 + $0x188] sm:$0xff] %v251
                %v253 = vld [vmem:[%s151 + $0x320] sm:$0xff]
                %254 = vst [vmem:[%s152 + $0x190] sm:$0xff] %v253
                %v255 = vld [vmem:[%s151 + $0x330] sm:$0xff]
                %256 = vst [vmem:[%s152 + $0x198] sm:$0xff] %v255
                %v257 = vld [vmem:[%s151 + $0x340] sm:$0xff]
                %258 = vst [vmem:[%s152 + $0x1a0] sm:$0xff] %v257
                %v259 = vld [vmem:[%s151 + $0x350] sm:$0xff]
                %260 = vst [vmem:[%s152 + $0x1a8] sm:$0xff] %v259
                %v261 = vld [vmem:[%s151 + $0x360] sm:$0xff]
                %262 = vst [vmem:[%s152 + $0x1b0] sm:$0xff] %v261
                %v263 = vld [vmem:[%s151 + $0x370] sm:$0xff]
                %264 = vst [vmem:[%s152 + $0x1b8] sm:$0xff] %v263
                %v265 = vld [vmem:[%s151 + $0x380] sm:$0xff]
                %266 = vst [vmem:[%s152 + $0x1c0] sm:$0xff] %v265
                %v267 = vld [vmem:[%s151 + $0x390] sm:$0xff]
                %268 = vst [vmem:[%s152 + $0x1c8] sm:$0xff] %v267
                %v269 = vld [vmem:[%s151 + $0x3a0] sm:$0xff]
                %270 = vst [vmem:[%s152 + $0x1d0] sm:$0xff] %v269
                %v271 = vld [vmem:[%s151 + $0x3b0] sm:$0xff]
                %272 = vst [vmem:[%s152 + $0x1d8] sm:$0xff] %v271
                %v273 = vld [vmem:[%s151 + $0x3c0] sm:$0xff]
                %274 = vst [vmem:[%s152 + $0x1e0] sm:$0xff] %v273
                %v275 = vld [vmem:[%s151 + $0x3d0] sm:$0xff]
                %276 = vst [vmem:[%s152 + $0x1e8] sm:$0xff] %v275
                %v277 = vld [vmem:[%s151 + $0x3e0] sm:$0xff]
                %278 = vst [vmem:[%s152 + $0x1f0] sm:$0xff] %v277
                %v279 = vld [vmem:[%s151 + $0x3f0] sm:$0xff]
                %280 = vst [vmem:[%s152 + $0x1f8] sm:$0xff] %v279
                %v281 = vld [vmem:[%s151 + $0x400] sm:$0xff]
                %282 = vst [vmem:[%s152 + $0x200] sm:$0xff] %v281
                %v283 = vld [vmem:[%s151 + $0x410] sm:$0xff]
                %284 = vst [vmem:[%s152 + $0x208] sm:$0xff] %v283
                %v285 = vld [vmem:[%s151 + $0x420] sm:$0xff]
                %286 = vst [vmem:[%s152 + $0x210] sm:$0xff] %v285
                %v287 = vld [vmem:[%s151 + $0x430] sm:$0xff]
                %288 = vst [vmem:[%s152 + $0x218] sm:$0xff] %v287
                %v289 = vld [vmem:[%s151 + $0x440] sm:$0xff]
                %290 = vst [vmem:[%s152 + $0x220] sm:$0xff] %v289
                %v291 = vld [vmem:[%s151 + $0x450] sm:$0xff]
                %292 = vst [vmem:[%s152 + $0x228] sm:$0xff] %v291
                %v293 = vld [vmem:[%s151 + $0x460] sm:$0xff]
                %294 = vst [vmem:[%s152 + $0x230] sm:$0xff] %v293
                %v295 = vld [vmem:[%s151 + $0x470] sm:$0xff]
                %296 = vst [vmem:[%s152 + $0x238] sm:$0xff] %v295
              $region45: #{discriminator_forward.7} parent=39 // loop_footer
                %s150 = sadd.s32 1, %s146
              $region46: #{discriminator_forward.7} parent=39 // loop_footer_branch
                %145 = sbr.rel target = $region42
              $region47: #{discriminator_forward.7} parent=39 // loop_exit
                _
            $region40: #{discriminator_forward.7} parent=31 // pred_fallthru
              _
          $region32: #{discriminator_forward.7} parent=27 // pred_fallthru
            _
          %453 = vnop
        $region28: #{discriminator_forward.7} parent=23 // pred_fallthru
          _
      $region24: #{discriminator_forward.7} parent=5 // pred_fallthru
        _
      %p454 = scmp.le.s32.totalorder 1, %s9
      %p455 = scmp.lt.s32.totalorder %s9, 3
      %p456 = pnand %p454, %p455
      %p457 = pneg %p456
      // Predicated region
      $region63: #{discriminator_forward.7} parent=5 // pred_check
        _
      $region64: #{discriminator_forward.7} parent=5 // pred_check_branch
        %459 = sbr.rel (%p456) target = $region66
      $region65: #{discriminator_forward.7} parent=5 // pred_region
        %s460 = ssub.s32 %s9, 1
        %s461 = sand.u32 %s43, 1
        %s462 = sand.u32 %s43, 1
        %s463 = smul.addr %s462, 576
        %s464 = scalar_lea.vmem [#allocation2], %s463
        // Predicated region
        $region67: #{discriminator_forward.7} parent=65 // pred_check
          %p465 = pneg %p56
        $region68: #{discriminator_forward.7} parent=65 // pred_check_branch
          %467 = sbr.rel (%p465) target = $region70
        $region69: #{discriminator_forward.7} parent=65 // pred_region
          _
        $region70: #{discriminator_forward.7} parent=65 // pred_fallthru
          _
        %p468 = pneg %p30
        %p469 = pneg %p27
        %s470 = sand.u32 %s43, 1
        %s471 = sand.u32 %s43, 1
        %s472 = smul.addr %s471, 576
        %s473 = scalar_lea.vmem [#allocation2], %s472
        %p474 = pneg %p56
        %p475 = pneg %p53
        %p476 = pneg %p77
        %p477 = pneg %p74
        %p478 = pneg %p103
        %p479 = pneg %p100
        %s480 = smul.u32 2, %s14
        %p481 = scmp.lt.s32.totalorder %s480, 3
        %s482 = scalar_select %p481, %s480, 3
        %s483 = smul.addr %s482, 8
        %s484 = scalar_lea.vmem %s3, %s483
        %s485 = smul.u32 2, %s14
        %s486 = smul.u32 2, %s14
        %p487 = scmp.lt.s32.totalorder %s486, 3
        %s488 = scalar_select %p487, %s486, 3
        %s489 = smul.addr %s488, 8
        %s490 = scalar_lea.vmem %s3, %s489
        %s491 = smul.u32 2, %s14
        %v493 = vld [vmem:[%s0] sm:$0xff]
        %v494 = vld [vmem:[%s0 + $0x8] sm:$0xff]
        %v495 = vld [vmem:[%s0 + $0x10] sm:$0xf]
        %v496 = vld [vmem:[%s464] sm:$0xff]
        %v497 = vld [vmem:[%s464 + $0x8] sm:$0xff]
        %v498 = vld [vmem:[%s464 + $0x10] sm:$0xff]
        %v499 = vld [vmem:[%s464 + $0x18] sm:$0xff]
        %v500 = vld [vmem:[%s464 + $0x20] sm:$0xff]
        %v501 = vld [vmem:[%s464 + $0x28] sm:$0xff]
        %v502 = vld [vmem:[%s464 + $0x30] sm:$0xff]
        %v503 = vld [vmem:[%s464 + $0x38] sm:$0xff]
        %v504 = vld [vmem:[%s464 + $0x40] sm:$0xff]
        %v505 = vld [vmem:[%s464 + $0x48] sm:$0xff]
        %v506 = vld [vmem:[%s464 + $0x50] sm:$0xff]
        %v507 = vld [vmem:[%s464 + $0x58] sm:$0xff]
        %v508 = vld [vmem:[%s464 + $0x60] sm:$0xff]
        %v509 = vld [vmem:[%s464 + $0x68] sm:$0xff]
        %v510 = vld [vmem:[%s464 + $0x70] sm:$0xff]
        %v511 = vld [vmem:[%s464 + $0x78] sm:$0xff]
        %v512 = vld [vmem:[%s464 + $0x80] sm:$0xff]
        %v513 = vld [vmem:[%s464 + $0x88] sm:$0xff]
        %v514 = vld [vmem:[%s464 + $0x90] sm:$0xff]
        %v515 = vld [vmem:[%s464 + $0x98] sm:$0xff]
        %v516 = vld [vmem:[%s464 + $0xa0] sm:$0xff]
        %v517 = vld [vmem:[%s464 + $0xa8] sm:$0xff]
        %v518 = vld [vmem:[%s464 + $0xb0] sm:$0xff]
        %v519 = vld [vmem:[%s464 + $0xb8] sm:$0xff]
        %v520 = vld [vmem:[%s464 + $0xc0] sm:$0xff]
        %v521 = vld [vmem:[%s464 + $0xc8] sm:$0xff]
        %v522 = vld [vmem:[%s464 + $0xd0] sm:$0xff]
        %v523 = vld [vmem:[%s464 + $0xd8] sm:$0xff]
        %v524 = vld [vmem:[%s464 + $0xe0] sm:$0xff]
        %v525 = vld [vmem:[%s464 + $0xe8] sm:$0xff]
        %v526 = vld [vmem:[%s464 + $0xf0] sm:$0xff]
        %v527 = vld [vmem:[%s464 + $0xf8] sm:$0xff]
        %v528 = vld [vmem:[%s464 + $0x100] sm:$0xff]
        %v529 = vld [vmem:[%s464 + $0x108] sm:$0xff]
        %v530 = vld [vmem:[%s464 + $0x110] sm:$0xff]
        %v531 = vld [vmem:[%s464 + $0x118] sm:$0xff]
        %v532 = vld [vmem:[%s464 + $0x120] sm:$0xff]
        %v533 = vld [vmem:[%s464 + $0x128] sm:$0xff]
        %v534 = vld [vmem:[%s464 + $0x130] sm:$0xff]
        %v535 = vld [vmem:[%s464 + $0x138] sm:$0xff]
        %v536 = vld [vmem:[%s464 + $0x140] sm:$0xff]
        %v537 = vld [vmem:[%s464 + $0x148] sm:$0xff]
        %v538 = vld [vmem:[%s464 + $0x150] sm:$0xff]
        %v539 = vld [vmem:[%s464 + $0x158] sm:$0xff]
        %v540 = vld [vmem:[%s464 + $0x160] sm:$0xff]
        %v541 = vld [vmem:[%s464 + $0x168] sm:$0xff]
        %v542 = vld [vmem:[%s464 + $0x170] sm:$0xff]
        %v543 = vld [vmem:[%s464 + $0x178] sm:$0xff]
        %v544 = vld [vmem:[%s464 + $0x180] sm:$0xff]
        %v545 = vld [vmem:[%s464 + $0x188] sm:$0xff]
        %v546 = vld [vmem:[%s464 + $0x190] sm:$0xff]
        %v547 = vld [vmem:[%s464 + $0x198] sm:$0xff]
        %v548 = vld [vmem:[%s464 + $0x1a0] sm:$0xff]
        %v549 = vld [vmem:[%s464 + $0x1a8] sm:$0xff]
        %v550 = vld [vmem:[%s464 + $0x1b0] sm:$0xff]
        %v551 = vld [vmem:[%s464 + $0x1b8] sm:$0xff]
        %v552 = vld [vmem:[%s464 + $0x1c0] sm:$0xff]
        %v553 = vld [vmem:[%s464 + $0x1c8] sm:$0xff]
        %v554 = vld [vmem:[%s464 + $0x1d0] sm:$0xff]
        %v555 = vld [vmem:[%s464 + $0x1d8] sm:$0xff]
        %v556 = vld [vmem:[%s464 + $0x1e0] sm:$0xff]
        %v557 = vld [vmem:[%s464 + $0x1e8] sm:$0xff]
        %v558 = vld [vmem:[%s464 + $0x1f0] sm:$0xff]
        %v559 = vld [vmem:[%s464 + $0x1f8] sm:$0xff]
        %v560 = vld [vmem:[%s464 + $0x200] sm:$0xff]
        %v561 = vld [vmem:[%s464 + $0x208] sm:$0xff]
        %v562 = vld [vmem:[%s464 + $0x210] sm:$0xff]
        %v563 = vld [vmem:[%s464 + $0x218] sm:$0xff]
        %v564 = vld [vmem:[%s464 + $0x220] sm:$0xff]
        %v565 = vld [vmem:[%s464 + $0x228] sm:$0xff]
        %v566 = vld [vmem:[%s464 + $0x230] sm:$0xff]
        %v567 = vld [vmem:[%s464 + $0x238] sm:$0xff]
        %v568 = vld [vmem:[%s2] sm:$0xff]
        %570 = vset.pattern.permute.xlu0 0
        %571 = vperm.xlu0 %570, %v568
        %v572 = vpop.permute.xlu0 %571
        %v577 = vunpack.c.l.b16 %v493
        %v578 = vunpack.c.h.b16 %v493
        %v579 = vunpack.c.l.b16 %v494
        %v580 = vunpack.c.h.b16 %v494
        %v581 = vunpack.c.l.b16 %v495
        %v582 = vpack.c.b16 %v577, %v577
        %v583 = vpack.c.b16 %v578, %v578
        %v584 = vpack.c.b16 %v579, %v579
        %v585 = vpack.c.b16 %v580, %v580
        %v586 = vpack.c.b16 %v581, %v581
        %v663 = vunpack.c.l.b16 %v496
        %v664 = vunpack.c.h.b16 %v496
        %v665 = vunpack.c.l.b16 %v497
        %v666 = vunpack.c.h.b16 %v497
        %v667 = vunpack.c.l.b16 %v498
        %v668 = vunpack.c.h.b16 %v498
        %v669 = vunpack.c.l.b16 %v499
        %v670 = vunpack.c.h.b16 %v499
        %v671 = vunpack.c.l.b16 %v500
        %v672 = vunpack.c.h.b16 %v500
        %v673 = vunpack.c.l.b16 %v501
        %v674 = vunpack.c.h.b16 %v501
        %v675 = vunpack.c.l.b16 %v502
        %v676 = vunpack.c.h.b16 %v502
        %v677 = vunpack.c.l.b16 %v503
        %v678 = vunpack.c.h.b16 %v503
        %v679 = vunpack.c.l.b16 %v504
        %v680 = vunpack.c.h.b16 %v504
        %v681 = vunpack.c.l.b16 %v505
        %v682 = vunpack.c.h.b16 %v505
        %v683 = vunpack.c.l.b16 %v506
        %v684 = vunpack.c.h.b16 %v506
        %v685 = vunpack.c.l.b16 %v507
        %v686 = vunpack.c.h.b16 %v507
        %v687 = vunpack.c.l.b16 %v508
        %v688 = vunpack.c.h.b16 %v508
        %v689 = vunpack.c.l.b16 %v509
        %v690 = vunpack.c.h.b16 %v509
        %v691 = vunpack.c.l.b16 %v510
        %v692 = vunpack.c.h.b16 %v510
        %v693 = vunpack.c.l.b16 %v511
        %v694 = vunpack.c.h.b16 %v511
        %v695 = vunpack.c.l.b16 %v512
        %v696 = vunpack.c.h.b16 %v512
        %v697 = vunpack.c.l.b16 %v513
        %v698 = vunpack.c.h.b16 %v513
        %v699 = vunpack.c.l.b16 %v514
        %v700 = vunpack.c.h.b16 %v514
        %v701 = vunpack.c.l.b16 %v515
        %v702 = vunpack.c.h.b16 %v515
        %v703 = vunpack.c.l.b16 %v516
        %v704 = vunpack.c.h.b16 %v516
        %v705 = vunpack.c.l.b16 %v517
        %v706 = vunpack.c.h.b16 %v517
        %v707 = vunpack.c.l.b16 %v518
        %v708 = vunpack.c.h.b16 %v518
        %v709 = vunpack.c.l.b16 %v519
        %v710 = vunpack.c.h.b16 %v519
        %v711 = vunpack.c.l.b16 %v520
        %v712 = vunpack.c.h.b16 %v520
        %v713 = vunpack.c.l.b16 %v521
        %v714 = vunpack.c.h.b16 %v521
        %v715 = vunpack.c.l.b16 %v522
        %v716 = vunpack.c.h.b16 %v522
        %v717 = vunpack.c.l.b16 %v523
        %v718 = vunpack.c.h.b16 %v523
        %v719 = vunpack.c.l.b16 %v524
        %v720 = vunpack.c.h.b16 %v524
        %v721 = vunpack.c.l.b16 %v525
        %v722 = vunpack.c.h.b16 %v525
        %v723 = vunpack.c.l.b16 %v526
        %v724 = vunpack.c.h.b16 %v526
        %v725 = vunpack.c.l.b16 %v527
        %v726 = vunpack.c.h.b16 %v527
        %v727 = vunpack.c.l.b16 %v528
        %v728 = vunpack.c.h.b16 %v528
        %v729 = vunpack.c.l.b16 %v529
        %v730 = vunpack.c.h.b16 %v529
        %v731 = vunpack.c.l.b16 %v530
        %v732 = vunpack.c.h.b16 %v530
        %v733 = vunpack.c.l.b16 %v531
        %v734 = vunpack.c.h.b16 %v531
        %v735 = vunpack.c.l.b16 %v532
        %v736 = vunpack.c.h.b16 %v532
        %v737 = vunpack.c.l.b16 %v533
        %v738 = vunpack.c.h.b16 %v533
        %v739 = vunpack.c.l.b16 %v534
        %v740 = vunpack.c.h.b16 %v534
        %v741 = vunpack.c.l.b16 %v535
        %v742 = vunpack.c.h.b16 %v535
        %v743 = vunpack.c.l.b16 %v536
        %v744 = vunpack.c.h.b16 %v536
        %v745 = vunpack.c.l.b16 %v537
        %v746 = vunpack.c.h.b16 %v537
        %v747 = vunpack.c.l.b16 %v538
        %v748 = vunpack.c.h.b16 %v538
        %v749 = vunpack.c.l.b16 %v539
        %v750 = vunpack.c.h.b16 %v539
        %v751 = vunpack.c.l.b16 %v540
        %v752 = vunpack.c.h.b16 %v540
        %v753 = vunpack.c.l.b16 %v541
        %v754 = vunpack.c.h.b16 %v541
        %v755 = vunpack.c.l.b16 %v542
        %v756 = vunpack.c.h.b16 %v542
        %v757 = vunpack.c.l.b16 %v543
        %v758 = vunpack.c.h.b16 %v543
        %v759 = vunpack.c.l.b16 %v544
        %v760 = vunpack.c.h.b16 %v544
        %v761 = vunpack.c.l.b16 %v545
        %v762 = vunpack.c.h.b16 %v545
        %v763 = vunpack.c.l.b16 %v546
        %v764 = vunpack.c.h.b16 %v546
        %v765 = vunpack.c.l.b16 %v547
        %v766 = vunpack.c.h.b16 %v547
        %v767 = vunpack.c.l.b16 %v548
        %v768 = vunpack.c.h.b16 %v548
        %v769 = vunpack.c.l.b16 %v549
        %v770 = vunpack.c.h.b16 %v549
        %v771 = vunpack.c.l.b16 %v550
        %v772 = vunpack.c.h.b16 %v550
        %v773 = vunpack.c.l.b16 %v551
        %v774 = vunpack.c.h.b16 %v551
        %v775 = vunpack.c.l.b16 %v552
        %v776 = vunpack.c.h.b16 %v552
        %v777 = vunpack.c.l.b16 %v553
        %v778 = vunpack.c.h.b16 %v553
        %v779 = vunpack.c.l.b16 %v554
        %v780 = vunpack.c.h.b16 %v554
        %v781 = vunpack.c.l.b16 %v555
        %v782 = vunpack.c.h.b16 %v555
        %v783 = vunpack.c.l.b16 %v556
        %v784 = vunpack.c.h.b16 %v556
        %v785 = vunpack.c.l.b16 %v557
        %v786 = vunpack.c.h.b16 %v557
        %v787 = vunpack.c.l.b16 %v558
        %v788 = vunpack.c.h.b16 %v558
        %v789 = vunpack.c.l.b16 %v559
        %v790 = vunpack.c.h.b16 %v559
        %v791 = vunpack.c.l.b16 %v560
        %v792 = vunpack.c.h.b16 %v560
        %v793 = vunpack.c.l.b16 %v561
        %v794 = vunpack.c.h.b16 %v561
        %v795 = vunpack.c.l.b16 %v562
        %v796 = vunpack.c.h.b16 %v562
        %v797 = vunpack.c.l.b16 %v563
        %v798 = vunpack.c.h.b16 %v563
        %v799 = vunpack.c.l.b16 %v564
        %v800 = vunpack.c.h.b16 %v564
        %v801 = vunpack.c.l.b16 %v565
        %v802 = vunpack.c.h.b16 %v565
        %v803 = vunpack.c.l.b16 %v566
        %v804 = vunpack.c.h.b16 %v566
        %v805 = vunpack.c.l.b16 %v567
        %v806 = vunpack.c.h.b16 %v567
        %v807 = vpack.c.b16 %v665, %v663
        %v808 = vpack.c.b16 %v666, %v664
        %v809 = vpack.c.b16 %v669, %v667
        %v810 = vpack.c.b16 %v670, %v668
        %v811 = vpack.c.b16 %v673, %v671
        %v812 = vpack.c.b16 %v674, %v672
        %v813 = vpack.c.b16 %v677, %v675
        %v814 = vpack.c.b16 %v678, %v676
        %v815 = vpack.c.b16 %v681, %v679
        %v816 = vpack.c.b16 %v682, %v680
        %v817 = vpack.c.b16 %v685, %v683
        %v818 = vpack.c.b16 %v686, %v684
        %v819 = vpack.c.b16 %v689, %v687
        %v820 = vpack.c.b16 %v690, %v688
        %v821 = vpack.c.b16 %v693, %v691
        %v822 = vpack.c.b16 %v694, %v692
        %v823 = vpack.c.b16 %v697, %v695
        %v824 = vpack.c.b16 %v698, %v696
        %v825 = vpack.c.b16 %v701, %v699
        %v826 = vpack.c.b16 %v702, %v700
        %v827 = vpack.c.b16 %v705, %v703
        %v828 = vpack.c.b16 %v706, %v704
        %v829 = vpack.c.b16 %v709, %v707
        %v830 = vpack.c.b16 %v710, %v708
        %v831 = vpack.c.b16 %v713, %v711
        %v832 = vpack.c.b16 %v714, %v712
        %v833 = vpack.c.b16 %v717, %v715
        %v834 = vpack.c.b16 %v718, %v716
        %v835 = vpack.c.b16 %v721, %v719
        %v836 = vpack.c.b16 %v722, %v720
        %v837 = vpack.c.b16 %v725, %v723
        %v838 = vpack.c.b16 %v726, %v724
        %v839 = vpack.c.b16 %v729, %v727
        %v840 = vpack.c.b16 %v730, %v728
        %v841 = vpack.c.b16 %v733, %v731
        %v842 = vpack.c.b16 %v734, %v732
        %v843 = vpack.c.b16 %v737, %v735
        %v844 = vpack.c.b16 %v738, %v736
        %v845 = vpack.c.b16 %v741, %v739
        %v846 = vpack.c.b16 %v742, %v740
        %v847 = vpack.c.b16 %v745, %v743
        %v848 = vpack.c.b16 %v746, %v744
        %v849 = vpack.c.b16 %v749, %v747
        %v850 = vpack.c.b16 %v750, %v748
        %v851 = vpack.c.b16 %v753, %v751
        %v852 = vpack.c.b16 %v754, %v752
        %v853 = vpack.c.b16 %v757, %v755
        %v854 = vpack.c.b16 %v758, %v756
        %v855 = vpack.c.b16 %v761, %v759
        %v856 = vpack.c.b16 %v762, %v760
        %v857 = vpack.c.b16 %v765, %v763
        %v858 = vpack.c.b16 %v766, %v764
        %v859 = vpack.c.b16 %v769, %v767
        %v860 = vpack.c.b16 %v770, %v768
        %v861 = vpack.c.b16 %v773, %v771
        %v862 = vpack.c.b16 %v774, %v772
        %v863 = vpack.c.b16 %v777, %v775
        %v864 = vpack.c.b16 %v778, %v776
        %v865 = vpack.c.b16 %v781, %v779
        %v866 = vpack.c.b16 %v782, %v780
        %v867 = vpack.c.b16 %v785, %v783
        %v868 = vpack.c.b16 %v786, %v784
        %v869 = vpack.c.b16 %v789, %v787
        %v870 = vpack.c.b16 %v790, %v788
        %v871 = vpack.c.b16 %v793, %v791
        %v872 = vpack.c.b16 %v794, %v792
        %v873 = vpack.c.b16 %v797, %v795
        %v874 = vpack.c.b16 %v798, %v796
        %v875 = vpack.c.b16 %v801, %v799
        %v876 = vpack.c.b16 %v802, %v800
        %v877 = vpack.c.b16 %v805, %v803
        %v878 = vpack.c.b16 %v806, %v804
        %vm951 = vcmask 523264
        %v953 = vsel %vm951, %v586, 0
        %955 = vmatprep.subr.bf16.mxu0 %v808
        %956 = vmatpush1.bf16.msra.mxu0 %v807
        %957 = vmatprep.subr.bf16.mxu0 %v810
        %958 = vmatpush1.bf16.msra.mxu0 %v809
        %959 = vmatprep.subr.bf16.mxu0 %v812
        %960 = vmatpush1.bf16.msra.mxu0 %v811
        %961 = vmatprep.subr.bf16.mxu0 %v814
        %962 = vmatpush1.bf16.msra.mxu0 %v813
        %963 = vmatprep.subr.bf16.mxu0 %v816
        %964 = vmatpush1.bf16.msra.mxu0 %v815
        %965 = vmatprep.subr.bf16.mxu0 %v818
        %966 = vmatpush1.bf16.msra.mxu0 %v817
        %967 = vmatprep.subr.bf16.mxu0 %v820
        %968 = vmatpush1.bf16.msra.mxu0 %v819
        %969 = vmatprep.subr.bf16.mxu0 %v822
        %970 = vmatpush1.bf16.msra.mxu0 %v821
        %971 = vmatprep.subr.bf16.mxu0 %v824
        %972 = vmatpush1.bf16.msra.mxu0 %v823
        %973 = vmatprep.subr.bf16.mxu0 %v826
        %974 = vmatpush1.bf16.msra.mxu0 %v825
        %975 = vmatprep.subr.bf16.mxu0 %v828
        %976 = vmatpush1.bf16.msra.mxu0 %v827
        %977 = vmatprep.subr.bf16.mxu0 %v830
        %978 = vmatpush1.bf16.msra.mxu0 %v829
        %979 = vmatprep.subr.bf16.mxu0 %v832
        %980 = vmatpush1.bf16.msra.mxu0 %v831
        %981 = vmatprep.subr.bf16.mxu0 %v834
        %982 = vmatpush1.bf16.msra.mxu0 %v833
        %983 = vmatprep.subr.bf16.mxu0 %v836
        %984 = vmatpush1.bf16.msra.mxu0 %v835
        %985 = vmatprep.subr.bf16.mxu0 %v838
        %986 = vmatpush1.bf16.msra.mxu0 %v837
        %987 = vmatprep.mubr.bf16.mxu0 %v583
        %988 = vmatmul.mubr.bf16.gmra.mrb[0].mxu0 %v582
        %v989 = vpop.f32.mrb[0].mxu0
        %v990 = vadd.f32 %v572, %v989
        %v991 = vpop.f32.mrb[0].mxu0
        %v992 = vadd.f32 %v572, %v991
        %v993 = vpop.f32.mrb[0].mxu0
        %v994 = vpop.f32.mrb[0].mxu0
        %995 = vdwg.mxu0
        %996 = vmatprep.subr.bf16.mxu0 %v840
        %997 = vmatpush1.bf16.msra.mxu0 %v839
        %998 = vmatprep.subr.bf16.mxu0 %v842
        %999 = vmatpush1.bf16.msra.mxu0 %v841
        %1000 = vmatprep.subr.bf16.mxu0 %v844
        %1001 = vmatpush1.bf16.msra.mxu0 %v843
        %1002 = vmatprep.subr.bf16.mxu0 %v846
        %1003 = vmatpush1.bf16.msra.mxu0 %v845
        %1004 = vmatprep.subr.bf16.mxu0 %v848
        %1005 = vmatpush1.bf16.msra.mxu0 %v847
        %1006 = vmatprep.subr.bf16.mxu0 %v850
        %1007 = vmatpush1.bf16.msra.mxu0 %v849
        %1008 = vmatprep.subr.bf16.mxu0 %v852
        %1009 = vmatpush1.bf16.msra.mxu0 %v851
        %1010 = vmatprep.subr.bf16.mxu0 %v854
        %1011 = vmatpush1.bf16.msra.mxu0 %v853
        %1012 = vmatprep.subr.bf16.mxu0 %v856
        %1013 = vmatpush1.bf16.msra.mxu0 %v855
        %1014 = vmatprep.subr.bf16.mxu0 %v858
        %1015 = vmatpush1.bf16.msra.mxu0 %v857
        %1016 = vmatprep.subr.bf16.mxu0 %v860
        %1017 = vmatpush1.bf16.msra.mxu0 %v859
        %1018 = vmatprep.subr.bf16.mxu0 %v862
        %1019 = vmatpush1.bf16.msra.mxu0 %v861
        %1020 = vmatprep.subr.bf16.mxu0 %v864
        %1021 = vmatpush1.bf16.msra.mxu0 %v863
        %1022 = vmatprep.subr.bf16.mxu0 %v866
        %1023 = vmatpush1.bf16.msra.mxu0 %v865
        %1024 = vmatprep.subr.bf16.mxu0 %v868
        %1025 = vmatpush1.bf16.msra.mxu0 %v867
        %1026 = vmatprep.subr.bf16.mxu0 %v870
        %1027 = vmatpush1.bf16.msra.mxu0 %v869
        %1028 = vmatprep.mubr.bf16.mxu0 %v585
        %1029 = vmatmul.mubr.bf16.gmra.mrb[0].mxu0 %v584
        %v1030 = vpop.f32.mrb[0].mxu0
        %v1031 = vadd.f32 %v990, %v1030
        %v1032 = vpop.f32.mrb[0].mxu0
        %v1033 = vadd.f32 %v992, %v1032
        %v1034 = vpop.f32.mrb[0].mxu0
        %v1035 = vpop.f32.mrb[0].mxu0
        %1036 = vdwg.mxu0
        %1037 = vmatprep.subr.bf16.mxu0 %v872
        %1038 = vmatpush1.bf16.msra.mxu0 %v871
        %1039 = vmatprep.subr.bf16.mxu0 %v874
        %1040 = vmatpush1.bf16.msra.mxu0 %v873
        %1041 = vmatprep.subr.bf16.mxu0 %v876
        %1042 = vmatpush1.bf16.msra.mxu0 %v875
        %1043 = vmatprep.subr.bf16.mxu0 %v878
        %1044 = vmatpush1.bf16.msra.mxu0 %v877
        %1045 = vmatprep.subr.bf16.mxu0 0
        %1046 = vmatpush1.bf16.msra.mxu0 0
        %1047 = vmatprep.subr.bf16.mxu0 0
        %1048 = vmatpush1.bf16.msra.mxu0 0
        %1049 = vmatprep.subr.bf16.mxu0 0
        %1050 = vmatpush1.bf16.msra.mxu0 0
        %1051 = vmatprep.subr.bf16.mxu0 0
        %1052 = vmatpush1.bf16.msra.mxu0 0
        %1053 = vmatprep.subr.bf16.mxu0 0
        %1054 = vmatpush1.bf16.msra.mxu0 0
        %1055 = vmatprep.subr.bf16.mxu0 0
        %1056 = vmatpush1.bf16.msra.mxu0 0
        %1057 = vmatprep.subr.bf16.mxu0 0
        %1058 = vmatpush1.bf16.msra.mxu0 0
        %1059 = vmatprep.subr.bf16.mxu0 0
        %1060 = vmatpush1.bf16.msra.mxu0 0
        %1061 = vmatprep.subr.bf16.mxu0 0
        %1062 = vmatpush1.bf16.msra.mxu0 0
        %1063 = vmatprep.subr.bf16.mxu0 0
        %1064 = vmatpush1.bf16.msra.mxu0 0
        %1065 = vmatprep.subr.bf16.mxu0 0
        %1066 = vmatpush1.bf16.msra.mxu0 0
        %1067 = vmatprep.subr.bf16.mxu0 0
        %1068 = vmatpush1.bf16.msra.mxu0 0
        %1069 = vmatprep.mubr.bf16.mxu0 0
        %1070 = vmatmul.mubr.bf16.gmra.mrb[0].mxu0 %v953
        %v1071 = vpop.f32.mrb[0].mxu0
        %v1072 = vadd.f32 %v1031, %v1071
        %v1073 = vpop.f32.mrb[0].mxu0
        %v1074 = vadd.f32 %v1033, %v1073
        %v1075 = vpop.f32.mrb[0].mxu0
        %v1076 = vpop.f32.mrb[0].mxu0
        %1077 = vdwg.mxu0
        %1078 = vst [vmem:[%s490] sm:$0xff] %v1072
        %1079 = vst [vmem:[%s490 + $0x8] sm:$0xff] %v1074
        %s1080 = smul.u32 2, %s14
        %p1081 = scmp.lt.s32.totalorder %s1080, 3
        %s1082 = scalar_select %p1081, %s1080, 3
        %s1083 = smul.addr %s1082, 8
        %s1084 = scalar_lea.vmem %s3, %s1083
        // Predicated region
        $region71: #{discriminator_forward.7} parent=65 // pred_check
          %p1085 = pneg %p100
        $region72: #{discriminator_forward.7} parent=65 // pred_check_branch
          %1087 = sbr.rel (%p1085) target = $region74
        $region73: #{discriminator_forward.7} parent=65 // pred_region
          %s1088 = smul.u32 2, %s14
        $region74: #{discriminator_forward.7} parent=65 // pred_fallthru
          _
      $region66: #{discriminator_forward.7} parent=5 // pred_fallthru
        _
      %p1089 = scmp.le.s32.totalorder 2, %s9
      // Predicated region
      $region75: #{discriminator_forward.7} parent=5 // pred_check
        %p1090 = pneg %p1089
      $region76: #{discriminator_forward.7} parent=5 // pred_check_branch
        %1092 = sbr.rel (%p1090) target = $region78
      $region77: #{discriminator_forward.7} parent=5 // pred_region
        %s1093 = ssub.s32 %s9, 2
        // Predicated region
        $region79: #{discriminator_forward.7} parent=77 // pred_check
          %p1094 = pneg %p106
        $region80: #{discriminator_forward.7} parent=77 // pred_check_branch
          %1096 = sbr.rel (%p1094) target = $region82
        $region81: #{discriminator_forward.7} parent=77 // pred_region
          %s1097 = smul.u32 2, %s15
          %p1098 = scmp.lt.s32.totalorder %s1097, 3
          %s1099 = scalar_select %p1098, %s1097, 3
          %s1100 = smul.addr %s1099, 8
          %s1101 = scalar_lea.vmem %s3, %s1100
        $region82: #{discriminator_forward.7} parent=77 // pred_fallthru
          _
      $region78: #{discriminator_forward.7} parent=5 // pred_fallthru
        _
    $region6: #{discriminator_forward.7} parent=1 // loop_footer
      %s13 = sadd.s32 1, %s9
    $region7: #{discriminator_forward.7} parent=1 // loop_footer_branch
      %8 = sbr.rel target = $region3
    $region8: #{discriminator_forward.7} parent=1 // loop_exit
      _

</llo_original>
